<compile_context>
chip_gen: v7x
topology: tpu7x:2x2x1
jax: 0.10.0
libtpu: 0.0.40
codegen_flags: <defaults>
</compile_context>

<pallas_src>
import functools

import jax
import jax.numpy as jnp
from jax.experimental import pallas as pl
from jax.experimental.pallas import tpu as pltpu


def _round_up(x, m):
    return ((x + m - 1) // m) * m


def _vmem_budget():
    """~3/4 of physical VMEM, capped at 100 MiB (48 MiB on v7x's 64 MiB)."""
    cap = 64 * 1024 * 1024
    try:
        cap = int(getattr(pltpu.get_tpu_info(), "vmem_capacity_bytes", cap))
    except Exception:
        pass
    return max(32 * 1024 * 1024, min(100 * 1024 * 1024, (cap * 3) // 4))


# ----------------------------------------------------------------------------
# Kernel 1: fused projection for both heads  ->  bf16 features + f32 scores
# ----------------------------------------------------------------------------
def _proj_kernel(feat_ref, w_ref, feat_out_ref, sc_out_ref, *, feat_w):
    res = jnp.dot(feat_ref[...], w_ref[...],
                  preferred_element_type=jnp.float32)       # (T, feat_w + 128)
    feat_out_ref[...] = res[:, :feat_w].astype(jnp.bfloat16)
    sc_out_ref[...] = res[:, feat_w:]                        # lanes 0..3 used


# ----------------------------------------------------------------------------
# Kernel 2: tiled online-softmax GAT (both heads) + fused Linear/ReLU epilogue
# ----------------------------------------------------------------------------
def _gat_fused_kernel(qsc_ref, kfeat_ref, adj_ref, e2_ref, zin_ref,
                      w12_ref, b12_ref, wsz_ref, wsh_ref, bs_ref,
                      out_ref,
                      m_z, l_z, acc_z, m_s, l_s, acc_s,
                      *, alpha, H, nz, ns, training):
    j = pl.program_id(1)

    @pl.when(j == 0)
    def _init():
        m_z[...] = jnp.full(m_z.shape, -jnp.inf, jnp.float32)
        l_z[...] = jnp.zeros(l_z.shape, jnp.float32)
        acc_z[...] = jnp.zeros(acc_z.shape, jnp.float32)
        m_s[...] = jnp.full(m_s.shape, -jnp.inf, jnp.float32)
        l_s[...] = jnp.zeros(l_s.shape, jnp.float32)
        acc_s[...] = jnp.zeros(acc_s.shape, jnp.float32)

    mask = adj_ref[...] != 0                     # (TQ, TK) from int8 adjacency
    kfeat = kfeat_ref[...]                       # (TK, FEAT_W) bf16, shared RHS
    qsc = qsc_ref[...]                           # (TQ, 128) f32 query scores
    e1z = qsc[:, 0:1]
    e1s = qsc[:, 1:2]
    e2z = e2_ref[0:1, :]                         # (1, TK) key-side scores
    e2s = e2_ref[1:2, :]

    def _head(e1, e2, m_ref, l_ref, acc_ref):
        e = e1 + e2                                            # (TQ, TK)
        e = jnp.maximum(e, alpha * e)                          # LeakyReLU, 0<alpha<1
        e = jnp.where(mask, e, -9e15)                          # adjacency mask
        m_new = jnp.maximum(m_ref[...], jnp.max(e, axis=1, keepdims=True))
        corr = jnp.exp(m_ref[...] - m_new)
        p = jnp.exp(e - m_new)                  # non-edges underflow to exact 0
        l_ref[...] = corr * l_ref[...] + jnp.sum(p, axis=1, keepdims=True)
        acc_ref[...] = corr * acc_ref[...] + jnp.dot(
            p.astype(jnp.bfloat16), kfeat, preferred_element_type=jnp.float32)
        m_ref[...] = m_new

    # TODO(synk): F.dropout on attention weights is identity in eval mode; not applied.
    _head(e1z, e2z, m_z, l_z, acc_z)
    _head(e1s, e2s, m_s, l_s, acc_s)

    @pl.when(j == pl.num_programs(1) - 1)
    def _finalize():
        # exact softmax normalization (division, not approx reciprocal)
        hz = acc_z[:, 0:H] / l_z[...]
        hs = acc_s[:, H:2 * H] / l_s[...]
        # ELU (concat=True head output); clamp avoids inf in unselected branch.
        hz = jnp.where(hz > 0, hz, jnp.exp(jnp.minimum(hz, 0.0)) - 1.0)
        hs = jnp.where(hs > 0, hs, jnp.exp(jnp.minimum(hs, 0.0)) - 1.0)
        hz_b = hz.astype(jnp.bfloat16)
        hs_b = hs.astype(jnp.bfloat16)

        tq = out_ref.shape[0]
        if training:
            ml = jnp.maximum(
                jnp.dot(hz_b, w12_ref[...], preferred_element_type=jnp.float32)
                + b12_ref[...], 0.0)                          # [mu | logvar]
            mu = ml[:, 0:nz]
            logvar = ml[:, nz:2 * nz]
            z = mu + zin_ref[...] * jnp.exp(logvar * 0.5)     # reparametrize
            head = ml
        else:
            z = zin_ref[...]                                  # broadcast z_mean
            head = jnp.zeros((tq, 2 * nz), jnp.float32)

        s = jnp.maximum(
            jnp.dot(z.astype(jnp.bfloat16), wsz_ref[...],
                    preferred_element_type=jnp.float32)
            + jnp.dot(hs_b, wsh_ref[...], preferred_element_type=jnp.float32)
            + bs_ref[...], 0.0)

        pad_w = out_ref.shape[1] - (3 * nz + ns)
        parts = [head, z, s]
        if pad_w:
            parts.append(jnp.zeros((tq, pad_w), jnp.float32))
        out_ref[...] = jnp.concatenate(parts, axis=-1)        # single dense store


# ----------------------------------------------------------------------------
# Jitted core: padding, tiling, the two pallas_calls
# ----------------------------------------------------------------------------
@functools.partial(jax.jit, static_argnames=("alpha", "training"))
def _gat_encoder_core(params, feat, adj, zin, *, alpha, training):
    N, F = feat.shape
    H = params["Wz"].shape[1]
    nz = params["enc_b1"].shape[0]
    ns = params["lin_s_b"].shape[0]

    # ---- tiling (>=2 row tiles for 128<N<=256 keeps both v7x cores busy) ----
    if N <= 256:
        TQ = TK = 128
    elif N <= 1024:
        TQ = TK = 256
    else:
        TQ, TK = 512, 256
    N_pad = _round_up(N, TQ)         # TQ is a multiple of TK -> also TK-aligned
    RQ = N_pad // TQ
    RK = N_pad // TK

    FEAT_W = _round_up(2 * H, 128)   # [Whz | Whs | pad]
    SC_W = 128                       # [e1z e1s e2z e2s | pad]
    OUT_W = _round_up(3 * nz + ns, 128)
    vmem_budget = _vmem_budget()

    feat_p = jnp.pad(feat.astype(jnp.bfloat16), ((0, N_pad - N), (0, 0)))
    # binarize BEFORE any dtype narrowing; int8 halves the N^2 adj stream
    adj_p = jnp.pad((adj > 0).astype(jnp.int8),
                    ((0, N_pad - N), (0, N_pad - N)))
    zin_p = jnp.pad(zin.astype(jnp.float32), ((0, N_pad - N), (0, 0)))

    # ---- fused projection weights (hoisted, traced once under jit) ----
    Wz, Ws = params["Wz"], params["Ws_att"]
    az, as_ = params["az"], params["as_att"]
    wfeat = jnp.pad(jnp.concatenate([Wz, Ws], axis=1),
                    ((0, 0), (0, FEAT_W - 2 * H)))
    wsc = jnp.stack([Wz @ az[:H], Ws @ as_[:H], Wz @ az[H:], Ws @ as_[H:]],
                    axis=1)                                    # (F, 4)
    wsc = jnp.pad(wsc, ((0, 0), (0, SC_W - 4)))
    wcat = jnp.concatenate([wfeat, wsc], axis=1).astype(jnp.bfloat16)

    # ---- kernel 1: projection for both heads ----
    kfeat, qsc = pl.pallas_call(
        functools.partial(_proj_kernel, feat_w=FEAT_W),
        grid=(RQ,),
        in_specs=[pl.BlockSpec((TQ, F), lambda i: (i, 0)),
                  pl.BlockSpec((F, FEAT_W + SC_W), lambda i: (0, 0))],
        out_specs=(pl.BlockSpec((TQ, FEAT_W), lambda i: (i, 0)),
                   pl.BlockSpec((TQ, SC_W), lambda i: (i, 0))),
        out_shape=(jax.ShapeDtypeStruct((N_pad, FEAT_W), jnp.bfloat16),
                   jax.ShapeDtypeStruct((N_pad, SC_W), jnp.float32)),
        compiler_params=pltpu.CompilerParams(
            dimension_semantics=("parallel",),
            vmem_limit_bytes=vmem_budget),
    )(feat_p, wcat)

    # key-side attention scores laid out along lanes (tiny transpose on the
    # small score slab only -- the big bf16 feature slab is never re-read here)
    e2_rows = qsc[:, 2:4].T                                    # (2, N_pad)

    # ---- small epilogue weights, pre-transposed / fused ----
    w12 = jnp.concatenate([params["enc_w1"].T, params["enc_w2"].T],
                          axis=1).astype(jnp.bfloat16)         # (H, 2*nz)
    b12 = jnp.concatenate([params["enc_b1"], params["enc_b2"]]
                          ).reshape(1, 2 * nz).astype(jnp.float32)
    wsT = params["lin_s_w"].T                                  # (nz + H, ns)
    wsz = wsT[:nz].astype(jnp.bfloat16)                        # z part
    wsh = wsT[nz:].astype(jnp.bfloat16)                        # h_s part
    bs = params["lin_s_b"].reshape(1, ns).astype(jnp.float32)

    kernel = functools.partial(_gat_fused_kernel, alpha=alpha, H=H, nz=nz,
                               ns=ns, training=training)

    packed = pl.pallas_call(
        kernel,
        grid=(RQ, RK),
        in_specs=[
            pl.BlockSpec((TQ, SC_W), lambda i, j: (i, 0)),     # query scores
            pl.BlockSpec((TK, FEAT_W), lambda i, j: (j, 0)),   # key features bf16
            pl.BlockSpec((TQ, TK), lambda i, j: (i, j)),       # adjacency int8
            pl.BlockSpec((2, TK), lambda i, j: (0, j)),        # key scores
            pl.BlockSpec((TQ, nz), lambda i, j: (i, 0)),       # eps (train)/z (infer)
            pl.BlockSpec((H, 2 * nz), lambda i, j: (0, 0)),    # fused enc weights
            pl.BlockSpec((1, 2 * nz), lambda i, j: (0, 0)),    # fused enc bias
            pl.BlockSpec((nz, ns), lambda i, j: (0, 0)),       # linear_s (z part)
            pl.BlockSpec((H, ns), lambda i, j: (0, 0)),        # linear_s (h_s part)
            pl.BlockSpec((1, ns), lambda i, j: (0, 0)),        # linear_s bias
        ],
        out_specs=pl.BlockSpec((TQ, OUT_W), lambda i, j: (i, 0)),
        out_shape=jax.ShapeDtypeStruct((N_pad, OUT_W), jnp.float32),
        scratch_shapes=[
            pltpu.VMEM((TQ, 1), jnp.float32), pltpu.VMEM((TQ, 1), jnp.float32),
            pltpu.VMEM((TQ, FEAT_W), jnp.float32),
            pltpu.VMEM((TQ, 1), jnp.float32), pltpu.VMEM((TQ, 1), jnp.float32),
            pltpu.VMEM((TQ, FEAT_W), jnp.float32),
        ],
        compiler_params=pltpu.CompilerParams(
            dimension_semantics=("parallel", "arbitrary"),
            vmem_limit_bytes=vmem_budget),
    )(qsc, kfeat, adj_p, e2_rows, zin_p, w12, b12, wsz, wsh, bs)

    mu = packed[:N, 0:nz]
    logvar = packed[:N, nz:2 * nz]
    z = packed[:N, 2 * nz:3 * nz]
    s = packed[:N, 3 * nz:3 * nz + ns]
    return mu, logvar, z, s


# ----------------------------------------------------------------------------
# GATEncoder forward (public API mirroring the PyTorch module)
# ----------------------------------------------------------------------------
def gat_encoder_forward(params, feat, adj, *, alpha, stage=None, z_mean=None,
                        eps_key=None):
    N = feat.shape[0]
    nz = params["enc_b1"].shape[0]

    if stage == "training":
        eps = jax.random.normal(eps_key, (N, nz), jnp.float32)
        mu, logvar, z, s = _gat_encoder_core(params, feat, adj, eps,
                                             alpha=alpha, training=True)
        z_sum = jnp.sum(jnp.var(z, axis=1, ddof=1))     # torch.var (unbiased)
        z_mean = jnp.mean(z, axis=0, keepdims=True)     # (1, nz)
        return z_mean, mu, logvar, z_sum, s
    else:
        zin = jnp.tile(z_mean, (N, 1))                  # z_mean.repeat(N, 1)
        _, _, _, s = _gat_encoder_core(params, feat, adj, zin,
                                       alpha=alpha, training=False)
        return z_mean, [], [], 0.0, s


# ----------------------------------------------------------------------------
# Deterministic parameter init + demo
# ----------------------------------------------------------------------------
def init_params(key, nfeat, nhid, nz, ns):
    ks = jax.random.split(key, 10)
    scale = 0.1
    return {
        # GraphAttentionLayer attention_z
        "Wz": scale * jax.random.normal(ks[0], (nfeat, nhid), jnp.float32),
        "az": scale * jax.random.normal(ks[1], (2 * nhid,), jnp.float32),
        # GraphAttentionLayer attention_s
        "Ws_att": scale * jax.random.normal(ks[2], (nfeat, nhid), jnp.float32),
        "as_att": scale * jax.random.normal(ks[3], (2 * nhid,), jnp.float32),
        # Encoder linears (nhid -> nz), stored PyTorch-style (out, in)
        "enc_w1": scale * jax.random.normal(ks[4], (nz, nhid), jnp.float32),
        "enc_b1": scale * jax.random.normal(ks[5], (nz,), jnp.float32),
        "enc_w2": scale * jax.random.normal(ks[6], (nz, nhid), jnp.float32),
        "enc_b2": scale * jax.random.normal(ks[7], (nz,), jnp.float32),
        # linear_s : (nz + nhid) -> ns   (input is cat(z, h_s))
        "lin_s_w": scale * jax.random.normal(ks[8], (ns, nhid + nz), jnp.float32),
        "lin_s_b": scale * jax.random.normal(ks[9], (ns,), jnp.float32),
    }


if __name__ == "__main__":
    N, nfeat, nhid, nz, ns = 8, 16, 32, 8, 4
    alpha = 0.2

    key = jax.random.PRNGKey(0)
    k_feat, k_adj, k_param, k_eps = jax.random.split(key, 4)

    feat = jax.random.normal(k_feat, (N, nfeat), jnp.float32)
    # random 0/1 adjacency with self-loops so every softmax row is non-degenerate
    adj = (jax.random.uniform(k_adj, (N, N)) > 0.5).astype(jnp.float32)
    adj = jnp.maximum(adj, jnp.eye(N, dtype=jnp.float32))

    params = init_params(k_param, nfeat, nhid, nz, ns)

    # training path
    z_mean, mu, logvar, z_sum, s = gat_encoder_forward(
        params, feat, adj, alpha=alpha, stage="training", eps_key=k_eps)
    jax.block_until_ready((z_mean, mu, logvar, z_sum, s))
    assert z_mean.shape == (1, nz)
    assert mu.shape == (N, nz) and logvar.shape == (N, nz)
    assert s.shape == (N, ns)
    assert bool(jnp.all(jnp.isfinite(mu)))
    assert bool(jnp.all(jnp.isfinite(s)))
    assert bool(jnp.isfinite(z_sum))

    # inference path (stage != 'training', z_mean given)
    z_mean2, _, _, _, s2 = gat_encoder_forward(
        params, feat, adj, alpha=alpha, stage=None, z_mean=z_mean)
    jax.block_until_ready(s2)
    assert s2.shape == (N, ns)
    assert bool(jnp.all(jnp.isfinite(s2)))

    print("KERNEL_OK")
</pallas_src>

<mosaic_0001>
module attributes {stable_mosaic.version = 11 : i64} {
  func.func @_proj_kernel(%arg0: i32, %arg1: memref<128x16xbf16, #tpu.memory_space<vmem>>, %arg2: memref<16x256xbf16, #tpu.memory_space<vmem>>, %arg3: memref<128x128xbf16, #tpu.memory_space<vmem>>, %arg4: memref<128x128xf32, #tpu.memory_space<vmem>>) attributes {dimension_semantics = [#tpu.dimension_semantics<parallel>], iteration_bounds = array<i64: 1>, scalar_prefetch = 0 : i64, scratch_operands = 0 : i64, tpu.core_type = #tpu.core_type<tc>, window_params = [{transform_indices = @transform_0, window_bounds = array<i64: 128, 16>}, {pipeline_mode = #tpu.pipeline_mode<synchronous>, transform_indices = @transform_1, window_bounds = array<i64: 16, 256>}, {transform_indices = @transform_2, window_bounds = array<i64: 128, 128>}, {transform_indices = @transform_3, window_bounds = array<i64: 128, 128>}]} {
    %c0 = arith.constant 0 : index
    %c0_0 = arith.constant 0 : index
    %0 = vector.load %arg1[%c0, %c0_0] : memref<128x16xbf16, #tpu.memory_space<vmem>>, vector<128x16xbf16>
    %c0_1 = arith.constant 0 : index
    %c0_2 = arith.constant 0 : index
    %1 = vector.load %arg2[%c0_1, %c0_2] : memref<16x256xbf16, #tpu.memory_space<vmem>>, vector<16x256xbf16>
    %cst = arith.constant dense<0.000000e+00> : vector<128x256xf32>
    %2 = tpu.matmul %0, %1, %cst {dimension_numbers = #tpu.dot_dimension_numbers<[1], [0], [0], [1], [0, 0, 1, 1], [], []>} : vector<128x16xbf16>, vector<16x256xbf16>, vector<128x256xf32> -> vector<128x256xf32>
    %3 = vector.extract_strided_slice %2 {offsets = [0, 0], sizes = [128, 128], strides = [1, 1]} : vector<128x256xf32> to vector<128x128xf32>
    %4 = arith.truncf %3 : vector<128x128xf32> to vector<128x128xbf16>
    %c0_3 = arith.constant 0 : index
    %c0_4 = arith.constant 0 : index
    %5 = vector.load %arg3[%c0_3, %c0_4] : memref<128x128xbf16, #tpu.memory_space<vmem>>, vector<128x128xbf16>
    tpu.vector_store %arg3[%c0_3, %c0_4], %4 {strides = array<i32>} : memref<128x128xbf16, #tpu.memory_space<vmem>>, vector<128x128xbf16>,
    %6 = vector.extract_strided_slice %2 {offsets = [0, 128], sizes = [128, 128], strides = [1, 1]} : vector<128x256xf32> to vector<128x128xf32>
    %c0_5 = arith.constant 0 : index
    %c0_6 = arith.constant 0 : index
    %7 = vector.load %arg4[%c0_5, %c0_6] : memref<128x128xf32, #tpu.memory_space<vmem>>, vector<128x128xf32>
    tpu.vector_store %arg4[%c0_5, %c0_6], %6 {strides = array<i32>} : memref<128x128xf32, #tpu.memory_space<vmem>>, vector<128x128xf32>,
    return
  }
  func.func @transform_0(%arg0: i32) -> (i32, i32) {
    %c0_i32 = arith.constant 0 : i32
    %c0_i32_0 = arith.constant 0 : i32
    return %arg0, %c0_i32 : i32, i32
  }
  func.func @transform_1(%arg0: i32) -> (i32, i32) {
    %c0_i32 = arith.constant 0 : i32
    %c0_i32_0 = arith.constant 0 : i32
    %c0_i32_1 = arith.constant 0 : i32
    return %c0_i32, %c0_i32_0 : i32, i32
  }
  func.func @transform_2(%arg0: i32) -> (i32, i32) {
    %c0_i32 = arith.constant 0 : i32
    %c0_i32_0 = arith.constant 0 : i32
    return %arg0, %c0_i32 : i32, i32
  }
  func.func @transform_3(%arg0: i32) -> (i32, i32) {
    %c0_i32 = arith.constant 0 : i32
    %c0_i32_0 = arith.constant 0 : i32
    return %arg0, %c0_i32 : i32, i32
  }
}

module attributes {stable_mosaic.version = 11 : i64} {
  func.func @_gat_fused_kernel(%arg0: i32, %arg1: i32, %arg2: memref<128x128xf32, #tpu.memory_space<vmem>>, %arg3: memref<128x128xbf16, #tpu.memory_space<vmem>>, %arg4: memref<128x128xi8, #tpu.memory_space<vmem>>, %arg5: memref<2x128xf32, #tpu.memory_space<vmem>>, %arg6: memref<128x8xf32, #tpu.memory_space<vmem>>, %arg7: memref<32x16xbf16, #tpu.memory_space<vmem>>, %arg8: memref<1x16xf32, #tpu.memory_space<vmem>>, %arg9: memref<8x4xbf16, #tpu.memory_space<vmem>>, %arg10: memref<32x4xbf16, #tpu.memory_space<vmem>>, %arg11: memref<1x4xf32, #tpu.memory_space<vmem>>, %arg12: memref<128x128xf32, #tpu.memory_space<vmem>>, %arg13: memref<128x1xf32, #tpu.memory_space<vmem>>, %arg14: memref<128x1xf32, #tpu.memory_space<vmem>>, %arg15: memref<128x128xf32, #tpu.memory_space<vmem>>, %arg16: memref<128x1xf32, #tpu.memory_space<vmem>>, %arg17: memref<128x1xf32, #tpu.memory_space<vmem>>, %arg18: memref<128x128xf32, #tpu.memory_space<vmem>>) attributes {dimension_semantics = [#tpu.dimension_semantics<parallel>, #tpu.dimension_semantics<arbitrary>], iteration_bounds = array<i64: 1, 1>, scalar_prefetch = 0 : i64, scratch_operands = 6 : i64, tpu.core_type = #tpu.core_type<tc>, window_params = [{transform_indices = @transform_0, window_bounds = array<i64: 128, 128>}, {transform_indices = @transform_1, window_bounds = array<i64: 128, 128>}, {transform_indices = @transform_2, window_bounds = array<i64: 128, 128>}, {transform_indices = @transform_3, window_bounds = array<i64: 2, 128>}, {transform_indices = @transform_4, window_bounds = array<i64: 128, 8>}, {pipeline_mode = #tpu.pipeline_mode<synchronous>, transform_indices = @transform_5, window_bounds = array<i64: 32, 16>}, {pipeline_mode = #tpu.pipeline_mode<synchronous>, transform_indices = @transform_6, window_bounds = array<i64: 1, 16>}, {pipeline_mode = #tpu.pipeline_mode<synchronous>, transform_indices = @transform_7, window_bounds = array<i64: 8, 4>}, {pipeline_mode = #tpu.pipeline_mode<synchronous>, transform_indices = @transform_8, window_bounds = array<i64: 32, 4>}, {pipeline_mode = #tpu.pipeline_mode<synchronous>, transform_indices = @transform_9, window_bounds = array<i64: 1, 4>}, {transform_indices = @transform_10, window_bounds = array<i64: 128, 128>}]} {
    %c0_i32 = arith.constant 0 : i32
    %0 = arith.cmpi eq, %arg1, %c0_i32 : i32
    %1 = arith.extui %0 : i1 to i32
    %c0_i32_0 = arith.constant 0 : i32
    %2 = arith.cmpi ne, %1, %c0_i32_0 : i32
    scf.if %2 {
      %cst_48 = arith.constant 0xFF800000 : f32
      %79 = vector.broadcast %cst_48 : f32 to vector<128x1xf32>
      %c0_49 = arith.constant 0 : index
      %c0_50 = arith.constant 0 : index
      %80 = vector.load %arg13[%c0_49, %c0_50] : memref<128x1xf32, #tpu.memory_space<vmem>>, vector<128x1xf32>
      tpu.vector_store %arg13[%c0_49, %c0_50], %79 {strides = array<i32>} : memref<128x1xf32, #tpu.memory_space<vmem>>, vector<128x1xf32>,
      %cst_51 = arith.constant 0.000000e+00 : f32
      %81 = vector.broadcast %cst_51 : f32 to vector<128x1xf32>
      %c0_52 = arith.constant 0 : index
      %c0_53 = arith.constant 0 : index
      %82 = vector.load %arg14[%c0_52, %c0_53] : memref<128x1xf32, #tpu.memory_space<vmem>>, vector<128x1xf32>
      tpu.vector_store %arg14[%c0_52, %c0_53], %81 {strides = array<i32>} : memref<128x1xf32, #tpu.memory_space<vmem>>, vector<128x1xf32>,
      %cst_54 = arith.constant 0.000000e+00 : f32
      %83 = vector.broadcast %cst_54 : f32 to vector<128x128xf32>
      %c0_55 = arith.constant 0 : index
      %c0_56 = arith.constant 0 : index
      %84 = vector.load %arg15[%c0_55, %c0_56] : memref<128x128xf32, #tpu.memory_space<vmem>>, vector<128x128xf32>
      tpu.vector_store %arg15[%c0_55, %c0_56], %83 {strides = array<i32>} : memref<128x128xf32, #tpu.memory_space<vmem>>, vector<128x128xf32>,
      %cst_57 = arith.constant 0xFF800000 : f32
      %85 = vector.broadcast %cst_57 : f32 to vector<128x1xf32>
      %c0_58 = arith.constant 0 : index
      %c0_59 = arith.constant 0 : index
      %86 = vector.load %arg16[%c0_58, %c0_59] : memref<128x1xf32, #tpu.memory_space<vmem>>, vector<128x1xf32>
      tpu.vector_store %arg16[%c0_58, %c0_59], %85 {strides = array<i32>} : memref<128x1xf32, #tpu.memory_space<vmem>>, vector<128x1xf32>,
      %cst_60 = arith.constant 0.000000e+00 : f32
      %87 = vector.broadcast %cst_60 : f32 to vector<128x1xf32>
      %c0_61 = arith.constant 0 : index
      %c0_62 = arith.constant 0 : index
      %88 = vector.load %arg17[%c0_61, %c0_62] : memref<128x1xf32, #tpu.memory_space<vmem>>, vector<128x1xf32>
      tpu.vector_store %arg17[%c0_61, %c0_62], %87 {strides = array<i32>} : memref<128x1xf32, #tpu.memory_space<vmem>>, vector<128x1xf32>,
      %cst_63 = arith.constant 0.000000e+00 : f32
      %89 = vector.broadcast %cst_63 : f32 to vector<128x128xf32>
      %c0_64 = arith.constant 0 : index
      %c0_65 = arith.constant 0 : index
      %90 = vector.load %arg18[%c0_64, %c0_65] : memref<128x128xf32, #tpu.memory_space<vmem>>, vector<128x128xf32>
      tpu.vector_store %arg18[%c0_64, %c0_65], %89 {strides = array<i32>} : memref<128x128xf32, #tpu.memory_space<vmem>>, vector<128x128xf32>,
    } else {
    }
    %c0 = arith.constant 0 : index
    %c0_1 = arith.constant 0 : index
    %3 = vector.load %arg4[%c0, %c0_1] : memref<128x128xi8, #tpu.memory_space<vmem>>, vector<128x128xi8>
    %c0_i8 = arith.constant 0 : i8
    %4 = vector.broadcast %c0_i8 : i8 to vector<128x128xi8>
    %5 = arith.cmpi ne, %3, %4 : vector<128x128xi8>
    %c0_2 = arith.constant 0 : index
    %c0_3 = arith.constant 0 : index
    %6 = vector.load %arg3[%c0_2, %c0_3] : memref<128x128xbf16, #tpu.memory_space<vmem>>, vector<128x128xbf16>
    %c0_4 = arith.constant 0 : index
    %c0_5 = arith.constant 0 : index
    %7 = vector.load %arg2[%c0_4, %c0_5] : memref<128x128xf32, #tpu.memory_space<vmem>>, vector<128x128xf32>
    %8 = vector.extract_strided_slice %7 {offsets = [0, 0], sizes = [128, 1], strides = [1, 1]} : vector<128x128xf32> to vector<128x1xf32>
    %9 = vector.extract_strided_slice %7 {offsets = [0, 1], sizes = [128, 1], strides = [1, 1]} : vector<128x128xf32> to vector<128x1xf32>
    %c0_6 = arith.constant 0 : index
    %c0_7 = arith.constant 0 : index
    %10 = vector.load %arg5[%c0_6, %c0_7] : memref<2x128xf32, #tpu.memory_space<vmem>>, vector<1x128xf32>
    %c1 = arith.constant 1 : index
    %c0_8 = arith.constant 0 : index
    %11 = vector.load %arg5[%c1, %c0_8] : memref<2x128xf32, #tpu.memory_space<vmem>>, vector<1x128xf32>
    %12 = vector.broadcast %8 : vector<128x1xf32> to vector<128x128xf32>
    %13 = vector.broadcast %10 : vector<1x128xf32> to vector<128x128xf32>
    %14 = arith.addf %12, %13 : vector<128x128xf32>
    %cst = arith.constant 2.000000e-01 : f32
    %15 = vector.broadcast %cst : f32 to vector<128x128xf32>
    %16 = arith.mulf %15, %14 : vector<128x128xf32>
    %17 = arith.maximumf %14, %16 : vector<128x128xf32>
    %cst_9 = arith.constant -9.000000e+15 : f32
    %18 = vector.broadcast %cst_9 : f32 to vector<128x128xf32>
    %19 = arith.select %5, %17, %18 : vector<128x128xi1>, vector<128x128xf32>
    %c0_10 = arith.constant 0 : index
    %c0_11 = arith.constant 0 : index
    %20 = vector.load %arg13[%c0_10, %c0_11] : memref<128x1xf32, #tpu.memory_space<vmem>>, vector<128x1xf32>
    %cst_12 = arith.constant dense<0xFF800000> : vector<128xf32>
    %21 = vector.multi_reduction <maximumf>, %19, %cst_12 [1] : vector<128x128xf32> to vector<128xf32>
    %22 = vector.shape_cast %21 : vector<128xf32> to vector<128x1xf32>
    %23 = arith.maximumf %20, %22 : vector<128x1xf32>
    %c0_13 = arith.constant 0 : index
    %c0_14 = arith.constant 0 : index
    %24 = vector.load %arg13[%c0_13, %c0_14] : memref<128x1xf32, #tpu.memory_space<vmem>>, vector<128x1xf32>
    %25 = arith.subf %24, %23 : vector<128x1xf32>
    %26 = math.exp %25 : vector<128x1xf32>
    %27 = vector.broadcast %23 : vector<128x1xf32> to vector<128x128xf32>
    %28 = arith.subf %19, %27 : vector<128x128xf32>
    %29 = math.exp %28 : vector<128x128xf32>
    %c0_15 = arith.constant 0 : index
    %c0_16 = arith.constant 0 : index
    %30 = vector.load %arg14[%c0_15, %c0_16] : memref<128x1xf32, #tpu.memory_space<vmem>>, vector<128x1xf32>
    %31 = arith.mulf %26, %30 : vector<128x1xf32>
    %cst_17 = arith.constant dense<0.000000e+00> : vector<128xf32>
    %32 = vector.multi_reduction <add>, %29, %cst_17 [1] : vector<128x128xf32> to vector<128xf32>
    %33 = vector.shape_cast %32 : vector<128xf32> to vector<128x1xf32>
    %34 = arith.addf %31, %33 : vector<128x1xf32>
    %c0_18 = arith.constant 0 : index
    %c0_19 = arith.constant 0 : index
    %35 = vector.load %arg14[%c0_18, %c0_19] : memref<128x1xf32, #tpu.memory_space<vmem>>, vector<128x1xf32>
    tpu.vector_store %arg14[%c0_18, %c0_19], %34 {strides = array<i32>} : memref<128x1xf32, #tpu.memory_space<vmem>>, vector<128x1xf32>,
    %c0_20 = arith.constant 0 : index
    %c0_21 = arith.constant 0 : index
    %36 = vector.load %arg15[%c0_20, %c0_21] : memref<128x128xf32, #tpu.memory_space<vmem>>, vector<128x128xf32>
    %37 = vector.broadcast %26 : vector<128x1xf32> to vector<128x128xf32>
    %38 = arith.mulf %37, %36 : vector<128x128xf32>
    %39 = arith.truncf %29 : vector<128x128xf32> to vector<128x128xbf16>
    %cst_22 = arith.constant dense<0.000000e+00> : vector<128x128xf32>
    %40 = tpu.matmul %39, %6, %cst_22 {dimension_numbers = #tpu.dot_dimension_numbers<[1], [0], [0], [1], [0, 0, 1, 1], [], []>} : vector<128x128xbf16>, vector<128x128xbf16>, vector<128x128xf32> -> vector<128x128xf32>
    %41 = arith.addf %38, %40 : vector<128x128xf32>
    %c0_23 = arith.constant 0 : index
    %c0_24 = arith.constant 0 : index
    %42 = vector.load %arg15[%c0_23, %c0_24] : memref<128x128xf32, #tpu.memory_space<vmem>>, vector<128x128xf32>
    tpu.vector_store %arg15[%c0_23, %c0_24], %41 {strides = array<i32>} : memref<128x128xf32, #tpu.memory_space<vmem>>, vector<128x128xf32>,
    %c0_25 = arith.constant 0 : index
    %c0_26 = arith.constant 0 : index
    %43 = vector.load %arg13[%c0_25, %c0_26] : memref<128x1xf32, #tpu.memory_space<vmem>>, vector<128x1xf32>
    tpu.vector_store %arg13[%c0_25, %c0_26], %23 {strides = array<i32>} : memref<128x1xf32, #tpu.memory_space<vmem>>, vector<128x1xf32>,
    %44 = vector.broadcast %9 : vector<128x1xf32> to vector<128x128xf32>
    %45 = vector.broadcast %11 : vector<1x128xf32> to vector<128x128xf32>
    %46 = arith.addf %44, %45 : vector<128x128xf32>
    %cst_27 = arith.constant 2.000000e-01 : f32
    %47 = vector.broadcast %cst_27 : f32 to vector<128x128xf32>
    %48 = arith.mulf %47, %46 : vector<128x128xf32>
    %49 = arith.maximumf %46, %48 : vector<128x128xf32>
    %cst_28 = arith.constant -9.000000e+15 : f32
    %50 = vector.broadcast %cst_28 : f32 to vector<128x128xf32>
    %51 = arith.select %5, %49, %50 : vector<128x128xi1>, vector<128x128xf32>
    %c0_29 = arith.constant 0 : index
    %c0_30 = arith.constant 0 : index
    %52 = vector.load %arg16[%c0_29, %c0_30] : memref<128x1xf32, #tpu.memory_space<vmem>>, vector<128x1xf32>
    %cst_31 = arith.constant dense<0xFF800000> : vector<128xf32>
    %53 = vector.multi_reduction <maximumf>, %51, %cst_31 [1] : vector<128x128xf32> to vector<128xf32>
    %54 = vector.shape_cast %53 : vector<128xf32> to vector<128x1xf32>
    %55 = arith.maximumf %52, %54 : vector<128x1xf32>
    %c0_32 = arith.constant 0 : index
    %c0_33 = arith.constant 0 : index
    %56 = vector.load %arg16[%c0_32, %c0_33] : memref<128x1xf32, #tpu.memory_space<vmem>>, vector<128x1xf32>
    %57 = arith.subf %56, %55 : vector<128x1xf32>
    %58 = math.exp %57 : vector<128x1xf32>
    %59 = vector.broadcast %55 : vector<128x1xf32> to vector<128x128xf32>
    %60 = arith.subf %51, %59 : vector<128x128xf32>
    %61 = math.exp %60 : vector<128x128xf32>
    %c0_34 = arith.constant 0 : index
    %c0_35 = arith.constant 0 : index
    %62 = vector.load %arg17[%c0_34, %c0_35] : memref<128x1xf32, #tpu.memory_space<vmem>>, vector<128x1xf32>
    %63 = arith.mulf %58, %62 : vector<128x1xf32>
    %cst_36 = arith.constant dense<0.000000e+00> : vector<128xf32>
    %64 = vector.multi_reduction <add>, %61, %cst_36 [1] : vector<128x128xf32> to vector<128xf32>
    %65 = vector.shape_cast %64 : vector<128xf32> to vector<128x1xf32>
    %66 = arith.addf %63, %65 : vector<128x1xf32>
    %c0_37 = arith.constant 0 : index
    %c0_38 = arith.constant 0 : index
    %67 = vector.load %arg17[%c0_37, %c0_38] : memref<128x1xf32, #tpu.memory_space<vmem>>, vector<128x1xf32>
    tpu.vector_store %arg17[%c0_37, %c0_38], %66 {strides = array<i32>} : memref<128x1xf32, #tpu.memory_space<vmem>>, vector<128x1xf32>,
    %c0_39 = arith.constant 0 : index
    %c0_40 = arith.constant 0 : index
    %68 = vector.load %arg18[%c0_39, %c0_40] : memref<128x128xf32, #tpu.memory_space<vmem>>, vector<128x128xf32>
    %69 = vector.broadcast %58 : vector<128x1xf32> to vector<128x128xf32>
    %70 = arith.mulf %69, %68 : vector<128x128xf32>
    %71 = arith.truncf %61 : vector<128x128xf32> to vector<128x128xbf16>
    %cst_41 = arith.constant dense<0.000000e+00> : vector<128x128xf32>
    %72 = tpu.matmul %71, %6, %cst_41 {dimension_numbers = #tpu.dot_dimension_numbers<[1], [0], [0], [1], [0, 0, 1, 1], [], []>} : vector<128x128xbf16>, vector<128x128xbf16>, vector<128x128xf32> -> vector<128x128xf32>
    %73 = arith.addf %70, %72 : vector<128x128xf32>
    %c0_42 = arith.constant 0 : index
    %c0_43 = arith.constant 0 : index
    %74 = vector.load %arg18[%c0_42, %c0_43] : memref<128x128xf32, #tpu.memory_space<vmem>>, vector<128x128xf32>
    tpu.vector_store %arg18[%c0_42, %c0_43], %73 {strides = array<i32>} : memref<128x128xf32, #tpu.memory_space<vmem>>, vector<128x128xf32>,
    %c0_44 = arith.constant 0 : index
    %c0_45 = arith.constant 0 : index
    %75 = vector.load %arg16[%c0_44, %c0_45] : memref<128x1xf32, #tpu.memory_space<vmem>>, vector<128x1xf32>
    tpu.vector_store %arg16[%c0_44, %c0_45], %55 {strides = array<i32>} : memref<128x1xf32, #tpu.memory_space<vmem>>, vector<128x1xf32>,
    %c0_i32_46 = arith.constant 0 : i32
    %76 = arith.cmpi eq, %arg1, %c0_i32_46 : i32
    %77 = arith.extui %76 : i1 to i32
    %c0_i32_47 = arith.constant 0 : i32
    %78 = arith.cmpi ne, %77, %c0_i32_47 : i32
    scf.if %78 {
      %c0_48 = arith.constant 0 : index
      %c0_49 = arith.constant 0 : index
      %79 = vector.load %arg15[%c0_48, %c0_49] : memref<128x128xf32, #tpu.memory_space<vmem>>, vector<128x32xf32>
      %c0_50 = arith.constant 0 : index
      %c0_51 = arith.constant 0 : index
      %80 = vector.load %arg14[%c0_50, %c0_51] : memref<128x1xf32, #tpu.memory_space<vmem>>, vector<128x1xf32>
      %81 = vector.broadcast %80 : vector<128x1xf32> to vector<128x32xf32>
      %82 = arith.divf %79, %81 : vector<128x32xf32>
      %c0_52 = arith.constant 0 : index
      %c32 = arith.constant 32 : index
      %83 = vector.load %arg18[%c0_52, %c32] : memref<128x128xf32, #tpu.memory_space<vmem>>, vector<128x32xf32>
      %c0_53 = arith.constant 0 : index
      %c0_54 = arith.constant 0 : index
      %84 = vector.load %arg17[%c0_53, %c0_54] : memref<128x1xf32, #tpu.memory_space<vmem>>, vector<128x1xf32>
      %85 = vector.broadcast %84 : vector<128x1xf32> to vector<128x32xf32>
      %86 = arith.divf %83, %85 : vector<128x32xf32>
      %cst_55 = arith.constant 0.000000e+00 : f32
      %87 = vector.broadcast %cst_55 : f32 to vector<128x32xf32>
      %88 = arith.cmpf ogt, %82, %87 : vector<128x32xf32>
      %cst_56 = arith.constant 0.000000e+00 : f32
      %89 = vector.broadcast %cst_56 : f32 to vector<128x32xf32>
      %90 = arith.minimumf %82, %89 : vector<128x32xf32>
      %91 = math.exp %90 : vector<128x32xf32>
      %cst_57 = arith.constant 1.000000e+00 : f32
      %92 = vector.broadcast %cst_57 : f32 to vector<128x32xf32>
      %93 = arith.subf %91, %92 : vector<128x32xf32>
      %94 = arith.select %88, %82, %93 : vector<128x32xi1>, vector<128x32xf32>
      %cst_58 = arith.constant 0.000000e+00 : f32
      %95 = vector.broadcast %cst_58 : f32 to vector<128x32xf32>
      %96 = arith.cmpf ogt, %86, %95 : vector<128x32xf32>
      %cst_59 = arith.constant 0.000000e+00 : f32
      %97 = vector.broadcast %cst_59 : f32 to vector<128x32xf32>
      %98 = arith.minimumf %86, %97 : vector<128x32xf32>
      %99 = math.exp %98 : vector<128x32xf32>
      %cst_60 = arith.constant 1.000000e+00 : f32
      %100 = vector.broadcast %cst_60 : f32 to vector<128x32xf32>
      %101 = arith.subf %99, %100 : vector<128x32xf32>
      %102 = arith.select %96, %86, %101 : vector<128x32xi1>, vector<128x32xf32>
      %103 = arith.truncf %94 : vector<128x32xf32> to vector<128x32xbf16>
      %104 = arith.truncf %102 : vector<128x32xf32> to vector<128x32xbf16>
      %c0_61 = arith.constant 0 : index
      %c0_62 = arith.constant 0 : index
      %105 = vector.load %arg7[%c0_61, %c0_62] : memref<32x16xbf16, #tpu.memory_space<vmem>>, vector<32x16xbf16>
      %cst_63 = arith.constant dense<0.000000e+00> : vector<128x16xf32>
      %106 = tpu.matmul %103, %105, %cst_63 {dimension_numbers = #tpu.dot_dimension_numbers<[1], [0], [0], [1], [0, 0, 1, 1], [], []>} : vector<128x32xbf16>, vector<32x16xbf16>, vector<128x16xf32> -> vector<128x16xf32>
      %c0_64 = arith.constant 0 : index
      %c0_65 = arith.constant 0 : index
      %107 = vector.load %arg8[%c0_64, %c0_65] : memref<1x16xf32, #tpu.memory_space<vmem>>, vector<1x16xf32>
      %108 = vector.broadcast %107 : vector<1x16xf32> to vector<128x16xf32>
      %109 = arith.addf %106, %108 : vector<128x16xf32>
      %cst_66 = arith.constant 0.000000e+00 : f32
      %110 = vector.broadcast %cst_66 : f32 to vector<128x16xf32>
      %111 = arith.maximumf %109, %110 : vector<128x16xf32>
      %112 = vector.extract_strided_slice %111 {offsets = [0, 0], sizes = [128, 8], strides = [1, 1]} : vector<128x16xf32> to vector<128x8xf32>
      %113 = vector.extract_strided_slice %111 {offsets = [0, 8], sizes = [128, 8], strides = [1, 1]} : vector<128x16xf32> to vector<128x8xf32>
      %c0_67 = arith.constant 0 : index
      %c0_68 = arith.constant 0 : index
      %114 = vector.load %arg6[%c0_67, %c0_68] : memref<128x8xf32, #tpu.memory_space<vmem>>, vector<128x8xf32>
      %cst_69 = arith.constant 5.000000e-01 : f32
      %115 = vector.broadcast %cst_69 : f32 to vector<128x8xf32>
      %116 = arith.mulf %113, %115 : vector<128x8xf32>
      %117 = math.exp %116 : vector<128x8xf32>
      %118 = arith.mulf %114, %117 : vector<128x8xf32>
      %119 = arith.addf %112, %118 : vector<128x8xf32>
      %120 = arith.truncf %119 : vector<128x8xf32> to vector<128x8xbf16>
      %c0_70 = arith.constant 0 : index
      %c0_71 = arith.constant 0 : index
      %121 = vector.load %arg9[%c0_70, %c0_71] : memref<8x4xbf16, #tpu.memory_space<vmem>>, vector<8x4xbf16>
      %cst_72 = arith.constant dense<0.000000e+00> : vector<128x4xf32>
      %122 = tpu.matmul %120, %121, %cst_72 {dimension_numbers = #tpu.dot_dimension_numbers<[1], [0], [0], [1], [0, 0, 1, 1], [], []>} : vector<128x8xbf16>, vector<8x4xbf16>, vector<128x4xf32> -> vector<128x4xf32>
      %c0_73 = arith.constant 0 : index
      %c0_74 = arith.constant 0 : index
      %123 = vector.load %arg10[%c0_73, %c0_74] : memref<32x4xbf16, #tpu.memory_space<vmem>>, vector<32x4xbf16>
      %cst_75 = arith.constant dense<0.000000e+00> : vector<128x4xf32>
      %124 = tpu.matmul %104, %123, %cst_75 {dimension_numbers = #tpu.dot_dimension_numbers<[1], [0], [0], [1], [0, 0, 1, 1], [], []>} : vector<128x32xbf16>, vector<32x4xbf16>, vector<128x4xf32> -> vector<128x4xf32>
      %125 = arith.addf %122, %124 : vector<128x4xf32>
      %c0_76 = arith.constant 0 : index
      %c0_77 = arith.constant 0 : index
      %126 = vector.load %arg11[%c0_76, %c0_77] : memref<1x4xf32, #tpu.memory_space<vmem>>, vector<1x4xf32>
      %127 = vector.broadcast %126 : vector<1x4xf32> to vector<128x4xf32>
      %128 = arith.addf %125, %127 : vector<128x4xf32>
      %cst_78 = arith.constant 0.000000e+00 : f32
      %129 = vector.broadcast %cst_78 : f32 to vector<128x4xf32>
      %130 = arith.maximumf %128, %129 : vector<128x4xf32>
      %cst_79 = arith.constant 0.000000e+00 : f32
      %131 = vector.broadcast %cst_79 : f32 to vector<128x100xf32>
      %132 = tpu.concatenate %111, %119, %130, %131 in 1 : vector<128x16xf32>, vector<128x8xf32>, vector<128x4xf32>, vector<128x100xf32> -> vector<128x128xf32>
      %c0_80 = arith.constant 0 : index
      %c0_81 = arith.constant 0 : index
      %133 = vector.load %arg12[%c0_80, %c0_81] : memref<128x128xf32, #tpu.memory_space<vmem>>, vector<128x128xf32>
      tpu.vector_store %arg12[%c0_80, %c0_81], %132 {strides = array<i32>} : memref<128x128xf32, #tpu.memory_space<vmem>>, vector<128x128xf32>,
    } else {
    }
    return
  }
  func.func @transform_0(%arg0: i32, %arg1: i32) -> (i32, i32) {
    %c0_i32 = arith.constant 0 : i32
    %c0_i32_0 = arith.constant 0 : i32
    return %arg0, %c0_i32 : i32, i32
  }
  func.func @transform_1(%arg0: i32, %arg1: i32) -> (i32, i32) {
    %c0_i32 = arith.constant 0 : i32
    %c0_i32_0 = arith.constant 0 : i32
    return %arg1, %c0_i32 : i32, i32
  }
  func.func @transform_2(%arg0: i32, %arg1: i32) -> (i32, i32) {
    %c0_i32 = arith.constant 0 : i32
    return %arg0, %arg1 : i32, i32
  }
  func.func @transform_3(%arg0: i32, %arg1: i32) -> (i32, i32) {
    %c0_i32 = arith.constant 0 : i32
    %c0_i32_0 = arith.constant 0 : i32
    return %c0_i32, %arg1 : i32, i32
  }
  func.func @transform_4(%arg0: i32, %arg1: i32) -> (i32, i32) {
    %c0_i32 = arith.constant 0 : i32
    %c0_i32_0 = arith.constant 0 : i32
    return %arg0, %c0_i32 : i32, i32
  }
  func.func @transform_5(%arg0: i32, %arg1: i32) -> (i32, i32) {
    %c0_i32 = arith.constant 0 : i32
    %c0_i32_0 = arith.constant 0 : i32
    %c0_i32_1 = arith.constant 0 : i32
    return %c0_i32, %c0_i32_0 : i32, i32
  }
  func.func @transform_6(%arg0: i32, %arg1: i32) -> (i32, i32) {
    %c0_i32 = arith.constant 0 : i32
    %c0_i32_0 = arith.constant 0 : i32
    %c0_i32_1 = arith.constant 0 : i32
    return %c0_i32, %c0_i32_0 : i32, i32
  }
  func.func @transform_7(%arg0: i32, %arg1: i32) -> (i32, i32) {
    %c0_i32 = arith.constant 0 : i32
    %c0_i32_0 = arith.constant 0 : i32
    %c0_i32_1 = arith.constant 0 : i32
    return %c0_i32, %c0_i32_0 : i32, i32
  }
  func.func @transform_8(%arg0: i32, %arg1: i32) -> (i32, i32) {
    %c0_i32 = arith.constant 0 : i32
    %c0_i32_0 = arith.constant 0 : i32
    %c0_i32_1 = arith.constant 0 : i32
    return %c0_i32, %c0_i32_0 : i32, i32
  }
  func.func @transform_9(%arg0: i32, %arg1: i32) -> (i32, i32) {
    %c0_i32 = arith.constant 0 : i32
    %c0_i32_0 = arith.constant 0 : i32
    %c0_i32_1 = arith.constant 0 : i32
    return %c0_i32, %c0_i32_0 : i32, i32
  }
  func.func @transform_10(%arg0: i32, %arg1: i32) -> (i32, i32) {
    %c0_i32 = arith.constant 0 : i32
    %c0_i32_0 = arith.constant 0 : i32
    return %arg0, %c0_i32 : i32, i32
  }
}

</mosaic_0001>

<llo_original>
// kernel: _gat_encoder_core.2
$region0: #{_gat_encoder_core.2}
  #allocation0 [shape = 'u32[]', space=smem, size = 0x4, offset = 0x4, fixed_abs, tag = 'smem constant byte address 0x4 - core index']
  #allocation1 [shape = 'u32[144,128]{1,0:T(1,128)}', space=vmem, size = 0x12000, scoped, tag = 'internal scratch']
  %s0 = inlined_call_operand.vmem [shape: bf16[128,16], index: 0, kind: input, shape index: {}]
  %s1 = inlined_call_operand.vmem [shape: bf16[16,256], index: 1, kind: input, shape index: {}]
  %s2 = inlined_call_operand.vmem [shape: bf16[128,128], index: 2, kind: output, shape index: {0}]
  %s3 = inlined_call_operand.vmem [shape: f32[128,128], index: 3, kind: output, shape index: {1}]
  %4 = xla_tuple %s2, %s3
  %s5 = sld [smem:[#allocation0]]
  $region26: #{_gat_encoder_core.2} parent=0
    _
  %s7 = ssub.s32 1, %s5
  %s8 = scalar_select 0, %s7, %s5
  // Predicated region
  $region2: #{_gat_encoder_core.2} parent=0 // pred_check
    _
  $region3: #{_gat_encoder_core.2} parent=0 // pred_check_branch
    %10 = sbr.rel (0) target = $region5
  $region4: #{_gat_encoder_core.2} parent=0 // pred_region
    _
  $region5: #{_gat_encoder_core.2} parent=0 // pred_fallthru
    _
  // Predicated region
  $region6: #{_gat_encoder_core.2} parent=0 // pred_check
    _
  $region7: #{_gat_encoder_core.2} parent=0 // pred_check_branch
    %12 = sbr.rel (0) target = $region9
  $region8: #{_gat_encoder_core.2} parent=0 // pred_region
    _
  $region9: #{_gat_encoder_core.2} parent=0 // pred_fallthru
    _
  %v14 = vld [vmem:[%s0] sm:$0xf]
  %v15 = vld [vmem:[%s0 + $0x4] sm:$0xf]
  %v16 = vld [vmem:[%s0 + $0x8] sm:$0xf]
  %v17 = vld [vmem:[%s0 + $0xc] sm:$0xf]
  %v18 = vld [vmem:[%s0 + $0x10] sm:$0xf]
  %v19 = vld [vmem:[%s0 + $0x14] sm:$0xf]
  %v20 = vld [vmem:[%s0 + $0x18] sm:$0xf]
  %v21 = vld [vmem:[%s0 + $0x1c] sm:$0xf]
  %v22 = vld [vmem:[%s0 + $0x20] sm:$0xf]
  %v23 = vld [vmem:[%s0 + $0x24] sm:$0xf]
  %v24 = vld [vmem:[%s0 + $0x28] sm:$0xf]
  %v25 = vld [vmem:[%s0 + $0x2c] sm:$0xf]
  %v26 = vld [vmem:[%s0 + $0x30] sm:$0xf]
  %v27 = vld [vmem:[%s0 + $0x34] sm:$0xf]
  %v28 = vld [vmem:[%s0 + $0x38] sm:$0xf]
  %v29 = vld [vmem:[%s0 + $0x3c] sm:$0xf]
  %v30 = vld [vmem:[%s1] sm:$0xff]
  %v31 = vld [vmem:[%s1 + $0x8] sm:$0xff]
  %v48 = vunpack.c.l.b16 %v14
  %v49 = vunpack.c.l.b16 %v15
  %v50 = vunpack.c.l.b16 %v16
  %v51 = vunpack.c.l.b16 %v17
  %v52 = vunpack.c.l.b16 %v18
  %v53 = vunpack.c.l.b16 %v19
  %v54 = vunpack.c.l.b16 %v20
  %v55 = vunpack.c.l.b16 %v21
  %v56 = vunpack.c.l.b16 %v22
  %v57 = vunpack.c.l.b16 %v23
  %v58 = vunpack.c.l.b16 %v24
  %v59 = vunpack.c.l.b16 %v25
  %v60 = vunpack.c.l.b16 %v26
  %v61 = vunpack.c.l.b16 %v27
  %v62 = vunpack.c.l.b16 %v28
  %v63 = vunpack.c.l.b16 %v29
  %v64 = vpack.c.b16 %v49, %v48
  %v65 = vpack.c.b16 %v51, %v50
  %v66 = vpack.c.b16 %v53, %v52
  %v67 = vpack.c.b16 %v55, %v54
  %v68 = vpack.c.b16 %v57, %v56
  %v69 = vpack.c.b16 %v59, %v58
  %v70 = vpack.c.b16 %v61, %v60
  %v71 = vpack.c.b16 %v63, %v62
  %v74 = vunpack.c.l.b16 %v30
  %v75 = vunpack.c.h.b16 %v30
  %v76 = vunpack.c.l.b16 %v31
  %v77 = vunpack.c.h.b16 %v31
  %v78 = vpack.c.b16 %v76, %v74
  %v79 = vpack.c.b16 %v77, %v75
  %vm82 = vcmask 130048
  %v84 = vsel %vm82, %v64, 0
  %v87 = vsel %vm82, %v65, 0
  %v90 = vsel %vm82, %v66, 0
  %v93 = vsel %vm82, %v67, 0
  %v96 = vsel %vm82, %v68, 0
  %v99 = vsel %vm82, %v69, 0
  %v102 = vsel %vm82, %v70, 0
  %v105 = vsel %vm82, %v71, 0
  %107 = vmatprep.subr.bf16.mxu0 %v79
  %108 = vmatpush1.bf16.msra.mxu0 %v78
  %109 = vmatprep.subr.bf16.mxu0 0
  %110 = vmatpush1.bf16.msra.mxu0 0
  %111 = vmatprep.subr.bf16.mxu0 0
  %112 = vmatpush1.bf16.msra.mxu0 0
  %113 = vmatprep.subr.bf16.mxu0 0
  %114 = vmatpush1.bf16.msra.mxu0 0
  %115 = vmatprep.subr.bf16.mxu0 0
  %116 = vmatpush1.bf16.msra.mxu0 0
  %117 = vmatprep.subr.bf16.mxu0 0
  %118 = vmatpush1.bf16.msra.mxu0 0
  %119 = vmatprep.subr.bf16.mxu0 0
  %120 = vmatpush1.bf16.msra.mxu0 0
  %121 = vmatprep.subr.bf16.mxu0 0
  %122 = vmatpush1.bf16.msra.mxu0 0
  %123 = vmatprep.subr.bf16.mxu0 0
  %124 = vmatpush1.bf16.msra.mxu0 0
  %125 = vmatprep.subr.bf16.mxu0 0
  %126 = vmatpush1.bf16.msra.mxu0 0
  %127 = vmatprep.subr.bf16.mxu0 0
  %128 = vmatpush1.bf16.msra.mxu0 0
  %129 = vmatprep.subr.bf16.mxu0 0
  %130 = vmatpush1.bf16.msra.mxu0 0
  %131 = vmatprep.subr.bf16.mxu0 0
  %132 = vmatpush1.bf16.msra.mxu0 0
  %133 = vmatprep.subr.bf16.mxu0 0
  %134 = vmatpush1.bf16.msra.mxu0 0
  %135 = vmatprep.subr.bf16.mxu0 0
  %136 = vmatpush1.bf16.msra.mxu0 0
  %137 = vmatprep.subr.bf16.mxu0 0
  %138 = vmatpush1.bf16.msra.mxu0 0
  %139 = vmatprep.mubr.bf16.mxu0 0
  %140 = vmatmul.mubr.bf16.gmra.mrb[0].mxu0 %v84
  %v141 = vpop.f32.mrb[0].mxu0
  %v142 = vadd.f32 0.0, %v141
  %v143 = vpop.f32.mrb[0].mxu0
  %v144 = vadd.f32 0.0, %v143
  %v145 = vpop.f32.mrb[0].mxu0
  %v146 = vadd.f32 0.0, %v145
  %v147 = vpop.f32.mrb[0].mxu0
  %v148 = vadd.f32 0.0, %v147
  %149 = vmatprep.mubr.bf16.mxu0 0
  %150 = vmatmul.mubr.bf16.gmra.mrb[0].mxu0 %v87
  %v151 = vpop.f32.mrb[0].mxu0
  %v152 = vadd.f32 0.0, %v151
  %v153 = vpop.f32.mrb[0].mxu0
  %v154 = vadd.f32 0.0, %v153
  %v155 = vpop.f32.mrb[0].mxu0
  %v156 = vadd.f32 0.0, %v155
  %v157 = vpop.f32.mrb[0].mxu0
  %v158 = vadd.f32 0.0, %v157
  %159 = vmatprep.mubr.bf16.mxu0 0
  %160 = vmatmul.mubr.bf16.gmra.mrb[0].mxu0 %v90
  %v161 = vpop.f32.mrb[0].mxu0
  %v162 = vadd.f32 0.0, %v161
  %v163 = vpop.f32.mrb[0].mxu0
  %v164 = vadd.f32 0.0, %v163
  %v165 = vpop.f32.mrb[0].mxu0
  %v166 = vadd.f32 0.0, %v165
  %v167 = vpop.f32.mrb[0].mxu0
  %v168 = vadd.f32 0.0, %v167
  %169 = vmatprep.mubr.bf16.mxu0 0
  %170 = vmatmul.mubr.bf16.gmra.mrb[0].mxu0 %v93
  %v171 = vpop.f32.mrb[0].mxu0
  %v172 = vadd.f32 0.0, %v171
  %v173 = vpop.f32.mrb[0].mxu0
  %v174 = vadd.f32 0.0, %v173
  %v175 = vpop.f32.mrb[0].mxu0
  %v176 = vadd.f32 0.0, %v175
  %v177 = vpop.f32.mrb[0].mxu0
  %v178 = vadd.f32 0.0, %v177
  %179 = vmatprep.mubr.bf16.mxu0 0
  %180 = vmatmul.mubr.bf16.gmra.mrb[0].mxu0 %v96
  %v181 = vpop.f32.mrb[0].mxu0
  %v182 = vadd.f32 0.0, %v181
  %v183 = vpop.f32.mrb[0].mxu0
  %v184 = vadd.f32 0.0, %v183
  %v185 = vpop.f32.mrb[0].mxu0
  %v186 = vadd.f32 0.0, %v185
  %v187 = vpop.f32.mrb[0].mxu0
  %v188 = vadd.f32 0.0, %v187
  %189 = vmatprep.mubr.bf16.mxu0 0
  %190 = vmatmul.mubr.bf16.gmra.mrb[0].mxu0 %v99
  %v191 = vpop.f32.mrb[0].mxu0
  %v192 = vadd.f32 0.0, %v191
  %v193 = vpop.f32.mrb[0].mxu0
  %v194 = vadd.f32 0.0, %v193
  %v195 = vpop.f32.mrb[0].mxu0
  %v196 = vadd.f32 0.0, %v195
  %v197 = vpop.f32.mrb[0].mxu0
  %v198 = vadd.f32 0.0, %v197
  %199 = vmatprep.mubr.bf16.mxu0 0
  %200 = vmatmul.mubr.bf16.gmra.mrb[0].mxu0 %v102
  %v201 = vpop.f32.mrb[0].mxu0
  %v202 = vadd.f32 0.0, %v201
  %v203 = vpop.f32.mrb[0].mxu0
  %v204 = vadd.f32 0.0, %v203
  %v205 = vpop.f32.mrb[0].mxu0
  %v206 = vadd.f32 0.0, %v205
  %v207 = vpop.f32.mrb[0].mxu0
  %v208 = vadd.f32 0.0, %v207
  %209 = vmatprep.mubr.bf16.mxu0 0
  %210 = vmatmul.mubr.bf16.gmra.mrb[0].mxu0 %v105
  %v211 = vpop.f32.mrb[0].mxu0
  %v212 = vadd.f32 0.0, %v211
  %v213 = vpop.f32.mrb[0].mxu0
  %v214 = vadd.f32 0.0, %v213
  %v215 = vpop.f32.mrb[0].mxu0
  %v216 = vadd.f32 0.0, %v215
  %v217 = vpop.f32.mrb[0].mxu0
  %v218 = vadd.f32 0.0, %v217
  %219 = vdwg.mxu0
  %v220 = vpack.c.bf16 %v146, %v142
  %v221 = vpack.c.bf16 %v156, %v152
  %v222 = vpack.c.bf16 %v166, %v162
  %v223 = vpack.c.bf16 %v176, %v172
  %v224 = vpack.c.bf16 %v186, %v182
  %v225 = vpack.c.bf16 %v196, %v192
  %v226 = vpack.c.bf16 %v206, %v202
  %v227 = vpack.c.bf16 %v216, %v212
  %v236 = vunpack.c.l.b16 %v220
  %v237 = vunpack.c.h.b16 %v220
  %v238 = vunpack.c.l.b16 %v221
  %v239 = vunpack.c.h.b16 %v221
  %v240 = vunpack.c.l.b16 %v222
  %v241 = vunpack.c.h.b16 %v222
  %v242 = vunpack.c.l.b16 %v223
  %v243 = vunpack.c.h.b16 %v223
  %v244 = vunpack.c.l.b16 %v224
  %v245 = vunpack.c.h.b16 %v224
  %v246 = vunpack.c.l.b16 %v225
  %v247 = vunpack.c.h.b16 %v225
  %v248 = vunpack.c.l.b16 %v226
  %v249 = vunpack.c.h.b16 %v226
  %v250 = vunpack.c.l.b16 %v227
  %v251 = vunpack.c.h.b16 %v227
  %v252 = vpack.c.b16 %v236, %v236
  %v253 = vpack.c.b16 %v237, %v237
  %v254 = vpack.c.b16 %v238, %v238
  %v255 = vpack.c.b16 %v239, %v239
  %v256 = vpack.c.b16 %v240, %v240
  %v257 = vpack.c.b16 %v241, %v241
  %v258 = vpack.c.b16 %v242, %v242
  %v259 = vpack.c.b16 %v243, %v243
  %v260 = vpack.c.b16 %v244, %v244
  %v261 = vpack.c.b16 %v245, %v245
  %v262 = vpack.c.b16 %v246, %v246
  %v263 = vpack.c.b16 %v247, %v247
  %v264 = vpack.c.b16 %v248, %v248
  %v265 = vpack.c.b16 %v249, %v249
  %v266 = vpack.c.b16 %v250, %v250
  %v267 = vpack.c.b16 %v251, %v251
  %284 = vst [vmem:[%s2] sm:$0xf] %v252
  %285 = vst [vmem:[%s2 + $0x4] sm:$0xf] %v253
  %286 = vst [vmem:[%s2 + $0x8] sm:$0xf] %v254
  %287 = vst [vmem:[%s2 + $0xc] sm:$0xf] %v255
  %288 = vst [vmem:[%s2 + $0x10] sm:$0xf] %v256
  %289 = vst [vmem:[%s2 + $0x14] sm:$0xf] %v257
  %290 = vst [vmem:[%s2 + $0x18] sm:$0xf] %v258
  %291 = vst [vmem:[%s2 + $0x1c] sm:$0xf] %v259
  %292 = vst [vmem:[%s2 + $0x20] sm:$0xf] %v260
  %293 = vst [vmem:[%s2 + $0x24] sm:$0xf] %v261
  %294 = vst [vmem:[%s2 + $0x28] sm:$0xf] %v262
  %295 = vst [vmem:[%s2 + $0x2c] sm:$0xf] %v263
  %296 = vst [vmem:[%s2 + $0x30] sm:$0xf] %v264
  %297 = vst [vmem:[%s2 + $0x34] sm:$0xf] %v265
  %298 = vst [vmem:[%s2 + $0x38] sm:$0xf] %v266
  %299 = vst [vmem:[%s2 + $0x3c] sm:$0xf] %v267
  %300 = vst [vmem:[%s3] sm:$0xff] %v144
  %301 = vst [vmem:[%s3 + $0x8] sm:$0xff] %v148
  %302 = vst [vmem:[%s3 + $0x10] sm:$0xff] %v154
  %303 = vst [vmem:[%s3 + $0x18] sm:$0xff] %v158
  %304 = vst [vmem:[%s3 + $0x20] sm:$0xff] %v164
  %305 = vst [vmem:[%s3 + $0x28] sm:$0xff] %v168
  %306 = vst [vmem:[%s3 + $0x30] sm:$0xff] %v174
  %307 = vst [vmem:[%s3 + $0x38] sm:$0xff] %v178
  %308 = vst [vmem:[%s3 + $0x40] sm:$0xff] %v184
  %309 = vst [vmem:[%s3 + $0x48] sm:$0xff] %v188
  %310 = vst [vmem:[%s3 + $0x50] sm:$0xff] %v194
  %311 = vst [vmem:[%s3 + $0x58] sm:$0xff] %v198
  %312 = vst [vmem:[%s3 + $0x60] sm:$0xff] %v204
  %313 = vst [vmem:[%s3 + $0x68] sm:$0xff] %v208
  %314 = vst [vmem:[%s3 + $0x70] sm:$0xff] %v214
  %315 = vst [vmem:[%s3 + $0x78] sm:$0xff] %v218
  // Predicated region
  $region10: #{_gat_encoder_core.2} parent=0 // pred_check
    _
  $region11: #{_gat_encoder_core.2} parent=0 // pred_check_branch
    %317 = sbr.rel (0) target = $region13
  $region12: #{_gat_encoder_core.2} parent=0 // pred_region
    _
  $region13: #{_gat_encoder_core.2} parent=0 // pred_fallthru
    _
  // Predicated region
  $region14: #{_gat_encoder_core.2} parent=0 // pred_check
    _
  $region15: #{_gat_encoder_core.2} parent=0 // pred_check_branch
    %319 = sbr.rel (0) target = $region17
  $region16: #{_gat_encoder_core.2} parent=0 // pred_region
    _
  $region17: #{_gat_encoder_core.2} parent=0 // pred_fallthru
    _
  // Predicated region
  $region18: #{_gat_encoder_core.2} parent=0 // pred_check
    _
  $region19: #{_gat_encoder_core.2} parent=0 // pred_check_branch
    %321 = sbr.rel (0) target = $region21
  $region20: #{_gat_encoder_core.2} parent=0 // pred_region
    _
  $region21: #{_gat_encoder_core.2} parent=0 // pred_fallthru
    _
  // Predicated region
  $region22: #{_gat_encoder_core.2} parent=0 // pred_check
    _
  $region23: #{_gat_encoder_core.2} parent=0 // pred_check_branch
    %323 = sbr.rel (0) target = $region25
  $region24: #{_gat_encoder_core.2} parent=0 // pred_region
    _
  $region25: #{_gat_encoder_core.2} parent=0 // pred_fallthru
    _

// kernel: _gat_encoder_core.3
$region0: #{_gat_encoder_core.3}
  #allocation0 [shape = 'u32[]', space=smem, size = 0x4, offset = 0x4, fixed_abs, tag = 'smem constant byte address 0x4 - core index']
  #allocation1 [shape = 'u32[144,128]{1,0:T(1,128)}', space=vmem, size = 0x12000, scoped, tag = 'internal scratch']
  #allocation2 [shape = 'f32[128,1]{1,0:T(8,128)}', space=vmem, size = 0x10000, scoped, tag = 'scratch operand']
  #allocation3 [shape = 'f32[128,1]{1,0:T(8,128)}', space=vmem, size = 0x10000, scoped, tag = 'scratch operand']
  #allocation4 [shape = 'f32[128,128]{1,0:T(8,128)}', space=vmem, size = 0x10000, scoped, tag = 'scratch operand']
  #allocation5 [shape = 'f32[128,1]{1,0:T(8,128)}', space=vmem, size = 0x10000, scoped, tag = 'scratch operand']
  #allocation6 [shape = 'f32[128,1]{1,0:T(8,128)}', space=vmem, size = 0x10000, scoped, tag = 'scratch operand']
  #allocation7 [shape = 'f32[128,128]{1,0:T(8,128)}', space=vmem, size = 0x10000, scoped, tag = 'scratch operand']
  %s0 = inlined_call_operand.vmem [shape: f32[128,128], index: 0, kind: input, shape index: {}]
  %s1 = inlined_call_operand.vmem [shape: bf16[128,128], index: 1, kind: input, shape index: {}]
  %s2 = inlined_call_operand.vmem [shape: s8[128,128], index: 2, kind: input, shape index: {}]
  %s3 = inlined_call_operand.vmem [shape: f32[2,128], index: 3, kind: input, shape index: {}]
  %s4 = inlined_call_operand.vmem [shape: f32[128,8], index: 4, kind: input, shape index: {}]
  %s5 = inlined_call_operand.vmem [shape: bf16[32,16], index: 5, kind: input, shape index: {}]
  %s6 = inlined_call_operand.vmem [shape: f32[1,16], index: 6, kind: input, shape index: {}]
  %s7 = inlined_call_operand.vmem [shape: bf16[8,4], index: 7, kind: input, shape index: {}]
  %s8 = inlined_call_operand.vmem [shape: bf16[32,4], index: 8, kind: input, shape index: {}]
  %s9 = inlined_call_operand.vmem [shape: f32[1,4], index: 9, kind: input, shape index: {}]
  %s10 = inlined_call_operand.vmem [shape: f32[128,128], index: 10, kind: output, shape index: {}]
  %s11 = sld [smem:[#allocation0]]
  $region58: #{_gat_encoder_core.3} parent=0
    _
  %s13 = ssub.s32 1, %s11
  %s14 = scalar_select 0, %s13, %s11
  // Predicated region
  $region2: #{_gat_encoder_core.3} parent=0 // pred_check
    _
  $region3: #{_gat_encoder_core.3} parent=0 // pred_check_branch
    %16 = sbr.rel (0) target = $region5
  $region4: #{_gat_encoder_core.3} parent=0 // pred_region
    _
  $region5: #{_gat_encoder_core.3} parent=0 // pred_fallthru
    _
  // Predicated region
  $region6: #{_gat_encoder_core.3} parent=0 // pred_check
    _
  $region7: #{_gat_encoder_core.3} parent=0 // pred_check_branch
    %18 = sbr.rel (0) target = $region9
  $region8: #{_gat_encoder_core.3} parent=0 // pred_region
    _
  $region9: #{_gat_encoder_core.3} parent=0 // pred_fallthru
    _
  // Predicated region
  $region10: #{_gat_encoder_core.3} parent=0 // pred_check
    _
  $region11: #{_gat_encoder_core.3} parent=0 // pred_check_branch
    %20 = sbr.rel (0) target = $region13
  $region12: #{_gat_encoder_core.3} parent=0 // pred_region
    _
  $region13: #{_gat_encoder_core.3} parent=0 // pred_fallthru
    _
  // Predicated region
  $region14: #{_gat_encoder_core.3} parent=0 // pred_check
    _
  $region15: #{_gat_encoder_core.3} parent=0 // pred_check_branch
    %22 = sbr.rel (0) target = $region17
  $region16: #{_gat_encoder_core.3} parent=0 // pred_region
    _
  $region17: #{_gat_encoder_core.3} parent=0 // pred_fallthru
    _
  // Predicated region
  $region18: #{_gat_encoder_core.3} parent=0 // pred_check
    _
  $region19: #{_gat_encoder_core.3} parent=0 // pred_check_branch
    %24 = sbr.rel (0) target = $region21
  $region20: #{_gat_encoder_core.3} parent=0 // pred_region
    _
  $region21: #{_gat_encoder_core.3} parent=0 // pred_fallthru
    _
  // Predicated region
  $region22: #{_gat_encoder_core.3} parent=0 // pred_check
    _
  $region23: #{_gat_encoder_core.3} parent=0 // pred_check_branch
    %26 = sbr.rel (0) target = $region25
  $region24: #{_gat_encoder_core.3} parent=0 // pred_region
    _
  $region25: #{_gat_encoder_core.3} parent=0 // pred_fallthru
    _
  // Predicated region
  $region26: #{_gat_encoder_core.3} parent=0 // pred_check
    _
  $region27: #{_gat_encoder_core.3} parent=0 // pred_check_branch
    %28 = sbr.rel (0) target = $region29
  $region28: #{_gat_encoder_core.3} parent=0 // pred_region
    _
  $region29: #{_gat_encoder_core.3} parent=0 // pred_fallthru
    _
  // Predicated region
  $region30: #{_gat_encoder_core.3} parent=0 // pred_check
    _
  $region31: #{_gat_encoder_core.3} parent=0 // pred_check_branch
    %30 = sbr.rel (0) target = $region33
  $region32: #{_gat_encoder_core.3} parent=0 // pred_region
    _
  $region33: #{_gat_encoder_core.3} parent=0 // pred_fallthru
    _
  // Predicated region
  $region34: #{_gat_encoder_core.3} parent=0 // pred_check
    _
  $region35: #{_gat_encoder_core.3} parent=0 // pred_check_branch
    %32 = sbr.rel (0) target = $region37
  $region36: #{_gat_encoder_core.3} parent=0 // pred_region
    _
  $region37: #{_gat_encoder_core.3} parent=0 // pred_fallthru
    _
  // Predicated region
  $region38: #{_gat_encoder_core.3} parent=0 // pred_check
    _
  $region39: #{_gat_encoder_core.3} parent=0 // pred_check_branch
    %34 = sbr.rel (0) target = $region41
  $region40: #{_gat_encoder_core.3} parent=0 // pred_region
    _
  $region41: #{_gat_encoder_core.3} parent=0 // pred_fallthru
    _
  %p38 = scmp.eq.s32.totalorder 0, 0
  // Predicated region
  $region42: #{_gat_encoder_core.3} parent=0 // pred_check
    %p39 = pneg %p38
  $region43: #{_gat_encoder_core.3} parent=0 // pred_check_branch
    %41 = sbr.rel (%p39) target = $region45
  $region44: #{_gat_encoder_core.3} parent=0 // pred_region
    %vm42 = vcmask 7168
    %43 = vst.msk [vmem:[#allocation2] sm:$0xff] %vm42, -inf
    %44 = vst.msk [vmem:[#allocation2 + $0x8] sm:$0xff] %vm42, -inf
    %45 = vst.msk [vmem:[#allocation2 + $0x10] sm:$0xff] %vm42, -inf
    %46 = vst.msk [vmem:[#allocation2 + $0x18] sm:$0xff] %vm42, -inf
    %47 = vst.msk [vmem:[#allocation2 + $0x20] sm:$0xff] %vm42, -inf
    %48 = vst.msk [vmem:[#allocation2 + $0x28] sm:$0xff] %vm42, -inf
    %49 = vst.msk [vmem:[#allocation2 + $0x30] sm:$0xff] %vm42, -inf
    %50 = vst.msk [vmem:[#allocation2 + $0x38] sm:$0xff] %vm42, -inf
    %51 = vst.msk [vmem:[#allocation2 + $0x40] sm:$0xff] %vm42, -inf
    %52 = vst.msk [vmem:[#allocation2 + $0x48] sm:$0xff] %vm42, -inf
    %53 = vst.msk [vmem:[#allocation2 + $0x50] sm:$0xff] %vm42, -inf
    %54 = vst.msk [vmem:[#allocation2 + $0x58] sm:$0xff] %vm42, -inf
    %55 = vst.msk [vmem:[#allocation2 + $0x60] sm:$0xff] %vm42, -inf
    %56 = vst.msk [vmem:[#allocation2 + $0x68] sm:$0xff] %vm42, -inf
    %57 = vst.msk [vmem:[#allocation2 + $0x70] sm:$0xff] %vm42, -inf
    %58 = vst.msk [vmem:[#allocation2 + $0x78] sm:$0xff] %vm42, -inf
    %59 = vst.msk [vmem:[#allocation3] sm:$0xff] %vm42, 0.0
    %60 = vst.msk [vmem:[#allocation3 + $0x8] sm:$0xff] %vm42, 0.0
    %61 = vst.msk [vmem:[#allocation3 + $0x10] sm:$0xff] %vm42, 0.0
    %62 = vst.msk [vmem:[#allocation3 + $0x18] sm:$0xff] %vm42, 0.0
    %63 = vst.msk [vmem:[#allocation3 + $0x20] sm:$0xff] %vm42, 0.0
    %64 = vst.msk [vmem:[#allocation3 + $0x28] sm:$0xff] %vm42, 0.0
    %65 = vst.msk [vmem:[#allocation3 + $0x30] sm:$0xff] %vm42, 0.0
    %66 = vst.msk [vmem:[#allocation3 + $0x38] sm:$0xff] %vm42, 0.0
    %67 = vst.msk [vmem:[#allocation3 + $0x40] sm:$0xff] %vm42, 0.0
    %68 = vst.msk [vmem:[#allocation3 + $0x48] sm:$0xff] %vm42, 0.0
    %69 = vst.msk [vmem:[#allocation3 + $0x50] sm:$0xff] %vm42, 0.0
    %70 = vst.msk [vmem:[#allocation3 + $0x58] sm:$0xff] %vm42, 0.0
    %71 = vst.msk [vmem:[#allocation3 + $0x60] sm:$0xff] %vm42, 0.0
    %72 = vst.msk [vmem:[#allocation3 + $0x68] sm:$0xff] %vm42, 0.0
    %73 = vst.msk [vmem:[#allocation3 + $0x70] sm:$0xff] %vm42, 0.0
    %74 = vst.msk [vmem:[#allocation3 + $0x78] sm:$0xff] %vm42, 0.0
    %75 = vst [vmem:[#allocation4] sm:$0xff] 0.0
    %76 = vst [vmem:[#allocation4 + $0x8] sm:$0xff] 0.0
    %77 = vst [vmem:[#allocation4 + $0x10] sm:$0xff] 0.0
    %78 = vst [vmem:[#allocation4 + $0x18] sm:$0xff] 0.0
    %79 = vst [vmem:[#allocation4 + $0x20] sm:$0xff] 0.0
    %80 = vst [vmem:[#allocation4 + $0x28] sm:$0xff] 0.0
    %81 = vst [vmem:[#allocation4 + $0x30] sm:$0xff] 0.0
    %82 = vst [vmem:[#allocation4 + $0x38] sm:$0xff] 0.0
    %83 = vst [vmem:[#allocation4 + $0x40] sm:$0xff] 0.0
    %84 = vst [vmem:[#allocation4 + $0x48] sm:$0xff] 0.0
    %85 = vst [vmem:[#allocation4 + $0x50] sm:$0xff] 0.0
    %86 = vst [vmem:[#allocation4 + $0x58] sm:$0xff] 0.0
    %87 = vst [vmem:[#allocation4 + $0x60] sm:$0xff] 0.0
    %88 = vst [vmem:[#allocation4 + $0x68] sm:$0xff] 0.0
    %89 = vst [vmem:[#allocation4 + $0x70] sm:$0xff] 0.0
    %90 = vst [vmem:[#allocation4 + $0x78] sm:$0xff] 0.0
    %91 = vst.msk [vmem:[#allocation5] sm:$0xff] %vm42, -inf
    %92 = vst.msk [vmem:[#allocation5 + $0x8] sm:$0xff] %vm42, -inf
    %93 = vst.msk [vmem:[#allocation5 + $0x10] sm:$0xff] %vm42, -inf
    %94 = vst.msk [vmem:[#allocation5 + $0x18] sm:$0xff] %vm42, -inf
    %95 = vst.msk [vmem:[#allocation5 + $0x20] sm:$0xff] %vm42, -inf
    %96 = vst.msk [vmem:[#allocation5 + $0x28] sm:$0xff] %vm42, -inf
    %97 = vst.msk [vmem:[#allocation5 + $0x30] sm:$0xff] %vm42, -inf
    %98 = vst.msk [vmem:[#allocation5 + $0x38] sm:$0xff] %vm42, -inf
    %99 = vst.msk [vmem:[#allocation5 + $0x40] sm:$0xff] %vm42, -inf
    %100 = vst.msk [vmem:[#allocation5 + $0x48] sm:$0xff] %vm42, -inf
    %101 = vst.msk [vmem:[#allocation5 + $0x50] sm:$0xff] %vm42, -inf
    %102 = vst.msk [vmem:[#allocation5 + $0x58] sm:$0xff] %vm42, -inf
    %103 = vst.msk [vmem:[#allocation5 + $0x60] sm:$0xff] %vm42, -inf
    %104 = vst.msk [vmem:[#allocation5 + $0x68] sm:$0xff] %vm42, -inf
    %105 = vst.msk [vmem:[#allocation5 + $0x70] sm:$0xff] %vm42, -inf
    %106 = vst.msk [vmem:[#allocation5 + $0x78] sm:$0xff] %vm42, -inf
    %107 = vst.msk [vmem:[#allocation6] sm:$0xff] %vm42, 0.0
    %108 = vst.msk [vmem:[#allocation6 + $0x8] sm:$0xff] %vm42, 0.0
    %109 = vst.msk [vmem:[#allocation6 + $0x10] sm:$0xff] %vm42, 0.0
    %110 = vst.msk [vmem:[#allocation6 + $0x18] sm:$0xff] %vm42, 0.0
    %111 = vst.msk [vmem:[#allocation6 + $0x20] sm:$0xff] %vm42, 0.0
    %112 = vst.msk [vmem:[#allocation6 + $0x28] sm:$0xff] %vm42, 0.0
    %113 = vst.msk [vmem:[#allocation6 + $0x30] sm:$0xff] %vm42, 0.0
    %114 = vst.msk [vmem:[#allocation6 + $0x38] sm:$0xff] %vm42, 0.0
    %115 = vst.msk [vmem:[#allocation6 + $0x40] sm:$0xff] %vm42, 0.0
    %116 = vst.msk [vmem:[#allocation6 + $0x48] sm:$0xff] %vm42, 0.0
    %117 = vst.msk [vmem:[#allocation6 + $0x50] sm:$0xff] %vm42, 0.0
    %118 = vst.msk [vmem:[#allocation6 + $0x58] sm:$0xff] %vm42, 0.0
    %119 = vst.msk [vmem:[#allocation6 + $0x60] sm:$0xff] %vm42, 0.0
    %120 = vst.msk [vmem:[#allocation6 + $0x68] sm:$0xff] %vm42, 0.0
    %121 = vst.msk [vmem:[#allocation6 + $0x70] sm:$0xff] %vm42, 0.0
    %122 = vst.msk [vmem:[#allocation6 + $0x78] sm:$0xff] %vm42, 0.0
    %123 = vst [vmem:[#allocation7] sm:$0xff] 0.0
    %124 = vst [vmem:[#allocation7 + $0x8] sm:$0xff] 0.0
    %125 = vst [vmem:[#allocation7 + $0x10] sm:$0xff] 0.0
    %126 = vst [vmem:[#allocation7 + $0x18] sm:$0xff] 0.0
    %127 = vst [vmem:[#allocation7 + $0x20] sm:$0xff] 0.0
    %128 = vst [vmem:[#allocation7 + $0x28] sm:$0xff] 0.0
    %129 = vst [vmem:[#allocation7 + $0x30] sm:$0xff] 0.0
    %130 = vst [vmem:[#allocation7 + $0x38] sm:$0xff] 0.0
    %131 = vst [vmem:[#allocation7 + $0x40] sm:$0xff] 0.0
    %132 = vst [vmem:[#allocation7 + $0x48] sm:$0xff] 0.0
    %133 = vst [vmem:[#allocation7 + $0x50] sm:$0xff] 0.0
    %134 = vst [vmem:[#allocation7 + $0x58] sm:$0xff] 0.0
    %135 = vst [vmem:[#allocation7 + $0x60] sm:$0xff] 0.0
    %136 = vst [vmem:[#allocation7 + $0x68] sm:$0xff] 0.0
    %137 = vst [vmem:[#allocation7 + $0x70] sm:$0xff] 0.0
    %138 = vst [vmem:[#allocation7 + $0x78] sm:$0xff] 0.0
  $region45: #{_gat_encoder_core.3} parent=0 // pred_fallthru
    _
  %v139 = vld [vmem:[%s2] sm:$0xff]
  %v140 = vld [vmem:[%s2 + $0x8] sm:$0xff]
  %v141 = vld [vmem:[%s2 + $0x10] sm:$0xff]
  %v142 = vld [vmem:[%s2 + $0x18] sm:$0xff]
  %vm143 = vnez %v139
  %vm144 = vnez %v140
  %vm145 = vnez %v141
  %vm146 = vnez %v142
  %v147 = vld [vmem:[%s1] sm:$0xf]
  %v148 = vld [vmem:[%s1 + $0x4] sm:$0xf]
  %v149 = vld [vmem:[%s1 + $0x8] sm:$0xf]
  %v150 = vld [vmem:[%s1 + $0xc] sm:$0xf]
  %v151 = vld [vmem:[%s1 + $0x10] sm:$0xf]
  %v152 = vld [vmem:[%s1 + $0x14] sm:$0xf]
  %v153 = vld [vmem:[%s1 + $0x18] sm:$0xf]
  %v154 = vld [vmem:[%s1 + $0x1c] sm:$0xf]
  %v155 = vld [vmem:[%s1 + $0x20] sm:$0xf]
  %v156 = vld [vmem:[%s1 + $0x24] sm:$0xf]
  %v157 = vld [vmem:[%s1 + $0x28] sm:$0xf]
  %v158 = vld [vmem:[%s1 + $0x2c] sm:$0xf]
  %v159 = vld [vmem:[%s1 + $0x30] sm:$0xf]
  %v160 = vld [vmem:[%s1 + $0x34] sm:$0xf]
  %v161 = vld [vmem:[%s1 + $0x38] sm:$0xf]
  %v162 = vld [vmem:[%s1 + $0x3c] sm:$0xf]
  %v163 = vld [vmem:[%s0] sm:$0xff]
  %v164 = vld [vmem:[%s0 + $0x8] sm:$0xff]
  %v165 = vld [vmem:[%s0 + $0x10] sm:$0xff]
  %v166 = vld [vmem:[%s0 + $0x18] sm:$0xff]
  %v167 = vld [vmem:[%s0 + $0x20] sm:$0xff]
  %v168 = vld [vmem:[%s0 + $0x28] sm:$0xff]
  %v169 = vld [vmem:[%s0 + $0x30] sm:$0xff]
  %v170 = vld [vmem:[%s0 + $0x38] sm:$0xff]
  %v171 = vld [vmem:[%s0 + $0x40] sm:$0xff]
  %v172 = vld [vmem:[%s0 + $0x48] sm:$0xff]
  %v173 = vld [vmem:[%s0 + $0x50] sm:$0xff]
  %v174 = vld [vmem:[%s0 + $0x58] sm:$0xff]
  %v175 = vld [vmem:[%s0 + $0x60] sm:$0xff]
  %v176 = vld [vmem:[%s0 + $0x68] sm:$0xff]
  %v177 = vld [vmem:[%s0 + $0x70] sm:$0xff]
  %v178 = vld [vmem:[%s0 + $0x78] sm:$0xff]
  %v179 = vld [vmem:[%s3] sm:$0x1]
  %v180 = vld [vmem:[%s3 + $0x1] sm:$0x1]
  %182 = vset.pattern.permute.xlu0 0
  %183 = vperm.xlu0 %182, %v163
  %v184 = vpop.permute.xlu0 %183
  %187 = vset.pattern.permute.xlu0 0
  %188 = vperm.xlu0 %187, %v164
  %v189 = vpop.permute.xlu0 %188
  %192 = vset.pattern.permute.xlu0 0
  %193 = vperm.xlu0 %192, %v165
  %v194 = vpop.permute.xlu0 %193
  %197 = vset.pattern.permute.xlu0 0
  %198 = vperm.xlu0 %197, %v166
  %v199 = vpop.permute.xlu0 %198
  %202 = vset.pattern.permute.xlu0 0
  %203 = vperm.xlu0 %202, %v167
  %v204 = vpop.permute.xlu0 %203
  %207 = vset.pattern.permute.xlu0 0
  %208 = vperm.xlu0 %207, %v168
  %v209 = vpop.permute.xlu0 %208
  %212 = vset.pattern.permute.xlu0 0
  %213 = vperm.xlu0 %212, %v169
  %v214 = vpop.permute.xlu0 %213
  %217 = vset.pattern.permute.xlu0 0
  %218 = vperm.xlu0 %217, %v170
  %v219 = vpop.permute.xlu0 %218
  %222 = vset.pattern.permute.xlu0 0
  %223 = vperm.xlu0 %222, %v171
  %v224 = vpop.permute.xlu0 %223
  %227 = vset.pattern.permute.xlu0 0
  %228 = vperm.xlu0 %227, %v172
  %v229 = vpop.permute.xlu0 %228
  %232 = vset.pattern.permute.xlu0 0
  %233 = vperm.xlu0 %232, %v173
  %v234 = vpop.permute.xlu0 %233
  %237 = vset.pattern.permute.xlu0 0
  %238 = vperm.xlu0 %237, %v174
  %v239 = vpop.permute.xlu0 %238
  %242 = vset.pattern.permute.xlu0 0
  %243 = vperm.xlu0 %242, %v175
  %v244 = vpop.permute.xlu0 %243
  %247 = vset.pattern.permute.xlu0 0
  %248 = vperm.xlu0 %247, %v176
  %v249 = vpop.permute.xlu0 %248
  %252 = vset.pattern.permute.xlu0 0
  %253 = vperm.xlu0 %252, %v177
  %v254 = vpop.permute.xlu0 %253
  %257 = vset.pattern.permute.xlu0 0
  %258 = vperm.xlu0 %257, %v178
  %v259 = vpop.permute.xlu0 %258
  %v261 = vlaneseq
  %v262 = vshrl.u32 %v261, 7
  %v263 = vsub.s32 0, %v262
  %v264 = vrot.slane %v179, %v263
  %v265 = vadd.f32 %v184, %v264
  %v266 = vadd.f32 %v189, %v264
  %v267 = vadd.f32 %v194, %v264
  %v268 = vadd.f32 %v199, %v264
  %v269 = vadd.f32 %v204, %v264
  %v270 = vadd.f32 %v209, %v264
  %v271 = vadd.f32 %v214, %v264
  %v272 = vadd.f32 %v219, %v264
  %v273 = vadd.f32 %v224, %v264
  %v274 = vadd.f32 %v229, %v264
  %v275 = vadd.f32 %v234, %v264
  %v276 = vadd.f32 %v239, %v264
  %v277 = vadd.f32 %v244, %v264
  %v278 = vadd.f32 %v249, %v264
  %v279 = vadd.f32 %v254, %v264
  %v280 = vadd.f32 %v259, %v264
  %v281 = vmul.f32 %v265, 0.2
  %v282 = vmul.f32 %v266, 0.2
  %v283 = vmul.f32 %v267, 0.2
  %v284 = vmul.f32 %v268, 0.2
  %v285 = vmul.f32 %v269, 0.2
  %v286 = vmul.f32 %v270, 0.2
  %v287 = vmul.f32 %v271, 0.2
  %v288 = vmul.f32 %v272, 0.2
  %v289 = vmul.f32 %v273, 0.2
  %v290 = vmul.f32 %v274, 0.2
  %v291 = vmul.f32 %v275, 0.2
  %v292 = vmul.f32 %v276, 0.2
  %v293 = vmul.f32 %v277, 0.2
  %v294 = vmul.f32 %v278, 0.2
  %v295 = vmul.f32 %v279, 0.2
  %v296 = vmul.f32 %v280, 0.2
  %v297 = vmax.f32 %v265, %v281
  %v298 = vmax.f32 %v266, %v282
  %v299 = vmax.f32 %v267, %v283
  %v300 = vmax.f32 %v268, %v284
  %v301 = vmax.f32 %v269, %v285
  %v302 = vmax.f32 %v270, %v286
  %v303 = vmax.f32 %v271, %v287
  %v304 = vmax.f32 %v272, %v288
  %v305 = vmax.f32 %v273, %v289
  %v306 = vmax.f32 %v274, %v290
  %v307 = vmax.f32 %v275, %v291
  %v308 = vmax.f32 %v276, %v292
  %v309 = vmax.f32 %v277, %v293
  %v310 = vmax.f32 %v278, %v294
  %v311 = vmax.f32 %v279, %v295
  %v312 = vmax.f32 %v280, %v296
  %v313 = vsel %vm143, 16843009, 0
  %v314 = vsel %vm144, 16843009, 0
  %v315 = vsel %vm145, 16843009, 0
  %v316 = vsel %vm146, 16843009, 0
  %v317 = vunpack.c.0.s8 %v313
  %v318 = vunpack.c.1.s8 %v313
  %v319 = vunpack.c.2.s8 %v313
  %v320 = vunpack.c.3.s8 %v313
  %v321 = vunpack.c.0.s8 %v314
  %v322 = vunpack.c.1.s8 %v314
  %v323 = vunpack.c.2.s8 %v314
  %v324 = vunpack.c.3.s8 %v314
  %v325 = vunpack.c.0.s8 %v315
  %v326 = vunpack.c.1.s8 %v315
  %v327 = vunpack.c.2.s8 %v315
  %v328 = vunpack.c.3.s8 %v315
  %v329 = vunpack.c.0.s8 %v316
  %v330 = vunpack.c.1.s8 %v316
  %v331 = vunpack.c.2.s8 %v316
  %v332 = vunpack.c.3.s8 %v316
  %v333 = vpack.c.b16 %v317, %v317
  %v334 = vpack.c.b8 %v333, %v333
  %v335 = vpack.c.b16 %v318, %v318
  %v336 = vpack.c.b8 %v335, %v335
  %v337 = vpack.c.b16 %v319, %v319
  %v338 = vpack.c.b8 %v337, %v337
  %v339 = vpack.c.b16 %v320, %v320
  %v340 = vpack.c.b8 %v339, %v339
  %v341 = vpack.c.b16 %v321, %v321
  %v342 = vpack.c.b8 %v341, %v341
  %v343 = vpack.c.b16 %v322, %v322
  %v344 = vpack.c.b8 %v343, %v343
  %v345 = vpack.c.b16 %v323, %v323
  %v346 = vpack.c.b8 %v345, %v345
  %v347 = vpack.c.b16 %v324, %v324
  %v348 = vpack.c.b8 %v347, %v347
  %v349 = vpack.c.b16 %v325, %v325
  %v350 = vpack.c.b8 %v349, %v349
  %v351 = vpack.c.b16 %v326, %v326
  %v352 = vpack.c.b8 %v351, %v351
  %v353 = vpack.c.b16 %v327, %v327
  %v354 = vpack.c.b8 %v353, %v353
  %v355 = vpack.c.b16 %v328, %v328
  %v356 = vpack.c.b8 %v355, %v355
  %v357 = vpack.c.b16 %v329, %v329
  %v358 = vpack.c.b8 %v357, %v357
  %v359 = vpack.c.b16 %v330, %v330
  %v360 = vpack.c.b8 %v359, %v359
  %v361 = vpack.c.b16 %v331, %v331
  %v362 = vpack.c.b8 %v361, %v361
  %v363 = vpack.c.b16 %v332, %v332
  %v364 = vpack.c.b8 %v363, %v363
  %vm365 = vnez %v334
  %vm366 = vnez %v336
  %vm367 = vnez %v338
  %vm368 = vnez %v340
  %vm369 = vnez %v342
  %vm370 = vnez %v344
  %vm371 = vnez %v346
  %vm372 = vnez %v348
  %vm373 = vnez %v350
  %vm374 = vnez %v352
  %vm375 = vnez %v354
  %vm376 = vnez %v356
  %vm377 = vnez %v358
  %vm378 = vnez %v360
  %vm379 = vnez %v362
  %vm380 = vnez %v364
  %v381 = vsel %vm365, 16843009, 0
  %v382 = vsel %vm366, 16843009, 0
  %v383 = vsel %vm367, 16843009, 0
  %v384 = vsel %vm368, 16843009, 0
  %v385 = vsel %vm369, 16843009, 0
  %v386 = vsel %vm370, 16843009, 0
  %v387 = vsel %vm371, 16843009, 0
  %v388 = vsel %vm372, 16843009, 0
  %v389 = vsel %vm373, 16843009, 0
  %v390 = vsel %vm374, 16843009, 0
  %v391 = vsel %vm375, 16843009, 0
  %v392 = vsel %vm376, 16843009, 0
  %v393 = vsel %vm377, 16843009, 0
  %v394 = vsel %vm378, 16843009, 0
  %v395 = vsel %vm379, 16843009, 0
  %v396 = vsel %vm380, 16843009, 0
  %v397 = vunpack.c.0.s8 %v381
  %v398 = vunpack.c.0.s8 %v382
  %v399 = vunpack.c.0.s8 %v383
  %v400 = vunpack.c.0.s8 %v384
  %v401 = vunpack.c.0.s8 %v385
  %v402 = vunpack.c.0.s8 %v386
  %v403 = vunpack.c.0.s8 %v387
  %v404 = vunpack.c.0.s8 %v388
  %v405 = vunpack.c.0.s8 %v389
  %v406 = vunpack.c.0.s8 %v390
  %v407 = vunpack.c.0.s8 %v391
  %v408 = vunpack.c.0.s8 %v392
  %v409 = vunpack.c.0.s8 %v393
  %v410 = vunpack.c.0.s8 %v394
  %v411 = vunpack.c.0.s8 %v395
  %v412 = vunpack.c.0.s8 %v396
  %vm413 = vcmp.ne.s32.totalorder %v397, 0
  %vm414 = vcmp.ne.s32.totalorder %v398, 0
  %vm415 = vcmp.ne.s32.totalorder %v399, 0
  %vm416 = vcmp.ne.s32.totalorder %v400, 0
  %vm417 = vcmp.ne.s32.totalorder %v401, 0
  %vm418 = vcmp.ne.s32.totalorder %v402, 0
  %vm419 = vcmp.ne.s32.totalorder %v403, 0
  %vm420 = vcmp.ne.s32.totalorder %v404, 0
  %vm421 = vcmp.ne.s32.totalorder %v405, 0
  %vm422 = vcmp.ne.s32.totalorder %v406, 0
  %vm423 = vcmp.ne.s32.totalorder %v407, 0
  %vm424 = vcmp.ne.s32.totalorder %v408, 0
  %vm425 = vcmp.ne.s32.totalorder %v409, 0
  %vm426 = vcmp.ne.s32.totalorder %v410, 0
  %vm427 = vcmp.ne.s32.totalorder %v411, 0
  %vm428 = vcmp.ne.s32.totalorder %v412, 0
  %v429 = vsel %vm413, %v297, -9e+15
  %v430 = vsel %vm414, %v298, -9e+15
  %v431 = vsel %vm415, %v299, -9e+15
  %v432 = vsel %vm416, %v300, -9e+15
  %v433 = vsel %vm417, %v301, -9e+15
  %v434 = vsel %vm418, %v302, -9e+15
  %v435 = vsel %vm419, %v303, -9e+15
  %v436 = vsel %vm420, %v304, -9e+15
  %v437 = vsel %vm421, %v305, -9e+15
  %v438 = vsel %vm422, %v306, -9e+15
  %v439 = vsel %vm423, %v307, -9e+15
  %v440 = vsel %vm424, %v308, -9e+15
  %v441 = vsel %vm425, %v309, -9e+15
  %v442 = vsel %vm426, %v310, -9e+15
  %v443 = vsel %vm427, %v311, -9e+15
  %v444 = vsel %vm428, %v312, -9e+15
  %v445 = vld [vmem:[#allocation2] sm:$0xff]
  %v446 = vld [vmem:[#allocation2 + $0x8] sm:$0xff]
  %v447 = vld [vmem:[#allocation2 + $0x10] sm:$0xff]
  %v448 = vld [vmem:[#allocation2 + $0x18] sm:$0xff]
  %v449 = vld [vmem:[#allocation2 + $0x20] sm:$0xff]
  %v450 = vld [vmem:[#allocation2 + $0x28] sm:$0xff]
  %v451 = vld [vmem:[#allocation2 + $0x30] sm:$0xff]
  %v452 = vld [vmem:[#allocation2 + $0x38] sm:$0xff]
  %v453 = vld [vmem:[#allocation2 + $0x40] sm:$0xff]
  %v454 = vld [vmem:[#allocation2 + $0x48] sm:$0xff]
  %v455 = vld [vmem:[#allocation2 + $0x50] sm:$0xff]
  %v456 = vld [vmem:[#allocation2 + $0x58] sm:$0xff]
  %v457 = vld [vmem:[#allocation2 + $0x60] sm:$0xff]
  %v458 = vld [vmem:[#allocation2 + $0x68] sm:$0xff]
  %v459 = vld [vmem:[#allocation2 + $0x70] sm:$0xff]
  %v460 = vld [vmem:[#allocation2 + $0x78] sm:$0xff]
  %461 = vmax.xlane.f32.xlu0 %v429
  %v462 = vpop.xlane.xlu0 %461
  %463 = vmax.xlane.f32.xlu0 %v430
  %v464 = vpop.xlane.xlu0 %463
  %465 = vmax.xlane.f32.xlu0 %v431
  %v466 = vpop.xlane.xlu0 %465
  %467 = vmax.xlane.f32.xlu0 %v432
  %v468 = vpop.xlane.xlu0 %467
  %469 = vmax.xlane.f32.xlu0 %v433
  %v470 = vpop.xlane.xlu0 %469
  %471 = vmax.xlane.f32.xlu0 %v434
  %v472 = vpop.xlane.xlu0 %471
  %473 = vmax.xlane.f32.xlu0 %v435
  %v474 = vpop.xlane.xlu0 %473
  %475 = vmax.xlane.f32.xlu0 %v436
  %v476 = vpop.xlane.xlu0 %475
  %477 = vmax.xlane.f32.xlu0 %v437
  %v478 = vpop.xlane.xlu0 %477
  %479 = vmax.xlane.f32.xlu0 %v438
  %v480 = vpop.xlane.xlu0 %479
  %481 = vmax.xlane.f32.xlu0 %v439
  %v482 = vpop.xlane.xlu0 %481
  %483 = vmax.xlane.f32.xlu0 %v440
  %v484 = vpop.xlane.xlu0 %483
  %485 = vmax.xlane.f32.xlu0 %v441
  %v486 = vpop.xlane.xlu0 %485
  %487 = vmax.xlane.f32.xlu0 %v442
  %v488 = vpop.xlane.xlu0 %487
  %489 = vmax.xlane.f32.xlu0 %v443
  %v490 = vpop.xlane.xlu0 %489
  %491 = vmax.xlane.f32.xlu0 %v444
  %v492 = vpop.xlane.xlu0 %491
  %v493 = vmax.f32 %v445, %v462
  %v494 = vmax.f32 %v446, %v464
  %v495 = vmax.f32 %v447, %v466
  %v496 = vmax.f32 %v448, %v468
  %v497 = vmax.f32 %v449, %v470
  %v498 = vmax.f32 %v450, %v472
  %v499 = vmax.f32 %v451, %v474
  %v500 = vmax.f32 %v452, %v476
  %v501 = vmax.f32 %v453, %v478
  %v502 = vmax.f32 %v454, %v480
  %v503 = vmax.f32 %v455, %v482
  %v504 = vmax.f32 %v456, %v484
  %v505 = vmax.f32 %v457, %v486
  %v506 = vmax.f32 %v458, %v488
  %v507 = vmax.f32 %v459, %v490
  %v508 = vmax.f32 %v460, %v492
  %v509 = vsub.f32 %v445, %v493
  %v510 = vsub.f32 %v446, %v494
  %v511 = vsub.f32 %v447, %v495
  %v512 = vsub.f32 %v448, %v496
  %v513 = vsub.f32 %v449, %v497
  %v514 = vsub.f32 %v450, %v498
  %v515 = vsub.f32 %v451, %v499
  %v516 = vsub.f32 %v452, %v500
  %v517 = vsub.f32 %v453, %v501
  %v518 = vsub.f32 %v454, %v502
  %v519 = vsub.f32 %v455, %v503
  %v520 = vsub.f32 %v456, %v504
  %v521 = vsub.f32 %v457, %v505
  %v522 = vsub.f32 %v458, %v506
  %v523 = vsub.f32 %v459, %v507
  %v524 = vsub.f32 %v460, %v508
  %v525 = vmul.f32 %v509, 1.442695
  %v526 = vpow.pop %v525
  %v527 = vmul.f32 %v510, 1.442695
  %v528 = vpow.pop %v527
  %v529 = vmul.f32 %v511, 1.442695
  %v530 = vpow.pop %v529
  %v531 = vmul.f32 %v512, 1.442695
  %v532 = vpow.pop %v531
  %v533 = vmul.f32 %v513, 1.442695
  %v534 = vpow.pop %v533
  %v535 = vmul.f32 %v514, 1.442695
  %v536 = vpow.pop %v535
  %v537 = vmul.f32 %v515, 1.442695
  %v538 = vpow.pop %v537
  %v539 = vmul.f32 %v516, 1.442695
  %v540 = vpow.pop %v539
  %v541 = vmul.f32 %v517, 1.442695
  %v542 = vpow.pop %v541
  %v543 = vmul.f32 %v518, 1.442695
  %v544 = vpow.pop %v543
  %v545 = vmul.f32 %v519, 1.442695
  %v546 = vpow.pop %v545
  %v547 = vmul.f32 %v520, 1.442695
  %v548 = vpow.pop %v547
  %v549 = vmul.f32 %v521, 1.442695
  %v550 = vpow.pop %v549
  %v551 = vmul.f32 %v522, 1.442695
  %v552 = vpow.pop %v551
  %v553 = vmul.f32 %v523, 1.442695
  %v554 = vpow.pop %v553
  %v555 = vmul.f32 %v524, 1.442695
  %v556 = vpow.pop %v555
  %558 = vset.pattern.permute.xlu0 0
  %559 = vperm.xlu0 %558, %v493
  %v560 = vpop.permute.xlu0 %559
  %563 = vset.pattern.permute.xlu0 0
  %564 = vperm.xlu0 %563, %v494
  %v565 = vpop.permute.xlu0 %564
  %568 = vset.pattern.permute.xlu0 0
  %569 = vperm.xlu0 %568, %v495
  %v570 = vpop.permute.xlu0 %569
  %573 = vset.pattern.permute.xlu0 0
  %574 = vperm.xlu0 %573, %v496
  %v575 = vpop.permute.xlu0 %574
  %578 = vset.pattern.permute.xlu0 0
  %579 = vperm.xlu0 %578, %v497
  %v580 = vpop.permute.xlu0 %579
  %583 = vset.pattern.permute.xlu0 0
  %584 = vperm.xlu0 %583, %v498
  %v585 = vpop.permute.xlu0 %584
  %588 = vset.pattern.permute.xlu0 0
  %589 = vperm.xlu0 %588, %v499
  %v590 = vpop.permute.xlu0 %589
  %593 = vset.pattern.permute.xlu0 0
  %594 = vperm.xlu0 %593, %v500
  %v595 = vpop.permute.xlu0 %594
  %598 = vset.pattern.permute.xlu0 0
  %599 = vperm.xlu0 %598, %v501
  %v600 = vpop.permute.xlu0 %599
  %603 = vset.pattern.permute.xlu0 0
  %604 = vperm.xlu0 %603, %v502
  %v605 = vpop.permute.xlu0 %604
  %608 = vset.pattern.permute.xlu0 0
  %609 = vperm.xlu0 %608, %v503
  %v610 = vpop.permute.xlu0 %609
  %613 = vset.pattern.permute.xlu0 0
  %614 = vperm.xlu0 %613, %v504
  %v615 = vpop.permute.xlu0 %614
  %618 = vset.pattern.permute.xlu0 0
  %619 = vperm.xlu0 %618, %v505
  %v620 = vpop.permute.xlu0 %619
  %623 = vset.pattern.permute.xlu0 0
  %624 = vperm.xlu0 %623, %v506
  %v625 = vpop.permute.xlu0 %624
  %628 = vset.pattern.permute.xlu0 0
  %629 = vperm.xlu0 %628, %v507
  %v630 = vpop.permute.xlu0 %629
  %633 = vset.pattern.permute.xlu0 0
  %634 = vperm.xlu0 %633, %v508
  %v635 = vpop.permute.xlu0 %634
  %v637 = vsub.f32 %v429, %v560
  %v638 = vsub.f32 %v430, %v565
  %v639 = vsub.f32 %v431, %v570
  %v640 = vsub.f32 %v432, %v575
  %v641 = vsub.f32 %v433, %v580
  %v642 = vsub.f32 %v434, %v585
  %v643 = vsub.f32 %v435, %v590
  %v644 = vsub.f32 %v436, %v595
  %v645 = vsub.f32 %v437, %v600
  %v646 = vsub.f32 %v438, %v605
  %v647 = vsub.f32 %v439, %v610
  %v648 = vsub.f32 %v440, %v615
  %v649 = vsub.f32 %v441, %v620
  %v650 = vsub.f32 %v442, %v625
  %v651 = vsub.f32 %v443, %v630
  %v652 = vsub.f32 %v444, %v635
  %v653 = vmul.f32 %v637, 1.442695
  %v654 = vpow.pop %v653
  %v655 = vmul.f32 %v638, 1.442695
  %v656 = vpow.pop %v655
  %v657 = vmul.f32 %v639, 1.442695
  %v658 = vpow.pop %v657
  %v659 = vmul.f32 %v640, 1.442695
  %v660 = vpow.pop %v659
  %v661 = vmul.f32 %v641, 1.442695
  %v662 = vpow.pop %v661
  %v663 = vmul.f32 %v642, 1.442695
  %v664 = vpow.pop %v663
  %v665 = vmul.f32 %v643, 1.442695
  %v666 = vpow.pop %v665
  %v667 = vmul.f32 %v644, 1.442695
  %v668 = vpow.pop %v667
  %v669 = vmul.f32 %v645, 1.442695
  %v670 = vpow.pop %v669
  %v671 = vmul.f32 %v646, 1.442695
  %v672 = vpow.pop %v671
  %v673 = vmul.f32 %v647, 1.442695
  %v674 = vpow.pop %v673
  %v675 = vmul.f32 %v648, 1.442695
  %v676 = vpow.pop %v675
  %v677 = vmul.f32 %v649, 1.442695
  %v678 = vpow.pop %v677
  %v679 = vmul.f32 %v650, 1.442695
  %v680 = vpow.pop %v679
  %v681 = vmul.f32 %v651, 1.442695
  %v682 = vpow.pop %v681
  %v683 = vmul.f32 %v652, 1.442695
  %v684 = vpow.pop %v683
  %v685 = vld [vmem:[#allocation3] sm:$0xff]
  %v686 = vld [vmem:[#allocation3 + $0x8] sm:$0xff]
  %v687 = vld [vmem:[#allocation3 + $0x10] sm:$0xff]
  %v688 = vld [vmem:[#allocation3 + $0x18] sm:$0xff]
  %v689 = vld [vmem:[#allocation3 + $0x20] sm:$0xff]
  %v690 = vld [vmem:[#allocation3 + $0x28] sm:$0xff]
  %v691 = vld [vmem:[#allocation3 + $0x30] sm:$0xff]
  %v692 = vld [vmem:[#allocation3 + $0x38] sm:$0xff]
  %v693 = vld [vmem:[#allocation3 + $0x40] sm:$0xff]
  %v694 = vld [vmem:[#allocation3 + $0x48] sm:$0xff]
  %v695 = vld [vmem:[#allocation3 + $0x50] sm:$0xff]
  %v696 = vld [vmem:[#allocation3 + $0x58] sm:$0xff]
  %v697 = vld [vmem:[#allocation3 + $0x60] sm:$0xff]
  %v698 = vld [vmem:[#allocation3 + $0x68] sm:$0xff]
  %v699 = vld [vmem:[#allocation3 + $0x70] sm:$0xff]
  %v700 = vld [vmem:[#allocation3 + $0x78] sm:$0xff]
  %v701 = vmul.f32 %v526, %v685
  %v702 = vmul.f32 %v528, %v686
  %v703 = vmul.f32 %v530, %v687
  %v704 = vmul.f32 %v532, %v688
  %v705 = vmul.f32 %v534, %v689
  %v706 = vmul.f32 %v536, %v690
  %v707 = vmul.f32 %v538, %v691
  %v708 = vmul.f32 %v540, %v692
  %v709 = vmul.f32 %v542, %v693
  %v710 = vmul.f32 %v544, %v694
  %v711 = vmul.f32 %v546, %v695
  %v712 = vmul.f32 %v548, %v696
  %v713 = vmul.f32 %v550, %v697
  %v714 = vmul.f32 %v552, %v698
  %v715 = vmul.f32 %v554, %v699
  %v716 = vmul.f32 %v556, %v700
  %717 = vadd.xlane.f32.xlu0 %v654
  %v718 = vpop.xlane.xlu0 %717
  %719 = vadd.xlane.f32.xlu0 %v656
  %v720 = vpop.xlane.xlu0 %719
  %721 = vadd.xlane.f32.xlu0 %v658
  %v722 = vpop.xlane.xlu0 %721
  %723 = vadd.xlane.f32.xlu0 %v660
  %v724 = vpop.xlane.xlu0 %723
  %725 = vadd.xlane.f32.xlu0 %v662
  %v726 = vpop.xlane.xlu0 %725
  %727 = vadd.xlane.f32.xlu0 %v664
  %v728 = vpop.xlane.xlu0 %727
  %729 = vadd.xlane.f32.xlu0 %v666
  %v730 = vpop.xlane.xlu0 %729
  %731 = vadd.xlane.f32.xlu0 %v668
  %v732 = vpop.xlane.xlu0 %731
  %733 = vadd.xlane.f32.xlu0 %v670
  %v734 = vpop.xlane.xlu0 %733
  %735 = vadd.xlane.f32.xlu0 %v672
  %v736 = vpop.xlane.xlu0 %735
  %737 = vadd.xlane.f32.xlu0 %v674
  %v738 = vpop.xlane.xlu0 %737
  %739 = vadd.xlane.f32.xlu0 %v676
  %v740 = vpop.xlane.xlu0 %739
  %741 = vadd.xlane.f32.xlu0 %v678
  %v742 = vpop.xlane.xlu0 %741
  %743 = vadd.xlane.f32.xlu0 %v680
  %v744 = vpop.xlane.xlu0 %743
  %745 = vadd.xlane.f32.xlu0 %v682
  %v746 = vpop.xlane.xlu0 %745
  %747 = vadd.xlane.f32.xlu0 %v684
  %v748 = vpop.xlane.xlu0 %747
  %v749 = vadd.f32 %v701, %v718
  %v750 = vadd.f32 %v702, %v720
  %v751 = vadd.f32 %v703, %v722
  %v752 = vadd.f32 %v704, %v724
  %v753 = vadd.f32 %v705, %v726
  %v754 = vadd.f32 %v706, %v728
  %v755 = vadd.f32 %v707, %v730
  %v756 = vadd.f32 %v708, %v732
  %v757 = vadd.f32 %v709, %v734
  %v758 = vadd.f32 %v710, %v736
  %v759 = vadd.f32 %v711, %v738
  %v760 = vadd.f32 %v712, %v740
  %v761 = vadd.f32 %v713, %v742
  %v762 = vadd.f32 %v714, %v744
  %v763 = vadd.f32 %v715, %v746
  %v764 = vadd.f32 %v716, %v748
  %vm765 = vcmask 7168
  %766 = vst.msk [vmem:[#allocation3] sm:$0xff] %vm765, %v749
  %767 = vst.msk [vmem:[#allocation3 + $0x8] sm:$0xff] %vm765, %v750
  %768 = vst.msk [vmem:[#allocation3 + $0x10] sm:$0xff] %vm765, %v751
  %769 = vst.msk [vmem:[#allocation3 + $0x18] sm:$0xff] %vm765, %v752
  %770 = vst.msk [vmem:[#allocation3 + $0x20] sm:$0xff] %vm765, %v753
  %771 = vst.msk [vmem:[#allocation3 + $0x28] sm:$0xff] %vm765, %v754
  %772 = vst.msk [vmem:[#allocation3 + $0x30] sm:$0xff] %vm765, %v755
  %773 = vst.msk [vmem:[#allocation3 + $0x38] sm:$0xff] %vm765, %v756
  %774 = vst.msk [vmem:[#allocation3 + $0x40] sm:$0xff] %vm765, %v757
  %775 = vst.msk [vmem:[#allocation3 + $0x48] sm:$0xff] %vm765, %v758
  %776 = vst.msk [vmem:[#allocation3 + $0x50] sm:$0xff] %vm765, %v759
  %777 = vst.msk [vmem:[#allocation3 + $0x58] sm:$0xff] %vm765, %v760
  %778 = vst.msk [vmem:[#allocation3 + $0x60] sm:$0xff] %vm765, %v761
  %779 = vst.msk [vmem:[#allocation3 + $0x68] sm:$0xff] %vm765, %v762
  %780 = vst.msk [vmem:[#allocation3 + $0x70] sm:$0xff] %vm765, %v763
  %781 = vst.msk [vmem:[#allocation3 + $0x78] sm:$0xff] %vm765, %v764
  %v782 = vld [vmem:[#allocation4] sm:$0xff]
  %v783 = vld [vmem:[#allocation4 + $0x8] sm:$0xff]
  %v784 = vld [vmem:[#allocation4 + $0x10] sm:$0xff]
  %v785 = vld [vmem:[#allocation4 + $0x18] sm:$0xff]
  %v786 = vld [vmem:[#allocation4 + $0x20] sm:$0xff]
  %v787 = vld [vmem:[#allocation4 + $0x28] sm:$0xff]
  %v788 = vld [vmem:[#allocation4 + $0x30] sm:$0xff]
  %v789 = vld [vmem:[#allocation4 + $0x38] sm:$0xff]
  %v790 = vld [vmem:[#allocation4 + $0x40] sm:$0xff]
  %v791 = vld [vmem:[#allocation4 + $0x48] sm:$0xff]
  %v792 = vld [vmem:[#allocation4 + $0x50] sm:$0xff]
  %v793 = vld [vmem:[#allocation4 + $0x58] sm:$0xff]
  %v794 = vld [vmem:[#allocation4 + $0x60] sm:$0xff]
  %v795 = vld [vmem:[#allocation4 + $0x68] sm:$0xff]
  %v796 = vld [vmem:[#allocation4 + $0x70] sm:$0xff]
  %v797 = vld [vmem:[#allocation4 + $0x78] sm:$0xff]
  %799 = vset.pattern.permute.xlu0 0
  %800 = vperm.xlu0 %799, %v526
  %v801 = vpop.permute.xlu0 %800
  %804 = vset.pattern.permute.xlu0 0
  %805 = vperm.xlu0 %804, %v528
  %v806 = vpop.permute.xlu0 %805
  %809 = vset.pattern.permute.xlu0 0
  %810 = vperm.xlu0 %809, %v530
  %v811 = vpop.permute.xlu0 %810
  %814 = vset.pattern.permute.xlu0 0
  %815 = vperm.xlu0 %814, %v532
  %v816 = vpop.permute.xlu0 %815
  %819 = vset.pattern.permute.xlu0 0
  %820 = vperm.xlu0 %819, %v534
  %v821 = vpop.permute.xlu0 %820
  %824 = vset.pattern.permute.xlu0 0
  %825 = vperm.xlu0 %824, %v536
  %v826 = vpop.permute.xlu0 %825
  %829 = vset.pattern.permute.xlu0 0
  %830 = vperm.xlu0 %829, %v538
  %v831 = vpop.permute.xlu0 %830
  %834 = vset.pattern.permute.xlu0 0
  %835 = vperm.xlu0 %834, %v540
  %v836 = vpop.permute.xlu0 %835
  %839 = vset.pattern.permute.xlu0 0
  %840 = vperm.xlu0 %839, %v542
  %v841 = vpop.permute.xlu0 %840
  %844 = vset.pattern.permute.xlu0 0
  %845 = vperm.xlu0 %844, %v544
  %v846 = vpop.permute.xlu0 %845
  %849 = vset.pattern.permute.xlu0 0
  %850 = vperm.xlu0 %849, %v546
  %v851 = vpop.permute.xlu0 %850
  %854 = vset.pattern.permute.xlu0 0
  %855 = vperm.xlu0 %854, %v548
  %v856 = vpop.permute.xlu0 %855
  %859 = vset.pattern.permute.xlu0 0
  %860 = vperm.xlu0 %859, %v550
  %v861 = vpop.permute.xlu0 %860
  %864 = vset.pattern.permute.xlu0 0
  %865 = vperm.xlu0 %864, %v552
  %v866 = vpop.permute.xlu0 %865
  %869 = vset.pattern.permute.xlu0 0
  %870 = vperm.xlu0 %869, %v554
  %v871 = vpop.permute.xlu0 %870
  %874 = vset.pattern.permute.xlu0 0
  %875 = vperm.xlu0 %874, %v556
  %v876 = vpop.permute.xlu0 %875
  %v878 = vmul.f32 %v801, %v782
  %v879 = vmul.f32 %v806, %v783
  %v880 = vmul.f32 %v811, %v784
  %v881 = vmul.f32 %v816, %v785
  %v882 = vmul.f32 %v821, %v786
  %v883 = vmul.f32 %v826, %v787
  %v884 = vmul.f32 %v831, %v788
  %v885 = vmul.f32 %v836, %v789
  %v886 = vmul.f32 %v841, %v790
  %v887 = vmul.f32 %v846, %v791
  %v888 = vmul.f32 %v851, %v792
  %v889 = vmul.f32 %v856, %v793
  %v890 = vmul.f32 %v861, %v794
  %v891 = vmul.f32 %v866, %v795
  %v892 = vmul.f32 %v871, %v796
  %v893 = vmul.f32 %v876, %v797
  %v894 = vpack.c.bf16 %v656, %v654
  %v895 = vpack.c.bf16 %v660, %v658
  %v896 = vpack.c.bf16 %v664, %v662
  %v897 = vpack.c.bf16 %v668, %v666
  %v898 = vpack.c.bf16 %v672, %v670
  %v899 = vpack.c.bf16 %v676, %v674
  %v900 = vpack.c.bf16 %v680, %v678
  %v901 = vpack.c.bf16 %v684, %v682
  %v918 = vunpack.c.l.b16 %v147
  %v919 = vunpack.c.l.b16 %v148
  %v920 = vunpack.c.l.b16 %v149
  %v921 = vunpack.c.l.b16 %v150
  %v922 = vunpack.c.l.b16 %v151
  %v923 = vunpack.c.l.b16 %v152
  %v924 = vunpack.c.l.b16 %v153
  %v925 = vunpack.c.l.b16 %v154
  %v926 = vunpack.c.l.b16 %v155
  %v927 = vunpack.c.l.b16 %v156
  %v928 = vunpack.c.l.b16 %v157
  %v929 = vunpack.c.l.b16 %v158
  %v930 = vunpack.c.l.b16 %v159
  %v931 = vunpack.c.l.b16 %v160
  %v932 = vunpack.c.l.b16 %v161
  %v933 = vunpack.c.l.b16 %v162
  %v934 = vpack.c.b16 %v919, %v918
  %v935 = vpack.c.b16 %v921, %v920
  %v936 = vpack.c.b16 %v923, %v922
  %v937 = vpack.c.b16 %v925, %v924
  %v938 = vpack.c.b16 %v927, %v926
  %v939 = vpack.c.b16 %v929, %v928
  %v940 = vpack.c.b16 %v931, %v930
  %v941 = vpack.c.b16 %v933, %v932
  %950 = vmatprep.subr.bf16.mxu0 0
  %951 = vmatpush1.bf16.msra.mxu0 %v934
  %952 = vmatprep.subr.bf16.mxu0 0
  %953 = vmatpush1.bf16.msra.mxu0 %v935
  %954 = vmatprep.subr.bf16.mxu0 0
  %955 = vmatpush1.bf16.msra.mxu0 %v936
  %956 = vmatprep.subr.bf16.mxu0 0
  %957 = vmatpush1.bf16.msra.mxu0 %v937
  %958 = vmatprep.subr.bf16.mxu0 0
  %959 = vmatpush1.bf16.msra.mxu0 %v938
  %960 = vmatprep.subr.bf16.mxu0 0
  %961 = vmatpush1.bf16.msra.mxu0 %v939
  %962 = vmatprep.subr.bf16.mxu0 0
  %963 = vmatpush1.bf16.msra.mxu0 %v940
  %964 = vmatprep.subr.bf16.mxu0 0
  %965 = vmatpush1.bf16.msra.mxu0 %v941
  %966 = vmatprep.subr.bf16.mxu0 0
  %967 = vmatpush1.bf16.msra.mxu0 0
  %968 = vmatprep.subr.bf16.mxu0 0
  %969 = vmatpush1.bf16.msra.mxu0 0
  %970 = vmatprep.subr.bf16.mxu0 0
  %971 = vmatpush1.bf16.msra.mxu0 0
  %972 = vmatprep.subr.bf16.mxu0 0
  %973 = vmatpush1.bf16.msra.mxu0 0
  %974 = vmatprep.subr.bf16.mxu0 0
  %975 = vmatpush1.bf16.msra.mxu0 0
  %976 = vmatprep.subr.bf16.mxu0 0
  %977 = vmatpush1.bf16.msra.mxu0 0
  %978 = vmatprep.subr.bf16.mxu0 0
  %979 = vmatpush1.bf16.msra.mxu0 0
  %980 = vmatprep.subr.bf16.mxu0 0
  %981 = vmatpush1.bf16.msra.mxu0 0
  %982 = vmatprep.mubr.bf16.mxu0 0
  %983 = vmatmul.mubr.bf16.gmra.mrb[0].mxu0 %v894
  %v984 = vpop.f32.mrb[0].mxu0
  %v985 = vadd.f32 0.0, %v984
  %v986 = vpop.f32.mrb[0].mxu0
  %v987 = vpop.f32.mrb[0].mxu0
  %v988 = vadd.f32 0.0, %v987
  %v989 = vpop.f32.mrb[0].mxu0
  %990 = vmatprep.mubr.bf16.mxu0 0
  %991 = vmatmul.mubr.bf16.gmra.mrb[0].mxu0 %v895
  %v992 = vpop.f32.mrb[0].mxu0
  %v993 = vadd.f32 0.0, %v992
  %v994 = vpop.f32.mrb[0].mxu0
  %v995 = vpop.f32.mrb[0].mxu0
  %v996 = vadd.f32 0.0, %v995
  %v997 = vpop.f32.mrb[0].mxu0
  %998 = vmatprep.mubr.bf16.mxu0 0
  %999 = vmatmul.mubr.bf16.gmra.mrb[0].mxu0 %v896
  %v1000 = vpop.f32.mrb[0].mxu0
  %v1001 = vadd.f32 0.0, %v1000
  %v1002 = vpop.f32.mrb[0].mxu0
  %v1003 = vpop.f32.mrb[0].mxu0
  %v1004 = vadd.f32 0.0, %v1003
  %v1005 = vpop.f32.mrb[0].mxu0
  %1006 = vmatprep.mubr.bf16.mxu0 0
  %1007 = vmatmul.mubr.bf16.gmra.mrb[0].mxu0 %v897
  %v1008 = vpop.f32.mrb[0].mxu0
  %v1009 = vadd.f32 0.0, %v1008
  %v1010 = vpop.f32.mrb[0].mxu0
  %v1011 = vpop.f32.mrb[0].mxu0
  %v1012 = vadd.f32 0.0, %v1011
  %v1013 = vpop.f32.mrb[0].mxu0
  %1014 = vmatprep.mubr.bf16.mxu0 0
  %1015 = vmatmul.mubr.bf16.gmra.mrb[0].mxu0 %v898
  %v1016 = vpop.f32.mrb[0].mxu0
  %v1017 = vadd.f32 0.0, %v1016
  %v1018 = vpop.f32.mrb[0].mxu0
  %v1019 = vpop.f32.mrb[0].mxu0
  %v1020 = vadd.f32 0.0, %v1019
  %v1021 = vpop.f32.mrb[0].mxu0
  %1022 = vmatprep.mubr.bf16.mxu0 0
  %1023 = vmatmul.mubr.bf16.gmra.mrb[0].mxu0 %v899
  %v1024 = vpop.f32.mrb[0].mxu0
  %v1025 = vadd.f32 0.0, %v1024
  %v1026 = vpop.f32.mrb[0].mxu0
  %v1027 = vpop.f32.mrb[0].mxu0
  %v1028 = vadd.f32 0.0, %v1027
  %v1029 = vpop.f32.mrb[0].mxu0
  %1030 = vmatprep.mubr.bf16.mxu0 0
  %1031 = vmatmul.mubr.bf16.gmra.mrb[0].mxu0 %v900
  %v1032 = vpop.f32.mrb[0].mxu0
  %v1033 = vadd.f32 0.0, %v1032
  %v1034 = vpop.f32.mrb[0].mxu0
  %v1035 = vpop.f32.mrb[0].mxu0
  %v1036 = vadd.f32 0.0, %v1035
  %v1037 = vpop.f32.mrb[0].mxu0
  %1038 = vmatprep.mubr.bf16.mxu0 0
  %1039 = vmatmul.mubr.bf16.gmra.mrb[0].mxu0 %v901
  %v1040 = vpop.f32.mrb[0].mxu0
  %v1041 = vadd.f32 0.0, %v1040
  %v1042 = vpop.f32.mrb[0].mxu0
  %v1043 = vpop.f32.mrb[0].mxu0
  %v1044 = vadd.f32 0.0, %v1043
  %v1045 = vpop.f32.mrb[0].mxu0
  %1046 = vdwg.mxu0
  %v1047 = vadd.f32 %v878, %v985
  %v1048 = vadd.f32 %v879, %v988
  %v1049 = vadd.f32 %v880, %v993
  %v1050 = vadd.f32 %v881, %v996
  %v1051 = vadd.f32 %v882, %v1001
  %v1052 = vadd.f32 %v883, %v1004
  %v1053 = vadd.f32 %v884, %v1009
  %v1054 = vadd.f32 %v885, %v1012
  %v1055 = vadd.f32 %v886, %v1017
  %v1056 = vadd.f32 %v887, %v1020
  %v1057 = vadd.f32 %v888, %v1025
  %v1058 = vadd.f32 %v889, %v1028
  %v1059 = vadd.f32 %v890, %v1033
  %v1060 = vadd.f32 %v891, %v1036
  %v1061 = vadd.f32 %v892, %v1041
  %v1062 = vadd.f32 %v893, %v1044
  %1063 = vst [vmem:[#allocation4] sm:$0xff] %v1047
  %1064 = vst [vmem:[#allocation4 + $0x8] sm:$0xff] %v1048
  %1065 = vst [vmem:[#allocation4 + $0x10] sm:$0xff] %v1049
  %1066 = vst [vmem:[#allocation4 + $0x18] sm:$0xff] %v1050
  %1067 = vst [vmem:[#allocation4 + $0x20] sm:$0xff] %v1051
  %1068 = vst [vmem:[#allocation4 + $0x28] sm:$0xff] %v1052
  %1069 = vst [vmem:[#allocation4 + $0x30] sm:$0xff] %v1053
  %1070 = vst [vmem:[#allocation4 + $0x38] sm:$0xff] %v1054
  %1071 = vst [vmem:[#allocation4 + $0x40] sm:$0xff] %v1055
  %1072 = vst [vmem:[#allocation4 + $0x48] sm:$0xff] %v1056
  %1073 = vst [vmem:[#allocation4 + $0x50] sm:$0xff] %v1057
  %1074 = vst [vmem:[#allocation4 + $0x58] sm:$0xff] %v1058
  %1075 = vst [vmem:[#allocation4 + $0x60] sm:$0xff] %v1059
  %1076 = vst [vmem:[#allocation4 + $0x68] sm:$0xff] %v1060
  %1077 = vst [vmem:[#allocation4 + $0x70] sm:$0xff] %v1061
  %1078 = vst [vmem:[#allocation4 + $0x78] sm:$0xff] %v1062
  %1079 = vst.msk [vmem:[#allocation2] sm:$0xff] %vm765, %v493
  %1080 = vst.msk [vmem:[#allocation2 + $0x8] sm:$0xff] %vm765, %v494
  %1081 = vst.msk [vmem:[#allocation2 + $0x10] sm:$0xff] %vm765, %v495
  %1082 = vst.msk [vmem:[#allocation2 + $0x18] sm:$0xff] %vm765, %v496
  %1083 = vst.msk [vmem:[#allocation2 + $0x20] sm:$0xff] %vm765, %v497
  %1084 = vst.msk [vmem:[#allocation2 + $0x28] sm:$0xff] %vm765, %v498
  %1085 = vst.msk [vmem:[#allocation2 + $0x30] sm:$0xff] %vm765, %v499
  %1086 = vst.msk [vmem:[#allocation2 + $0x38] sm:$0xff] %vm765, %v500
  %1087 = vst.msk [vmem:[#allocation2 + $0x40] sm:$0xff] %vm765, %v501
  %1088 = vst.msk [vmem:[#allocation2 + $0x48] sm:$0xff] %vm765, %v502
  %1089 = vst.msk [vmem:[#allocation2 + $0x50] sm:$0xff] %vm765, %v503
  %1090 = vst.msk [vmem:[#allocation2 + $0x58] sm:$0xff] %vm765, %v504
  %1091 = vst.msk [vmem:[#allocation2 + $0x60] sm:$0xff] %vm765, %v505
  %1092 = vst.msk [vmem:[#allocation2 + $0x68] sm:$0xff] %vm765, %v506
  %1093 = vst.msk [vmem:[#allocation2 + $0x70] sm:$0xff] %vm765, %v507
  %1094 = vst.msk [vmem:[#allocation2 + $0x78] sm:$0xff] %vm765, %v508
  %1095 = vset.pattern.permute.xlu0 1
  %1096 = vperm.xlu0 %1095, %v163
  %v1097 = vpop.permute.xlu0 %1096
  %1099 = vset.pattern.permute.xlu0 1
  %1100 = vperm.xlu0 %1099, %v164
  %v1101 = vpop.permute.xlu0 %1100
  %1103 = vset.pattern.permute.xlu0 1
  %1104 = vperm.xlu0 %1103, %v165
  %v1105 = vpop.permute.xlu0 %1104
  %1107 = vset.pattern.permute.xlu0 1
  %1108 = vperm.xlu0 %1107, %v166
  %v1109 = vpop.permute.xlu0 %1108
  %1111 = vset.pattern.permute.xlu0 1
  %1112 = vperm.xlu0 %1111, %v167
  %v1113 = vpop.permute.xlu0 %1112
  %1115 = vset.pattern.permute.xlu0 1
  %1116 = vperm.xlu0 %1115, %v168
  %v1117 = vpop.permute.xlu0 %1116
  %1119 = vset.pattern.permute.xlu0 1
  %1120 = vperm.xlu0 %1119, %v169
  %v1121 = vpop.permute.xlu0 %1120
  %1123 = vset.pattern.permute.xlu0 1
  %1124 = vperm.xlu0 %1123, %v170
  %v1125 = vpop.permute.xlu0 %1124
  %1127 = vset.pattern.permute.xlu0 1
  %1128 = vperm.xlu0 %1127, %v171
  %v1129 = vpop.permute.xlu0 %1128
  %1131 = vset.pattern.permute.xlu0 1
  %1132 = vperm.xlu0 %1131, %v172
  %v1133 = vpop.permute.xlu0 %1132
  %1135 = vset.pattern.permute.xlu0 1
  %1136 = vperm.xlu0 %1135, %v173
  %v1137 = vpop.permute.xlu0 %1136
  %1139 = vset.pattern.permute.xlu0 1
  %1140 = vperm.xlu0 %1139, %v174
  %v1141 = vpop.permute.xlu0 %1140
  %1143 = vset.pattern.permute.xlu0 1
  %1144 = vperm.xlu0 %1143, %v175
  %v1145 = vpop.permute.xlu0 %1144
  %1147 = vset.pattern.permute.xlu0 1
  %1148 = vperm.xlu0 %1147, %v176
  %v1149 = vpop.permute.xlu0 %1148
  %1151 = vset.pattern.permute.xlu0 1
  %1152 = vperm.xlu0 %1151, %v177
  %v1153 = vpop.permute.xlu0 %1152
  %1155 = vset.pattern.permute.xlu0 1
  %1156 = vperm.xlu0 %1155, %v178
  %v1157 = vpop.permute.xlu0 %1156
  %v1159 = vlaneseq
  %v1160 = vshrl.u32 %v1159, 7
  %v1161 = vsub.s32 0, %v1160
  %v1162 = vrot.slane %v180, %v1161
  %v1163 = vadd.f32 %v1097, %v1162
  %v1164 = vadd.f32 %v1101, %v1162
  %v1165 = vadd.f32 %v1105, %v1162
  %v1166 = vadd.f32 %v1109, %v1162
  %v1167 = vadd.f32 %v1113, %v1162
  %v1168 = vadd.f32 %v1117, %v1162
  %v1169 = vadd.f32 %v1121, %v1162
  %v1170 = vadd.f32 %v1125, %v1162
  %v1171 = vadd.f32 %v1129, %v1162
  %v1172 = vadd.f32 %v1133, %v1162
  %v1173 = vadd.f32 %v1137, %v1162
  %v1174 = vadd.f32 %v1141, %v1162
  %v1175 = vadd.f32 %v1145, %v1162
  %v1176 = vadd.f32 %v1149, %v1162
  %v1177 = vadd.f32 %v1153, %v1162
  %v1178 = vadd.f32 %v1157, %v1162
  %v1179 = vmul.f32 %v1163, 0.2
  %v1180 = vmul.f32 %v1164, 0.2
  %v1181 = vmul.f32 %v1165, 0.2
  %v1182 = vmul.f32 %v1166, 0.2
  %v1183 = vmul.f32 %v1167, 0.2
  %v1184 = vmul.f32 %v1168, 0.2
  %v1185 = vmul.f32 %v1169, 0.2
  %v1186 = vmul.f32 %v1170, 0.2
  %v1187 = vmul.f32 %v1171, 0.2
  %v1188 = vmul.f32 %v1172, 0.2
  %v1189 = vmul.f32 %v1173, 0.2
  %v1190 = vmul.f32 %v1174, 0.2
  %v1191 = vmul.f32 %v1175, 0.2
  %v1192 = vmul.f32 %v1176, 0.2
  %v1193 = vmul.f32 %v1177, 0.2
  %v1194 = vmul.f32 %v1178, 0.2
  %v1195 = vmax.f32 %v1163, %v1179
  %v1196 = vmax.f32 %v1164, %v1180
  %v1197 = vmax.f32 %v1165, %v1181
  %v1198 = vmax.f32 %v1166, %v1182
  %v1199 = vmax.f32 %v1167, %v1183
  %v1200 = vmax.f32 %v1168, %v1184
  %v1201 = vmax.f32 %v1169, %v1185
  %v1202 = vmax.f32 %v1170, %v1186
  %v1203 = vmax.f32 %v1171, %v1187
  %v1204 = vmax.f32 %v1172, %v1188
  %v1205 = vmax.f32 %v1173, %v1189
  %v1206 = vmax.f32 %v1174, %v1190
  %v1207 = vmax.f32 %v1175, %v1191
  %v1208 = vmax.f32 %v1176, %v1192
  %v1209 = vmax.f32 %v1177, %v1193
  %v1210 = vmax.f32 %v1178, %v1194
  %v1211 = vsel %vm413, %v1195, -9e+15
  %v1212 = vsel %vm414, %v1196, -9e+15
  %v1213 = vsel %vm415, %v1197, -9e+15
  %v1214 = vsel %vm416, %v1198, -9e+15
  %v1215 = vsel %vm417, %v1199, -9e+15
  %v1216 = vsel %vm418, %v1200, -9e+15
  %v1217 = vsel %vm419, %v1201, -9e+15
  %v1218 = vsel %vm420, %v1202, -9e+15
  %v1219 = vsel %vm421, %v1203, -9e+15
  %v1220 = vsel %vm422, %v1204, -9e+15
  %v1221 = vsel %vm423, %v1205, -9e+15
  %v1222 = vsel %vm424, %v1206, -9e+15
  %v1223 = vsel %vm425, %v1207, -9e+15
  %v1224 = vsel %vm426, %v1208, -9e+15
  %v1225 = vsel %vm427, %v1209, -9e+15
  %v1226 = vsel %vm428, %v1210, -9e+15
  %v1227 = vld [vmem:[#allocation5] sm:$0xff]
  %v1228 = vld [vmem:[#allocation5 + $0x8] sm:$0xff]
  %v1229 = vld [vmem:[#allocation5 + $0x10] sm:$0xff]
  %v1230 = vld [vmem:[#allocation5 + $0x18] sm:$0xff]
  %v1231 = vld [vmem:[#allocation5 + $0x20] sm:$0xff]
  %v1232 = vld [vmem:[#allocation5 + $0x28] sm:$0xff]
  %v1233 = vld [vmem:[#allocation5 + $0x30] sm:$0xff]
  %v1234 = vld [vmem:[#allocation5 + $0x38] sm:$0xff]
  %v1235 = vld [vmem:[#allocation5 + $0x40] sm:$0xff]
  %v1236 = vld [vmem:[#allocation5 + $0x48] sm:$0xff]
  %v1237 = vld [vmem:[#allocation5 + $0x50] sm:$0xff]
  %v1238 = vld [vmem:[#allocation5 + $0x58] sm:$0xff]
  %v1239 = vld [vmem:[#allocation5 + $0x60] sm:$0xff]
  %v1240 = vld [vmem:[#allocation5 + $0x68] sm:$0xff]
  %v1241 = vld [vmem:[#allocation5 + $0x70] sm:$0xff]
  %v1242 = vld [vmem:[#allocation5 + $0x78] sm:$0xff]
  %1243 = vmax.xlane.f32.xlu0 %v1211
  %v1244 = vpop.xlane.xlu0 %1243
  %1245 = vmax.xlane.f32.xlu0 %v1212
  %v1246 = vpop.xlane.xlu0 %1245
  %1247 = vmax.xlane.f32.xlu0 %v1213
  %v1248 = vpop.xlane.xlu0 %1247
  %1249 = vmax.xlane.f32.xlu0 %v1214
  %v1250 = vpop.xlane.xlu0 %1249
  %1251 = vmax.xlane.f32.xlu0 %v1215
  %v1252 = vpop.xlane.xlu0 %1251
  %1253 = vmax.xlane.f32.xlu0 %v1216
  %v1254 = vpop.xlane.xlu0 %1253
  %1255 = vmax.xlane.f32.xlu0 %v1217
  %v1256 = vpop.xlane.xlu0 %1255
  %1257 = vmax.xlane.f32.xlu0 %v1218
  %v1258 = vpop.xlane.xlu0 %1257
  %1259 = vmax.xlane.f32.xlu0 %v1219
  %v1260 = vpop.xlane.xlu0 %1259
  %1261 = vmax.xlane.f32.xlu0 %v1220
  %v1262 = vpop.xlane.xlu0 %1261
  %1263 = vmax.xlane.f32.xlu0 %v1221
  %v1264 = vpop.xlane.xlu0 %1263
  %1265 = vmax.xlane.f32.xlu0 %v1222
  %v1266 = vpop.xlane.xlu0 %1265
  %1267 = vmax.xlane.f32.xlu0 %v1223
  %v1268 = vpop.xlane.xlu0 %1267
  %1269 = vmax.xlane.f32.xlu0 %v1224
  %v1270 = vpop.xlane.xlu0 %1269
  %1271 = vmax.xlane.f32.xlu0 %v1225
  %v1272 = vpop.xlane.xlu0 %1271
  %1273 = vmax.xlane.f32.xlu0 %v1226
  %v1274 = vpop.xlane.xlu0 %1273
  %v1275 = vmax.f32 %v1227, %v1244
  %v1276 = vmax.f32 %v1228, %v1246
  %v1277 = vmax.f32 %v1229, %v1248
  %v1278 = vmax.f32 %v1230, %v1250
  %v1279 = vmax.f32 %v1231, %v1252
  %v1280 = vmax.f32 %v1232, %v1254
  %v1281 = vmax.f32 %v1233, %v1256
  %v1282 = vmax.f32 %v1234, %v1258
  %v1283 = vmax.f32 %v1235, %v1260
  %v1284 = vmax.f32 %v1236, %v1262
  %v1285 = vmax.f32 %v1237, %v1264
  %v1286 = vmax.f32 %v1238, %v1266
  %v1287 = vmax.f32 %v1239, %v1268
  %v1288 = vmax.f32 %v1240, %v1270
  %v1289 = vmax.f32 %v1241, %v1272
  %v1290 = vmax.f32 %v1242, %v1274
  %v1291 = vsub.f32 %v1227, %v1275
  %v1292 = vsub.f32 %v1228, %v1276
  %v1293 = vsub.f32 %v1229, %v1277
  %v1294 = vsub.f32 %v1230, %v1278
  %v1295 = vsub.f32 %v1231, %v1279
  %v1296 = vsub.f32 %v1232, %v1280
  %v1297 = vsub.f32 %v1233, %v1281
  %v1298 = vsub.f32 %v1234, %v1282
  %v1299 = vsub.f32 %v1235, %v1283
  %v1300 = vsub.f32 %v1236, %v1284
  %v1301 = vsub.f32 %v1237, %v1285
  %v1302 = vsub.f32 %v1238, %v1286
  %v1303 = vsub.f32 %v1239, %v1287
  %v1304 = vsub.f32 %v1240, %v1288
  %v1305 = vsub.f32 %v1241, %v1289
  %v1306 = vsub.f32 %v1242, %v1290
  %v1307 = vmul.f32 %v1291, 1.442695
  %v1308 = vpow.pop %v1307
  %v1309 = vmul.f32 %v1292, 1.442695
  %v1310 = vpow.pop %v1309
  %v1311 = vmul.f32 %v1293, 1.442695
  %v1312 = vpow.pop %v1311
  %v1313 = vmul.f32 %v1294, 1.442695
  %v1314 = vpow.pop %v1313
  %v1315 = vmul.f32 %v1295, 1.442695
  %v1316 = vpow.pop %v1315
  %v1317 = vmul.f32 %v1296, 1.442695
  %v1318 = vpow.pop %v1317
  %v1319 = vmul.f32 %v1297, 1.442695
  %v1320 = vpow.pop %v1319
  %v1321 = vmul.f32 %v1298, 1.442695
  %v1322 = vpow.pop %v1321
  %v1323 = vmul.f32 %v1299, 1.442695
  %v1324 = vpow.pop %v1323
  %v1325 = vmul.f32 %v1300, 1.442695
  %v1326 = vpow.pop %v1325
  %v1327 = vmul.f32 %v1301, 1.442695
  %v1328 = vpow.pop %v1327
  %v1329 = vmul.f32 %v1302, 1.442695
  %v1330 = vpow.pop %v1329
  %v1331 = vmul.f32 %v1303, 1.442695
  %v1332 = vpow.pop %v1331
  %v1333 = vmul.f32 %v1304, 1.442695
  %v1334 = vpow.pop %v1333
  %v1335 = vmul.f32 %v1305, 1.442695
  %v1336 = vpow.pop %v1335
  %v1337 = vmul.f32 %v1306, 1.442695
  %v1338 = vpow.pop %v1337
  %1340 = vset.pattern.permute.xlu0 0
  %1341 = vperm.xlu0 %1340, %v1275
  %v1342 = vpop.permute.xlu0 %1341
  %1345 = vset.pattern.permute.xlu0 0
  %1346 = vperm.xlu0 %1345, %v1276
  %v1347 = vpop.permute.xlu0 %1346
  %1350 = vset.pattern.permute.xlu0 0
  %1351 = vperm.xlu0 %1350, %v1277
  %v1352 = vpop.permute.xlu0 %1351
  %1355 = vset.pattern.permute.xlu0 0
  %1356 = vperm.xlu0 %1355, %v1278
  %v1357 = vpop.permute.xlu0 %1356
  %1360 = vset.pattern.permute.xlu0 0
  %1361 = vperm.xlu0 %1360, %v1279
  %v1362 = vpop.permute.xlu0 %1361
  %1365 = vset.pattern.permute.xlu0 0
  %1366 = vperm.xlu0 %1365, %v1280
  %v1367 = vpop.permute.xlu0 %1366
  %1370 = vset.pattern.permute.xlu0 0
  %1371 = vperm.xlu0 %1370, %v1281
  %v1372 = vpop.permute.xlu0 %1371
  %1375 = vset.pattern.permute.xlu0 0
  %1376 = vperm.xlu0 %1375, %v1282
  %v1377 = vpop.permute.xlu0 %1376
  %1380 = vset.pattern.permute.xlu0 0
  %1381 = vperm.xlu0 %1380, %v1283
  %v1382 = vpop.permute.xlu0 %1381
  %1385 = vset.pattern.permute.xlu0 0
  %1386 = vperm.xlu0 %1385, %v1284
  %v1387 = vpop.permute.xlu0 %1386
  %1390 = vset.pattern.permute.xlu0 0
  %1391 = vperm.xlu0 %1390, %v1285
  %v1392 = vpop.permute.xlu0 %1391
  %1395 = vset.pattern.permute.xlu0 0
  %1396 = vperm.xlu0 %1395, %v1286
  %v1397 = vpop.permute.xlu0 %1396
  %1400 = vset.pattern.permute.xlu0 0
  %1401 = vperm.xlu0 %1400, %v1287
  %v1402 = vpop.permute.xlu0 %1401
  %1405 = vset.pattern.permute.xlu0 0
  %1406 = vperm.xlu0 %1405, %v1288
  %v1407 = vpop.permute.xlu0 %1406
  %1410 = vset.pattern.permute.xlu0 0
  %1411 = vperm.xlu0 %1410, %v1289
  %v1412 = vpop.permute.xlu0 %1411
  %1415 = vset.pattern.permute.xlu0 0
  %1416 = vperm.xlu0 %1415, %v1290
  %v1417 = vpop.permute.xlu0 %1416
  %v1419 = vsub.f32 %v1211, %v1342
  %v1420 = vsub.f32 %v1212, %v1347
  %v1421 = vsub.f32 %v1213, %v1352
  %v1422 = vsub.f32 %v1214, %v1357
  %v1423 = vsub.f32 %v1215, %v1362
  %v1424 = vsub.f32 %v1216, %v1367
  %v1425 = vsub.f32 %v1217, %v1372
  %v1426 = vsub.f32 %v1218, %v1377
  %v1427 = vsub.f32 %v1219, %v1382
  %v1428 = vsub.f32 %v1220, %v1387
  %v1429 = vsub.f32 %v1221, %v1392
  %v1430 = vsub.f32 %v1222, %v1397
  %v1431 = vsub.f32 %v1223, %v1402
  %v1432 = vsub.f32 %v1224, %v1407
  %v1433 = vsub.f32 %v1225, %v1412
  %v1434 = vsub.f32 %v1226, %v1417
  %v1435 = vmul.f32 %v1419, 1.442695
  %v1436 = vpow.pop %v1435
  %v1437 = vmul.f32 %v1420, 1.442695
  %v1438 = vpow.pop %v1437
  %v1439 = vmul.f32 %v1421, 1.442695
  %v1440 = vpow.pop %v1439
  %v1441 = vmul.f32 %v1422, 1.442695
  %v1442 = vpow.pop %v1441
  %v1443 = vmul.f32 %v1423, 1.442695
  %v1444 = vpow.pop %v1443
  %v1445 = vmul.f32 %v1424, 1.442695
  %v1446 = vpow.pop %v1445
  %v1447 = vmul.f32 %v1425, 1.442695
  %v1448 = vpow.pop %v1447
  %v1449 = vmul.f32 %v1426, 1.442695
  %v1450 = vpow.pop %v1449
  %v1451 = vmul.f32 %v1427, 1.442695
  %v1452 = vpow.pop %v1451
  %v1453 = vmul.f32 %v1428, 1.442695
  %v1454 = vpow.pop %v1453
  %v1455 = vmul.f32 %v1429, 1.442695
  %v1456 = vpow.pop %v1455
  %v1457 = vmul.f32 %v1430, 1.442695
  %v1458 = vpow.pop %v1457
  %v1459 = vmul.f32 %v1431, 1.442695
  %v1460 = vpow.pop %v1459
  %v1461 = vmul.f32 %v1432, 1.442695
  %v1462 = vpow.pop %v1461
  %v1463 = vmul.f32 %v1433, 1.442695
  %v1464 = vpow.pop %v1463
  %v1465 = vmul.f32 %v1434, 1.442695
  %v1466 = vpow.pop %v1465
  %v1467 = vld [vmem:[#allocation6] sm:$0xff]
  %v1468 = vld [vmem:[#allocation6 + $0x8] sm:$0xff]
  %v1469 = vld [vmem:[#allocation6 + $0x10] sm:$0xff]
  %v1470 = vld [vmem:[#allocation6 + $0x18] sm:$0xff]
  %v1471 = vld [vmem:[#allocation6 + $0x20] sm:$0xff]
  %v1472 = vld [vmem:[#allocation6 + $0x28] sm:$0xff]
  %v1473 = vld [vmem:[#allocation6 + $0x30] sm:$0xff]
  %v1474 = vld [vmem:[#allocation6 + $0x38] sm:$0xff]
  %v1475 = vld [vmem:[#allocation6 + $0x40] sm:$0xff]
  %v1476 = vld [vmem:[#allocation6 + $0x48] sm:$0xff]
  %v1477 = vld [vmem:[#allocation6 + $0x50] sm:$0xff]
  %v1478 = vld [vmem:[#allocation6 + $0x58] sm:$0xff]
  %v1479 = vld [vmem:[#allocation6 + $0x60] sm:$0xff]
  %v1480 = vld [vmem:[#allocation6 + $0x68] sm:$0xff]
  %v1481 = vld [vmem:[#allocation6 + $0x70] sm:$0xff]
  %v1482 = vld [vmem:[#allocation6 + $0x78] sm:$0xff]
  %v1483 = vmul.f32 %v1308, %v1467
  %v1484 = vmul.f32 %v1310, %v1468
  %v1485 = vmul.f32 %v1312, %v1469
  %v1486 = vmul.f32 %v1314, %v1470
  %v1487 = vmul.f32 %v1316, %v1471
  %v1488 = vmul.f32 %v1318, %v1472
  %v1489 = vmul.f32 %v1320, %v1473
  %v1490 = vmul.f32 %v1322, %v1474
  %v1491 = vmul.f32 %v1324, %v1475
  %v1492 = vmul.f32 %v1326, %v1476
  %v1493 = vmul.f32 %v1328, %v1477
  %v1494 = vmul.f32 %v1330, %v1478
  %v1495 = vmul.f32 %v1332, %v1479
  %v1496 = vmul.f32 %v1334, %v1480
  %v1497 = vmul.f32 %v1336, %v1481
  %v1498 = vmul.f32 %v1338, %v1482
  %1499 = vadd.xlane.f32.xlu0 %v1436
  %v1500 = vpop.xlane.xlu0 %1499
  %1501 = vadd.xlane.f32.xlu0 %v1438
  %v1502 = vpop.xlane.xlu0 %1501
  %1503 = vadd.xlane.f32.xlu0 %v1440
  %v1504 = vpop.xlane.xlu0 %1503
  %1505 = vadd.xlane.f32.xlu0 %v1442
  %v1506 = vpop.xlane.xlu0 %1505
  %1507 = vadd.xlane.f32.xlu0 %v1444
  %v1508 = vpop.xlane.xlu0 %1507
  %1509 = vadd.xlane.f32.xlu0 %v1446
  %v1510 = vpop.xlane.xlu0 %1509
  %1511 = vadd.xlane.f32.xlu0 %v1448
  %v1512 = vpop.xlane.xlu0 %1511
  %1513 = vadd.xlane.f32.xlu0 %v1450
  %v1514 = vpop.xlane.xlu0 %1513
  %1515 = vadd.xlane.f32.xlu0 %v1452
  %v1516 = vpop.xlane.xlu0 %1515
  %1517 = vadd.xlane.f32.xlu0 %v1454
  %v1518 = vpop.xlane.xlu0 %1517
  %1519 = vadd.xlane.f32.xlu0 %v1456
  %v1520 = vpop.xlane.xlu0 %1519
  %1521 = vadd.xlane.f32.xlu0 %v1458
  %v1522 = vpop.xlane.xlu0 %1521
  %1523 = vadd.xlane.f32.xlu0 %v1460
  %v1524 = vpop.xlane.xlu0 %1523
  %1525 = vadd.xlane.f32.xlu0 %v1462
  %v1526 = vpop.xlane.xlu0 %1525
  %1527 = vadd.xlane.f32.xlu0 %v1464
  %v1528 = vpop.xlane.xlu0 %1527
  %1529 = vadd.xlane.f32.xlu0 %v1466
  %v1530 = vpop.xlane.xlu0 %1529
  %v1531 = vadd.f32 %v1483, %v1500
  %v1532 = vadd.f32 %v1484, %v1502
  %v1533 = vadd.f32 %v1485, %v1504
  %v1534 = vadd.f32 %v1486, %v1506
  %v1535 = vadd.f32 %v1487, %v1508
  %v1536 = vadd.f32 %v1488, %v1510
  %v1537 = vadd.f32 %v1489, %v1512
  %v1538 = vadd.f32 %v1490, %v1514
  %v1539 = vadd.f32 %v1491, %v1516
  %v1540 = vadd.f32 %v1492, %v1518
  %v1541 = vadd.f32 %v1493, %v1520
  %v1542 = vadd.f32 %v1494, %v1522
  %v1543 = vadd.f32 %v1495, %v1524
  %v1544 = vadd.f32 %v1496, %v1526
  %v1545 = vadd.f32 %v1497, %v1528
  %v1546 = vadd.f32 %v1498, %v1530
  %1547 = vst.msk [vmem:[#allocation6] sm:$0xff] %vm765, %v1531
  %1548 = vst.msk [vmem:[#allocation6 + $0x8] sm:$0xff] %vm765, %v1532
  %1549 = vst.msk [vmem:[#allocation6 + $0x10] sm:$0xff] %vm765, %v1533
  %1550 = vst.msk [vmem:[#allocation6 + $0x18] sm:$0xff] %vm765, %v1534
  %1551 = vst.msk [vmem:[#allocation6 + $0x20] sm:$0xff] %vm765, %v1535
  %1552 = vst.msk [vmem:[#allocation6 + $0x28] sm:$0xff] %vm765, %v1536
  %1553 = vst.msk [vmem:[#allocation6 + $0x30] sm:$0xff] %vm765, %v1537
  %1554 = vst.msk [vmem:[#allocation6 + $0x38] sm:$0xff] %vm765, %v1538
  %1555 = vst.msk [vmem:[#allocation6 + $0x40] sm:$0xff] %vm765, %v1539
  %1556 = vst.msk [vmem:[#allocation6 + $0x48] sm:$0xff] %vm765, %v1540
  %1557 = vst.msk [vmem:[#allocation6 + $0x50] sm:$0xff] %vm765, %v1541
  %1558 = vst.msk [vmem:[#allocation6 + $0x58] sm:$0xff] %vm765, %v1542
  %1559 = vst.msk [vmem:[#allocation6 + $0x60] sm:$0xff] %vm765, %v1543
  %1560 = vst.msk [vmem:[#allocation6 + $0x68] sm:$0xff] %vm765, %v1544
  %1561 = vst.msk [vmem:[#allocation6 + $0x70] sm:$0xff] %vm765, %v1545
  %1562 = vst.msk [vmem:[#allocation6 + $0x78] sm:$0xff] %vm765, %v1546
  %v1563 = vld [vmem:[#allocation7] sm:$0xff]
  %v1564 = vld [vmem:[#allocation7 + $0x8] sm:$0xff]
  %v1565 = vld [vmem:[#allocation7 + $0x10] sm:$0xff]
  %v1566 = vld [vmem:[#allocation7 + $0x18] sm:$0xff]
  %v1567 = vld [vmem:[#allocation7 + $0x20] sm:$0xff]
  %v1568 = vld [vmem:[#allocation7 + $0x28] sm:$0xff]
  %v1569 = vld [vmem:[#allocation7 + $0x30] sm:$0xff]
  %v1570 = vld [vmem:[#allocation7 + $0x38] sm:$0xff]
  %v1571 = vld [vmem:[#allocation7 + $0x40] sm:$0xff]
  %v1572 = vld [vmem:[#allocation7 + $0x48] sm:$0xff]
  %v1573 = vld [vmem:[#allocation7 + $0x50] sm:$0xff]
  %v1574 = vld [vmem:[#allocation7 + $0x58] sm:$0xff]
  %v1575 = vld [vmem:[#allocation7 + $0x60] sm:$0xff]
  %v1576 = vld [vmem:[#allocation7 + $0x68] sm:$0xff]
  %v1577 = vld [vmem:[#allocation7 + $0x70] sm:$0xff]
  %v1578 = vld [vmem:[#allocation7 + $0x78] sm:$0xff]
  %1580 = vset.pattern.permute.xlu0 0
  %1581 = vperm.xlu0 %1580, %v1308
  %v1582 = vpop.permute.xlu0 %1581
  %1585 = vset.pattern.permute.xlu0 0
  %1586 = vperm.xlu0 %1585, %v1310
  %v1587 = vpop.permute.xlu0 %1586
  %1590 = vset.pattern.permute.xlu0 0
  %1591 = vperm.xlu0 %1590, %v1312
  %v1592 = vpop.permute.xlu0 %1591
  %1595 = vset.pattern.permute.xlu0 0
  %1596 = vperm.xlu0 %1595, %v1314
  %v1597 = vpop.permute.xlu0 %1596
  %1600 = vset.pattern.permute.xlu0 0
  %1601 = vperm.xlu0 %1600, %v1316
  %v1602 = vpop.permute.xlu0 %1601
  %1605 = vset.pattern.permute.xlu0 0
  %1606 = vperm.xlu0 %1605, %v1318
  %v1607 = vpop.permute.xlu0 %1606
  %1610 = vset.pattern.permute.xlu0 0
  %1611 = vperm.xlu0 %1610, %v1320
  %v1612 = vpop.permute.xlu0 %1611
  %1615 = vset.pattern.permute.xlu0 0
  %1616 = vperm.xlu0 %1615, %v1322
  %v1617 = vpop.permute.xlu0 %1616
  %1620 = vset.pattern.permute.xlu0 0
  %1621 = vperm.xlu0 %1620, %v1324
  %v1622 = vpop.permute.xlu0 %1621
  %1625 = vset.pattern.permute.xlu0 0
  %1626 = vperm.xlu0 %1625, %v1326
  %v1627 = vpop.permute.xlu0 %1626
  %1630 = vset.pattern.permute.xlu0 0
  %1631 = vperm.xlu0 %1630, %v1328
  %v1632 = vpop.permute.xlu0 %1631
  %1635 = vset.pattern.permute.xlu0 0
  %1636 = vperm.xlu0 %1635, %v1330
  %v1637 = vpop.permute.xlu0 %1636
  %1640 = vset.pattern.permute.xlu0 0
  %1641 = vperm.xlu0 %1640, %v1332
  %v1642 = vpop.permute.xlu0 %1641
  %1645 = vset.pattern.permute.xlu0 0
  %1646 = vperm.xlu0 %1645, %v1334
  %v1647 = vpop.permute.xlu0 %1646
  %1650 = vset.pattern.permute.xlu0 0
  %1651 = vperm.xlu0 %1650, %v1336
  %v1652 = vpop.permute.xlu0 %1651
  %1655 = vset.pattern.permute.xlu0 0
  %1656 = vperm.xlu0 %1655, %v1338
  %v1657 = vpop.permute.xlu0 %1656
  %v1659 = vmul.f32 %v1582, %v1563
  %v1660 = vmul.f32 %v1587, %v1564
  %v1661 = vmul.f32 %v1592, %v1565
  %v1662 = vmul.f32 %v1597, %v1566
  %v1663 = vmul.f32 %v1602, %v1567
  %v1664 = vmul.f32 %v1607, %v1568
  %v1665 = vmul.f32 %v1612, %v1569
  %v1666 = vmul.f32 %v1617, %v1570
  %v1667 = vmul.f32 %v1622, %v1571
  %v1668 = vmul.f32 %v1627, %v1572
  %v1669 = vmul.f32 %v1632, %v1573
  %v1670 = vmul.f32 %v1637, %v1574
  %v1671 = vmul.f32 %v1642, %v1575
  %v1672 = vmul.f32 %v1647, %v1576
  %v1673 = vmul.f32 %v1652, %v1577
  %v1674 = vmul.f32 %v1657, %v1578
  %v1675 = vpack.c.bf16 %v1438, %v1436
  %v1676 = vpack.c.bf16 %v1442, %v1440
  %v1677 = vpack.c.bf16 %v1446, %v1444
  %v1678 = vpack.c.bf16 %v1450, %v1448
  %v1679 = vpack.c.bf16 %v1454, %v1452
  %v1680 = vpack.c.bf16 %v1458, %v1456
  %v1681 = vpack.c.bf16 %v1462, %v1460
  %v1682 = vpack.c.bf16 %v1466, %v1464
  %1683 = vmatprep.subr.bf16.mxu0 0
  %1684 = vmatpush1.bf16.msra.mxu0 %v934
  %1685 = vmatprep.subr.bf16.mxu0 0
  %1686 = vmatpush1.bf16.msra.mxu0 %v935
  %1687 = vmatprep.subr.bf16.mxu0 0
  %1688 = vmatpush1.bf16.msra.mxu0 %v936
  %1689 = vmatprep.subr.bf16.mxu0 0
  %1690 = vmatpush1.bf16.msra.mxu0 %v937
  %1691 = vmatprep.subr.bf16.mxu0 0
  %1692 = vmatpush1.bf16.msra.mxu0 %v938
  %1693 = vmatprep.subr.bf16.mxu0 0
  %1694 = vmatpush1.bf16.msra.mxu0 %v939
  %1695 = vmatprep.subr.bf16.mxu0 0
  %1696 = vmatpush1.bf16.msra.mxu0 %v940
  %1697 = vmatprep.subr.bf16.mxu0 0
  %1698 = vmatpush1.bf16.msra.mxu0 %v941
  %1699 = vmatprep.subr.bf16.mxu0 0
  %1700 = vmatpush1.bf16.msra.mxu0 0
  %1701 = vmatprep.subr.bf16.mxu0 0
  %1702 = vmatpush1.bf16.msra.mxu0 0
  %1703 = vmatprep.subr.bf16.mxu0 0
  %1704 = vmatpush1.bf16.msra.mxu0 0
  %1705 = vmatprep.subr.bf16.mxu0 0
  %1706 = vmatpush1.bf16.msra.mxu0 0
  %1707 = vmatprep.subr.bf16.mxu0 0
  %1708 = vmatpush1.bf16.msra.mxu0 0
  %1709 = vmatprep.subr.bf16.mxu0 0
  %1710 = vmatpush1.bf16.msra.mxu0 0
  %1711 = vmatprep.subr.bf16.mxu0 0
  %1712 = vmatpush1.bf16.msra.mxu0 0
  %1713 = vmatprep.subr.bf16.mxu0 0
  %1714 = vmatpush1.bf16.msra.mxu0 0
  %1715 = vmatprep.mubr.bf16.mxu0 0
  %1716 = vmatmul.mubr.bf16.gmra.mrb[0].mxu0 %v1675
  %v1717 = vpop.f32.mrb[0].mxu0
  %v1718 = vadd.f32 0.0, %v1717
  %v1719 = vpop.f32.mrb[0].mxu0
  %v1720 = vpop.f32.mrb[0].mxu0
  %v1721 = vadd.f32 0.0, %v1720
  %v1722 = vpop.f32.mrb[0].mxu0
  %1723 = vmatprep.mubr.bf16.mxu0 0
  %1724 = vmatmul.mubr.bf16.gmra.mrb[0].mxu0 %v1676
  %v1725 = vpop.f32.mrb[0].mxu0
  %v1726 = vadd.f32 0.0, %v1725
  %v1727 = vpop.f32.mrb[0].mxu0
  %v1728 = vpop.f32.mrb[0].mxu0
  %v1729 = vadd.f32 0.0, %v1728
  %v1730 = vpop.f32.mrb[0].mxu0
  %1731 = vmatprep.mubr.bf16.mxu0 0
  %1732 = vmatmul.mubr.bf16.gmra.mrb[0].mxu0 %v1677
  %v1733 = vpop.f32.mrb[0].mxu0
  %v1734 = vadd.f32 0.0, %v1733
  %v1735 = vpop.f32.mrb[0].mxu0
  %v1736 = vpop.f32.mrb[0].mxu0
  %v1737 = vadd.f32 0.0, %v1736
  %v1738 = vpop.f32.mrb[0].mxu0
  %1739 = vmatprep.mubr.bf16.mxu0 0
  %1740 = vmatmul.mubr.bf16.gmra.mrb[0].mxu0 %v1678
  %v1741 = vpop.f32.mrb[0].mxu0
  %v1742 = vadd.f32 0.0, %v1741
  %v1743 = vpop.f32.mrb[0].mxu0
  %v1744 = vpop.f32.mrb[0].mxu0
  %v1745 = vadd.f32 0.0, %v1744
  %v1746 = vpop.f32.mrb[0].mxu0
  %1747 = vmatprep.mubr.bf16.mxu0 0
  %1748 = vmatmul.mubr.bf16.gmra.mrb[0].mxu0 %v1679
  %v1749 = vpop.f32.mrb[0].mxu0
  %v1750 = vadd.f32 0.0, %v1749
  %v1751 = vpop.f32.mrb[0].mxu0
  %v1752 = vpop.f32.mrb[0].mxu0
  %v1753 = vadd.f32 0.0, %v1752
  %v1754 = vpop.f32.mrb[0].mxu0
  %1755 = vmatprep.mubr.bf16.mxu0 0
  %1756 = vmatmul.mubr.bf16.gmra.mrb[0].mxu0 %v1680
  %v1757 = vpop.f32.mrb[0].mxu0
  %v1758 = vadd.f32 0.0, %v1757
  %v1759 = vpop.f32.mrb[0].mxu0
  %v1760 = vpop.f32.mrb[0].mxu0
  %v1761 = vadd.f32 0.0, %v1760
  %v1762 = vpop.f32.mrb[0].mxu0
  %1763 = vmatprep.mubr.bf16.mxu0 0
  %1764 = vmatmul.mubr.bf16.gmra.mrb[0].mxu0 %v1681
  %v1765 = vpop.f32.mrb[0].mxu0
  %v1766 = vadd.f32 0.0, %v1765
  %v1767 = vpop.f32.mrb[0].mxu0
  %v1768 = vpop.f32.mrb[0].mxu0
  %v1769 = vadd.f32 0.0, %v1768
  %v1770 = vpop.f32.mrb[0].mxu0
  %1771 = vmatprep.mubr.bf16.mxu0 0
  %1772 = vmatmul.mubr.bf16.gmra.mrb[0].mxu0 %v1682
  %v1773 = vpop.f32.mrb[0].mxu0
  %v1774 = vadd.f32 0.0, %v1773
  %v1775 = vpop.f32.mrb[0].mxu0
  %v1776 = vpop.f32.mrb[0].mxu0
  %v1777 = vadd.f32 0.0, %v1776
  %v1778 = vpop.f32.mrb[0].mxu0
  %1779 = vdwg.mxu0
  %v1780 = vadd.f32 %v1659, %v1718
  %v1781 = vadd.f32 %v1660, %v1721
  %v1782 = vadd.f32 %v1661, %v1726
  %v1783 = vadd.f32 %v1662, %v1729
  %v1784 = vadd.f32 %v1663, %v1734
  %v1785 = vadd.f32 %v1664, %v1737
  %v1786 = vadd.f32 %v1665, %v1742
  %v1787 = vadd.f32 %v1666, %v1745
  %v1788 = vadd.f32 %v1667, %v1750
  %v1789 = vadd.f32 %v1668, %v1753
  %v1790 = vadd.f32 %v1669, %v1758
  %v1791 = vadd.f32 %v1670, %v1761
  %v1792 = vadd.f32 %v1671, %v1766
  %v1793 = vadd.f32 %v1672, %v1769
  %v1794 = vadd.f32 %v1673, %v1774
  %v1795 = vadd.f32 %v1674, %v1777
  %1796 = vst [vmem:[#allocation7] sm:$0xff] %v1780
  %1797 = vst [vmem:[#allocation7 + $0x8] sm:$0xff] %v1781
  %1798 = vst [vmem:[#allocation7 + $0x10] sm:$0xff] %v1782
  %1799 = vst [vmem:[#allocation7 + $0x18] sm:$0xff] %v1783
  %1800 = vst [vmem:[#allocation7 + $0x20] sm:$0xff] %v1784
  %1801 = vst [vmem:[#allocation7 + $0x28] sm:$0xff] %v1785
  %1802 = vst [vmem:[#allocation7 + $0x30] sm:$0xff] %v1786
  %1803 = vst [vmem:[#allocation7 + $0x38] sm:$0xff] %v1787
  %1804 = vst [vmem:[#allocation7 + $0x40] sm:$0xff] %v1788
  %1805 = vst [vmem:[#allocation7 + $0x48] sm:$0xff] %v1789
  %1806 = vst [vmem:[#allocation7 + $0x50] sm:$0xff] %v1790
  %1807 = vst [vmem:[#allocation7 + $0x58] sm:$0xff] %v1791
  %1808 = vst [vmem:[#allocation7 + $0x60] sm:$0xff] %v1792
  %1809 = vst [vmem:[#allocation7 + $0x68] sm:$0xff] %v1793
  %1810 = vst [vmem:[#allocation7 + $0x70] sm:$0xff] %v1794
  %1811 = vst [vmem:[#allocation7 + $0x78] sm:$0xff] %v1795
  %1812 = vst.msk [vmem:[#allocation5] sm:$0xff] %vm765, %v1275
  %1813 = vst.msk [vmem:[#allocation5 + $0x8] sm:$0xff] %vm765, %v1276
  %1814 = vst.msk [vmem:[#allocation5 + $0x10] sm:$0xff] %vm765, %v1277
  %1815 = vst.msk [vmem:[#allocation5 + $0x18] sm:$0xff] %vm765, %v1278
  %1816 = vst.msk [vmem:[#allocation5 + $0x20] sm:$0xff] %vm765, %v1279
  %1817 = vst.msk [vmem:[#allocation5 + $0x28] sm:$0xff] %vm765, %v1280
  %1818 = vst.msk [vmem:[#allocation5 + $0x30] sm:$0xff] %vm765, %v1281
  %1819 = vst.msk [vmem:[#allocation5 + $0x38] sm:$0xff] %vm765, %v1282
  %1820 = vst.msk [vmem:[#allocation5 + $0x40] sm:$0xff] %vm765, %v1283
  %1821 = vst.msk [vmem:[#allocation5 + $0x48] sm:$0xff] %vm765, %v1284
  %1822 = vst.msk [vmem:[#allocation5 + $0x50] sm:$0xff] %vm765, %v1285
  %1823 = vst.msk [vmem:[#allocation5 + $0x58] sm:$0xff] %vm765, %v1286
  %1824 = vst.msk [vmem:[#allocation5 + $0x60] sm:$0xff] %vm765, %v1287
  %1825 = vst.msk [vmem:[#allocation5 + $0x68] sm:$0xff] %vm765, %v1288
  %1826 = vst.msk [vmem:[#allocation5 + $0x70] sm:$0xff] %vm765, %v1289
  %1827 = vst.msk [vmem:[#allocation5 + $0x78] sm:$0xff] %vm765, %v1290
  // Predicated region
  $region46: #{_gat_encoder_core.3} parent=0 // pred_check
    %p1828 = pneg %p38
  $region47: #{_gat_encoder_core.3} parent=0 // pred_check_branch
    %1830 = sbr.rel (%p1828) target = $region49
  $region48: #{_gat_encoder_core.3} parent=0 // pred_region
    %v1831 = vld [vmem:[#allocation4] sm:$0xff]
    %v1832 = vld [vmem:[#allocation4 + $0x8] sm:$0xff]
    %v1833 = vld [vmem:[#allocation4 + $0x10] sm:$0xff]
    %v1834 = vld [vmem:[#allocation4 + $0x18] sm:$0xff]
    %v1835 = vld [vmem:[#allocation4 + $0x20] sm:$0xff]
    %v1836 = vld [vmem:[#allocation4 + $0x28] sm:$0xff]
    %v1837 = vld [vmem:[#allocation4 + $0x30] sm:$0xff]
    %v1838 = vld [vmem:[#allocation4 + $0x38] sm:$0xff]
    %v1839 = vld [vmem:[#allocation4 + $0x40] sm:$0xff]
    %v1840 = vld [vmem:[#allocation4 + $0x48] sm:$0xff]
    %v1841 = vld [vmem:[#allocation4 + $0x50] sm:$0xff]
    %v1842 = vld [vmem:[#allocation4 + $0x58] sm:$0xff]
    %v1843 = vld [vmem:[#allocation4 + $0x60] sm:$0xff]
    %v1844 = vld [vmem:[#allocation4 + $0x68] sm:$0xff]
    %v1845 = vld [vmem:[#allocation4 + $0x70] sm:$0xff]
    %v1846 = vld [vmem:[#allocation4 + $0x78] sm:$0xff]
    %v1847 = vld [vmem:[#allocation3] sm:$0xff]
    %v1848 = vld [vmem:[#allocation3 + $0x8] sm:$0xff]
    %v1849 = vld [vmem:[#allocation3 + $0x10] sm:$0xff]
    %v1850 = vld [vmem:[#allocation3 + $0x18] sm:$0xff]
    %v1851 = vld [vmem:[#allocation3 + $0x20] sm:$0xff]
    %v1852 = vld [vmem:[#allocation3 + $0x28] sm:$0xff]
    %v1853 = vld [vmem:[#allocation3 + $0x30] sm:$0xff]
    %v1854 = vld [vmem:[#allocation3 + $0x38] sm:$0xff]
    %v1855 = vld [vmem:[#allocation3 + $0x40] sm:$0xff]
    %v1856 = vld [vmem:[#allocation3 + $0x48] sm:$0xff]
    %v1857 = vld [vmem:[#allocation3 + $0x50] sm:$0xff]
    %v1858 = vld [vmem:[#allocation3 + $0x58] sm:$0xff]
    %v1859 = vld [vmem:[#allocation3 + $0x60] sm:$0xff]
    %v1860 = vld [vmem:[#allocation3 + $0x68] sm:$0xff]
    %v1861 = vld [vmem:[#allocation3 + $0x70] sm:$0xff]
    %v1862 = vld [vmem:[#allocation3 + $0x78] sm:$0xff]
    %1864 = vset.pattern.permute.xlu0 0
    %1865 = vperm.xlu0 %1864, %v1847
    %v1866 = vpop.permute.xlu0 %1865
    %1869 = vset.pattern.permute.xlu0 0
    %1870 = vperm.xlu0 %1869, %v1848
    %v1871 = vpop.permute.xlu0 %1870
    %1874 = vset.pattern.permute.xlu0 0
    %1875 = vperm.xlu0 %1874, %v1849
    %v1876 = vpop.permute.xlu0 %1875
    %1879 = vset.pattern.permute.xlu0 0
    %1880 = vperm.xlu0 %1879, %v1850
    %v1881 = vpop.permute.xlu0 %1880
    %1884 = vset.pattern.permute.xlu0 0
    %1885 = vperm.xlu0 %1884, %v1851
    %v1886 = vpop.permute.xlu0 %1885
    %1889 = vset.pattern.permute.xlu0 0
    %1890 = vperm.xlu0 %1889, %v1852
    %v1891 = vpop.permute.xlu0 %1890
    %1894 = vset.pattern.permute.xlu0 0
    %1895 = vperm.xlu0 %1894, %v1853
    %v1896 = vpop.permute.xlu0 %1895
    %1899 = vset.pattern.permute.xlu0 0
    %1900 = vperm.xlu0 %1899, %v1854
    %v1901 = vpop.permute.xlu0 %1900
    %1904 = vset.pattern.permute.xlu0 0
    %1905 = vperm.xlu0 %1904, %v1855
    %v1906 = vpop.permute.xlu0 %1905
    %1909 = vset.pattern.permute.xlu0 0
    %1910 = vperm.xlu0 %1909, %v1856
    %v1911 = vpop.permute.xlu0 %1910
    %1914 = vset.pattern.permute.xlu0 0
    %1915 = vperm.xlu0 %1914, %v1857
    %v1916 = vpop.permute.xlu0 %1915
    %1919 = vset.pattern.permute.xlu0 0
    %1920 = vperm.xlu0 %1919, %v1858
    %v1921 = vpop.permute.xlu0 %1920
    %1924 = vset.pattern.permute.xlu0 0
    %1925 = vperm.xlu0 %1924, %v1859
    %v1926 = vpop.permute.xlu0 %1925
    %1929 = vset.pattern.permute.xlu0 0
    %1930 = vperm.xlu0 %1929, %v1860
    %v1931 = vpop.permute.xlu0 %1930
    %1934 = vset.pattern.permute.xlu0 0
    %1935 = vperm.xlu0 %1934, %v1861
    %v1936 = vpop.permute.xlu0 %1935
    %1939 = vset.pattern.permute.xlu0 0
    %1940 = vperm.xlu0 %1939, %v1862
    %v1941 = vpop.permute.xlu0 %1940
    %v1943 = vrcp.pop %v1866
    %v1944 = vmul.f32 %v1831, %v1943
    %v1945 = vrcp.pop %v1871
    %v1946 = vmul.f32 %v1832, %v1945
    %v1947 = vrcp.pop %v1876
    %v1948 = vmul.f32 %v1833, %v1947
    %v1949 = vrcp.pop %v1881
    %v1950 = vmul.f32 %v1834, %v1949
    %v1951 = vrcp.pop %v1886
    %v1952 = vmul.f32 %v1835, %v1951
    %v1953 = vrcp.pop %v1891
    %v1954 = vmul.f32 %v1836, %v1953
    %v1955 = vrcp.pop %v1896
    %v1956 = vmul.f32 %v1837, %v1955
    %v1957 = vrcp.pop %v1901
    %v1958 = vmul.f32 %v1838, %v1957
    %v1959 = vrcp.pop %v1906
    %v1960 = vmul.f32 %v1839, %v1959
    %v1961 = vrcp.pop %v1911
    %v1962 = vmul.f32 %v1840, %v1961
    %v1963 = vrcp.pop %v1916
    %v1964 = vmul.f32 %v1841, %v1963
    %v1965 = vrcp.pop %v1921
    %v1966 = vmul.f32 %v1842, %v1965
    %v1967 = vrcp.pop %v1926
    %v1968 = vmul.f32 %v1843, %v1967
    %v1969 = vrcp.pop %v1931
    %v1970 = vmul.f32 %v1844, %v1969
    %v1971 = vrcp.pop %v1936
    %v1972 = vmul.f32 %v1845, %v1971
    %v1973 = vrcp.pop %v1941
    %v1974 = vmul.f32 %v1846, %v1973
    %v1975 = vld [vmem:[#allocation7] sm:$0xff]
    %v1976 = vld [vmem:[#allocation7 + $0x8] sm:$0xff]
    %v1977 = vld [vmem:[#allocation7 + $0x10] sm:$0xff]
    %v1978 = vld [vmem:[#allocation7 + $0x18] sm:$0xff]
    %v1979 = vld [vmem:[#allocation7 + $0x20] sm:$0xff]
    %v1980 = vld [vmem:[#allocation7 + $0x28] sm:$0xff]
    %v1981 = vld [vmem:[#allocation7 + $0x30] sm:$0xff]
    %v1982 = vld [vmem:[#allocation7 + $0x38] sm:$0xff]
    %v1983 = vld [vmem:[#allocation7 + $0x40] sm:$0xff]
    %v1984 = vld [vmem:[#allocation7 + $0x48] sm:$0xff]
    %v1985 = vld [vmem:[#allocation7 + $0x50] sm:$0xff]
    %v1986 = vld [vmem:[#allocation7 + $0x58] sm:$0xff]
    %v1987 = vld [vmem:[#allocation7 + $0x60] sm:$0xff]
    %v1988 = vld [vmem:[#allocation7 + $0x68] sm:$0xff]
    %v1989 = vld [vmem:[#allocation7 + $0x70] sm:$0xff]
    %v1990 = vld [vmem:[#allocation7 + $0x78] sm:$0xff]
    %v1991 = vld [vmem:[#allocation6] sm:$0xff]
    %v1992 = vld [vmem:[#allocation6 + $0x8] sm:$0xff]
    %v1993 = vld [vmem:[#allocation6 + $0x10] sm:$0xff]
    %v1994 = vld [vmem:[#allocation6 + $0x18] sm:$0xff]
    %v1995 = vld [vmem:[#allocation6 + $0x20] sm:$0xff]
    %v1996 = vld [vmem:[#allocation6 + $0x28] sm:$0xff]
    %v1997 = vld [vmem:[#allocation6 + $0x30] sm:$0xff]
    %v1998 = vld [vmem:[#allocation6 + $0x38] sm:$0xff]
    %v1999 = vld [vmem:[#allocation6 + $0x40] sm:$0xff]
    %v2000 = vld [vmem:[#allocation6 + $0x48] sm:$0xff]
    %v2001 = vld [vmem:[#allocation6 + $0x50] sm:$0xff]
    %v2002 = vld [vmem:[#allocation6 + $0x58] sm:$0xff]
    %v2003 = vld [vmem:[#allocation6 + $0x60] sm:$0xff]
    %v2004 = vld [vmem:[#allocation6 + $0x68] sm:$0xff]
    %v2005 = vld [vmem:[#allocation6 + $0x70] sm:$0xff]
    %v2006 = vld [vmem:[#allocation6 + $0x78] sm:$0xff]
    %2008 = vset.pattern.permute.xlu0 0
    %2009 = vperm.xlu0 %2008, %v1991
    %v2010 = vpop.permute.xlu0 %2009
    %2013 = vset.pattern.permute.xlu0 0
    %2014 = vperm.xlu0 %2013, %v1992
    %v2015 = vpop.permute.xlu0 %2014
    %2018 = vset.pattern.permute.xlu0 0
    %2019 = vperm.xlu0 %2018, %v1993
    %v2020 = vpop.permute.xlu0 %2019
    %2023 = vset.pattern.permute.xlu0 0
    %2024 = vperm.xlu0 %2023, %v1994
    %v2025 = vpop.permute.xlu0 %2024
    %2028 = vset.pattern.permute.xlu0 0
    %2029 = vperm.xlu0 %2028, %v1995
    %v2030 = vpop.permute.xlu0 %2029
    %2033 = vset.pattern.permute.xlu0 0
    %2034 = vperm.xlu0 %2033, %v1996
    %v2035 = vpop.permute.xlu0 %2034
    %2038 = vset.pattern.permute.xlu0 0
    %2039 = vperm.xlu0 %2038, %v1997
    %v2040 = vpop.permute.xlu0 %2039
    %2043 = vset.pattern.permute.xlu0 0
    %2044 = vperm.xlu0 %2043, %v1998
    %v2045 = vpop.permute.xlu0 %2044
    %2048 = vset.pattern.permute.xlu0 0
    %2049 = vperm.xlu0 %2048, %v1999
    %v2050 = vpop.permute.xlu0 %2049
    %2053 = vset.pattern.permute.xlu0 0
    %2054 = vperm.xlu0 %2053, %v2000
    %v2055 = vpop.permute.xlu0 %2054
    %2058 = vset.pattern.permute.xlu0 0
    %2059 = vperm.xlu0 %2058, %v2001
    %v2060 = vpop.permute.xlu0 %2059
    %2063 = vset.pattern.permute.xlu0 0
    %2064 = vperm.xlu0 %2063, %v2002
    %v2065 = vpop.permute.xlu0 %2064
    %2068 = vset.pattern.permute.xlu0 0
    %2069 = vperm.xlu0 %2068, %v2003
    %v2070 = vpop.permute.xlu0 %2069
    %2073 = vset.pattern.permute.xlu0 0
    %2074 = vperm.xlu0 %2073, %v2004
    %v2075 = vpop.permute.xlu0 %2074
    %2078 = vset.pattern.permute.xlu0 0
    %2079 = vperm.xlu0 %2078, %v2005
    %v2080 = vpop.permute.xlu0 %2079
    %2083 = vset.pattern.permute.xlu0 0
    %2084 = vperm.xlu0 %2083, %v2006
    %v2085 = vpop.permute.xlu0 %2084
    %v2087 = vrcp.pop %v2010
    %v2088 = vmul.f32 %v1975, %v2087
    %v2089 = vrcp.pop %v2015
    %v2090 = vmul.f32 %v1976, %v2089
    %v2091 = vrcp.pop %v2020
    %v2092 = vmul.f32 %v1977, %v2091
    %v2093 = vrcp.pop %v2025
    %v2094 = vmul.f32 %v1978, %v2093
    %v2095 = vrcp.pop %v2030
    %v2096 = vmul.f32 %v1979, %v2095
    %v2097 = vrcp.pop %v2035
    %v2098 = vmul.f32 %v1980, %v2097
    %v2099 = vrcp.pop %v2040
    %v2100 = vmul.f32 %v1981, %v2099
    %v2101 = vrcp.pop %v2045
    %v2102 = vmul.f32 %v1982, %v2101
    %v2103 = vrcp.pop %v2050
    %v2104 = vmul.f32 %v1983, %v2103
    %v2105 = vrcp.pop %v2055
    %v2106 = vmul.f32 %v1984, %v2105
    %v2107 = vrcp.pop %v2060
    %v2108 = vmul.f32 %v1985, %v2107
    %v2109 = vrcp.pop %v2065
    %v2110 = vmul.f32 %v1986, %v2109
    %v2111 = vrcp.pop %v2070
    %v2112 = vmul.f32 %v1987, %v2111
    %v2113 = vrcp.pop %v2075
    %v2114 = vmul.f32 %v1988, %v2113
    %v2115 = vrcp.pop %v2080
    %v2116 = vmul.f32 %v1989, %v2115
    %v2117 = vrcp.pop %v2085
    %v2118 = vmul.f32 %v1990, %v2117
    %vm2119 = vcmp.gt.f32.partialorder %v1944, 0.0
    %vm2120 = vcmp.gt.f32.partialorder %v1946, 0.0
    %vm2121 = vcmp.gt.f32.partialorder %v1948, 0.0
    %vm2122 = vcmp.gt.f32.partialorder %v1950, 0.0
    %vm2123 = vcmp.gt.f32.partialorder %v1952, 0.0
    %vm2124 = vcmp.gt.f32.partialorder %v1954, 0.0
    %vm2125 = vcmp.gt.f32.partialorder %v1956, 0.0
    %vm2126 = vcmp.gt.f32.partialorder %v1958, 0.0
    %vm2127 = vcmp.gt.f32.partialorder %v1960, 0.0
    %vm2128 = vcmp.gt.f32.partialorder %v1962, 0.0
    %vm2129 = vcmp.gt.f32.partialorder %v1964, 0.0
    %vm2130 = vcmp.gt.f32.partialorder %v1966, 0.0
    %vm2131 = vcmp.gt.f32.partialorder %v1968, 0.0
    %vm2132 = vcmp.gt.f32.partialorder %v1970, 0.0
    %vm2133 = vcmp.gt.f32.partialorder %v1972, 0.0
    %vm2134 = vcmp.gt.f32.partialorder %v1974, 0.0
    %v2135 = vmin.f32 %v1944, 0.0
    %v2136 = vmin.f32 %v1946, 0.0
    %v2137 = vmin.f32 %v1948, 0.0
    %v2138 = vmin.f32 %v1950, 0.0
    %v2139 = vmin.f32 %v1952, 0.0
    %v2140 = vmin.f32 %v1954, 0.0
    %v2141 = vmin.f32 %v1956, 0.0
    %v2142 = vmin.f32 %v1958, 0.0
    %v2143 = vmin.f32 %v1960, 0.0
    %v2144 = vmin.f32 %v1962, 0.0
    %v2145 = vmin.f32 %v1964, 0.0
    %v2146 = vmin.f32 %v1966, 0.0
    %v2147 = vmin.f32 %v1968, 0.0
    %v2148 = vmin.f32 %v1970, 0.0
    %v2149 = vmin.f32 %v1972, 0.0
    %v2150 = vmin.f32 %v1974, 0.0
    %v2151 = vmul.f32 %v2135, 1.442695
    %v2152 = vpow.pop %v2151
    %v2153 = vmul.f32 %v2136, 1.442695
    %v2154 = vpow.pop %v2153
    %v2155 = vmul.f32 %v2137, 1.442695
    %v2156 = vpow.pop %v2155
    %v2157 = vmul.f32 %v2138, 1.442695
    %v2158 = vpow.pop %v2157
    %v2159 = vmul.f32 %v2139, 1.442695
    %v2160 = vpow.pop %v2159
    %v2161 = vmul.f32 %v2140, 1.442695
    %v2162 = vpow.pop %v2161
    %v2163 = vmul.f32 %v2141, 1.442695
    %v2164 = vpow.pop %v2163
    %v2165 = vmul.f32 %v2142, 1.442695
    %v2166 = vpow.pop %v2165
    %v2167 = vmul.f32 %v2143, 1.442695
    %v2168 = vpow.pop %v2167
    %v2169 = vmul.f32 %v2144, 1.442695
    %v2170 = vpow.pop %v2169
    %v2171 = vmul.f32 %v2145, 1.442695
    %v2172 = vpow.pop %v2171
    %v2173 = vmul.f32 %v2146, 1.442695
    %v2174 = vpow.pop %v2173
    %v2175 = vmul.f32 %v2147, 1.442695
    %v2176 = vpow.pop %v2175
    %v2177 = vmul.f32 %v2148, 1.442695
    %v2178 = vpow.pop %v2177
    %v2179 = vmul.f32 %v2149, 1.442695
    %v2180 = vpow.pop %v2179
    %v2181 = vmul.f32 %v2150, 1.442695
    %v2182 = vpow.pop %v2181
    %v2183 = vsub.f32 %v2152, 1.0
    %v2184 = vsub.f32 %v2154, 1.0
    %v2185 = vsub.f32 %v2156, 1.0
    %v2186 = vsub.f32 %v2158, 1.0
    %v2187 = vsub.f32 %v2160, 1.0
    %v2188 = vsub.f32 %v2162, 1.0
    %v2189 = vsub.f32 %v2164, 1.0
    %v2190 = vsub.f32 %v2166, 1.0
    %v2191 = vsub.f32 %v2168, 1.0
    %v2192 = vsub.f32 %v2170, 1.0
    %v2193 = vsub.f32 %v2172, 1.0
    %v2194 = vsub.f32 %v2174, 1.0
    %v2195 = vsub.f32 %v2176, 1.0
    %v2196 = vsub.f32 %v2178, 1.0
    %v2197 = vsub.f32 %v2180, 1.0
    %v2198 = vsub.f32 %v2182, 1.0
    %v2199 = vsel %vm2119, %v1944, %v2183
    %v2200 = vsel %vm2120, %v1946, %v2184
    %v2201 = vsel %vm2121, %v1948, %v2185
    %v2202 = vsel %vm2122, %v1950, %v2186
    %v2203 = vsel %vm2123, %v1952, %v2187
    %v2204 = vsel %vm2124, %v1954, %v2188
    %v2205 = vsel %vm2125, %v1956, %v2189
    %v2206 = vsel %vm2126, %v1958, %v2190
    %v2207 = vsel %vm2127, %v1960, %v2191
    %v2208 = vsel %vm2128, %v1962, %v2192
    %v2209 = vsel %vm2129, %v1964, %v2193
    %v2210 = vsel %vm2130, %v1966, %v2194
    %v2211 = vsel %vm2131, %v1968, %v2195
    %v2212 = vsel %vm2132, %v1970, %v2196
    %v2213 = vsel %vm2133, %v1972, %v2197
    %v2214 = vsel %vm2134, %v1974, %v2198
    %vm2215 = vcmp.gt.f32.partialorder %v2088, 0.0
    %vm2216 = vcmp.gt.f32.partialorder %v2090, 0.0
    %vm2217 = vcmp.gt.f32.partialorder %v2092, 0.0
    %vm2218 = vcmp.gt.f32.partialorder %v2094, 0.0
    %vm2219 = vcmp.gt.f32.partialorder %v2096, 0.0
    %vm2220 = vcmp.gt.f32.partialorder %v2098, 0.0
    %vm2221 = vcmp.gt.f32.partialorder %v2100, 0.0
    %vm2222 = vcmp.gt.f32.partialorder %v2102, 0.0
    %vm2223 = vcmp.gt.f32.partialorder %v2104, 0.0
    %vm2224 = vcmp.gt.f32.partialorder %v2106, 0.0
    %vm2225 = vcmp.gt.f32.partialorder %v2108, 0.0
    %vm2226 = vcmp.gt.f32.partialorder %v2110, 0.0
    %vm2227 = vcmp.gt.f32.partialorder %v2112, 0.0
    %vm2228 = vcmp.gt.f32.partialorder %v2114, 0.0
    %vm2229 = vcmp.gt.f32.partialorder %v2116, 0.0
    %vm2230 = vcmp.gt.f32.partialorder %v2118, 0.0
    %v2231 = vmin.f32 %v2088, 0.0
    %v2232 = vmin.f32 %v2090, 0.0
    %v2233 = vmin.f32 %v2092, 0.0
    %v2234 = vmin.f32 %v2094, 0.0
    %v2235 = vmin.f32 %v2096, 0.0
    %v2236 = vmin.f32 %v2098, 0.0
    %v2237 = vmin.f32 %v2100, 0.0
    %v2238 = vmin.f32 %v2102, 0.0
    %v2239 = vmin.f32 %v2104, 0.0
    %v2240 = vmin.f32 %v2106, 0.0
    %v2241 = vmin.f32 %v2108, 0.0
    %v2242 = vmin.f32 %v2110, 0.0
    %v2243 = vmin.f32 %v2112, 0.0
    %v2244 = vmin.f32 %v2114, 0.0
    %v2245 = vmin.f32 %v2116, 0.0
    %v2246 = vmin.f32 %v2118, 0.0
    %v2247 = vmul.f32 %v2231, 1.442695
    %v2248 = vpow.pop %v2247
    %v2249 = vmul.f32 %v2232, 1.442695
    %v2250 = vpow.pop %v2249
    %v2251 = vmul.f32 %v2233, 1.442695
    %v2252 = vpow.pop %v2251
    %v2253 = vmul.f32 %v2234, 1.442695
    %v2254 = vpow.pop %v2253
    %v2255 = vmul.f32 %v2235, 1.442695
    %v2256 = vpow.pop %v2255
    %v2257 = vmul.f32 %v2236, 1.442695
    %v2258 = vpow.pop %v2257
    %v2259 = vmul.f32 %v2237, 1.442695
    %v2260 = vpow.pop %v2259
    %v2261 = vmul.f32 %v2238, 1.442695
    %v2262 = vpow.pop %v2261
    %v2263 = vmul.f32 %v2239, 1.442695
    %v2264 = vpow.pop %v2263
    %v2265 = vmul.f32 %v2240, 1.442695
    %v2266 = vpow.pop %v2265
    %v2267 = vmul.f32 %v2241, 1.442695
    %v2268 = vpow.pop %v2267
    %v2269 = vmul.f32 %v2242, 1.442695
    %v2270 = vpow.pop %v2269
    %v2271 = vmul.f32 %v2243, 1.442695
    %v2272 = vpow.pop %v2271
    %v2273 = vmul.f32 %v2244, 1.442695
    %v2274 = vpow.pop %v2273
    %v2275 = vmul.f32 %v2245, 1.442695
    %v2276 = vpow.pop %v2275
    %v2277 = vmul.f32 %v2246, 1.442695
    %v2278 = vpow.pop %v2277
    %v2279 = vsub.f32 %v2248, 1.0
    %v2280 = vsub.f32 %v2250, 1.0
    %v2281 = vsub.f32 %v2252, 1.0
    %v2282 = vsub.f32 %v2254, 1.0
    %v2283 = vsub.f32 %v2256, 1.0
    %v2284 = vsub.f32 %v2258, 1.0
    %v2285 = vsub.f32 %v2260, 1.0
    %v2286 = vsub.f32 %v2262, 1.0
    %v2287 = vsub.f32 %v2264, 1.0
    %v2288 = vsub.f32 %v2266, 1.0
    %v2289 = vsub.f32 %v2268, 1.0
    %v2290 = vsub.f32 %v2270, 1.0
    %v2291 = vsub.f32 %v2272, 1.0
    %v2292 = vsub.f32 %v2274, 1.0
    %v2293 = vsub.f32 %v2276, 1.0
    %v2294 = vsub.f32 %v2278, 1.0
    %v2295 = vsel %vm2215, %v2088, %v2279
    %v2296 = vsel %vm2216, %v2090, %v2280
    %v2297 = vsel %vm2217, %v2092, %v2281
    %v2298 = vsel %vm2218, %v2094, %v2282
    %v2299 = vsel %vm2219, %v2096, %v2283
    %v2300 = vsel %vm2220, %v2098, %v2284
    %v2301 = vsel %vm2221, %v2100, %v2285
    %v2302 = vsel %vm2222, %v2102, %v2286
    %v2303 = vsel %vm2223, %v2104, %v2287
    %v2304 = vsel %vm2224, %v2106, %v2288
    %v2305 = vsel %vm2225, %v2108, %v2289
    %v2306 = vsel %vm2226, %v2110, %v2290
    %v2307 = vsel %vm2227, %v2112, %v2291
    %v2308 = vsel %vm2228, %v2114, %v2292
    %v2309 = vsel %vm2229, %v2116, %v2293
    %v2310 = vsel %vm2230, %v2118, %v2294
    %v2311 = vpack.c.bf16 %v2200, %v2199
    %v2312 = vpack.c.bf16 %v2202, %v2201
    %v2313 = vpack.c.bf16 %v2204, %v2203
    %v2314 = vpack.c.bf16 %v2206, %v2205
    %v2315 = vpack.c.bf16 %v2208, %v2207
    %v2316 = vpack.c.bf16 %v2210, %v2209
    %v2317 = vpack.c.bf16 %v2212, %v2211
    %v2318 = vpack.c.bf16 %v2214, %v2213
    %v2319 = vpack.c.bf16 %v2296, %v2295
    %v2320 = vpack.c.bf16 %v2298, %v2297
    %v2321 = vpack.c.bf16 %v2300, %v2299
    %v2322 = vpack.c.bf16 %v2302, %v2301
    %v2323 = vpack.c.bf16 %v2304, %v2303
    %v2324 = vpack.c.bf16 %v2306, %v2305
    %v2325 = vpack.c.bf16 %v2308, %v2307
    %v2326 = vpack.c.bf16 %v2310, %v2309
    %v2327 = vld [vmem:[%s5] sm:$0xf]
    %v2328 = vld [vmem:[%s5 + $0x4] sm:$0xf]
    %v2329 = vld [vmem:[%s5 + $0x8] sm:$0xf]
    %v2330 = vld [vmem:[%s5 + $0xc] sm:$0xf]
    %v2331 = vld [vmem:[%s6] sm:$0x1]
    %v2333 = vlaneseq
    %v2334 = vshrl.u32 %v2333, 7
    %v2335 = vsub.s32 0, %v2334
    %v2336 = vrot.slane %v2331, %v2335
    %v2342 = vunpack.c.l.b16 %v2327
    %v2343 = vunpack.c.l.b16 %v2328
    %v2344 = vunpack.c.l.b16 %v2329
    %v2345 = vunpack.c.l.b16 %v2330
    %v2346 = vpack.c.b16 %v2343, %v2342
    %v2347 = vpack.c.b16 %v2345, %v2344
    %vm2350 = vcmask 261120
    %v2352 = vsel %vm2350, %v2311, 0
    %v2355 = vsel %vm2350, %v2312, 0
    %v2358 = vsel %vm2350, %v2313, 0
    %v2361 = vsel %vm2350, %v2314, 0
    %v2364 = vsel %vm2350, %v2315, 0
    %v2367 = vsel %vm2350, %v2316, 0
    %v2370 = vsel %vm2350, %v2317, 0
    %v2373 = vsel %vm2350, %v2318, 0
    %2375 = vmatprep.subr.bf16.mxu0 0
    %2376 = vmatpush1.bf16.msra.mxu0 %v2346
    %2377 = vmatprep.subr.bf16.mxu0 0
    %2378 = vmatpush1.bf16.msra.mxu0 %v2347
    %2379 = vmatprep.subr.bf16.mxu0 0
    %2380 = vmatpush1.bf16.msra.mxu0 0
    %2381 = vmatprep.subr.bf16.mxu0 0
    %2382 = vmatpush1.bf16.msra.mxu0 0
    %2383 = vmatprep.subr.bf16.mxu0 0
    %2384 = vmatpush1.bf16.msra.mxu0 0
    %2385 = vmatprep.subr.bf16.mxu0 0
    %2386 = vmatpush1.bf16.msra.mxu0 0
    %2387 = vmatprep.subr.bf16.mxu0 0
    %2388 = vmatpush1.bf16.msra.mxu0 0
    %2389 = vmatprep.subr.bf16.mxu0 0
    %2390 = vmatpush1.bf16.msra.mxu0 0
    %2391 = vmatprep.subr.bf16.mxu0 0
    %2392 = vmatpush1.bf16.msra.mxu0 0
    %2393 = vmatprep.subr.bf16.mxu0 0
    %2394 = vmatpush1.bf16.msra.mxu0 0
    %2395 = vmatprep.subr.bf16.mxu0 0
    %2396 = vmatpush1.bf16.msra.mxu0 0
    %2397 = vmatprep.subr.bf16.mxu0 0
    %2398 = vmatpush1.bf16.msra.mxu0 0
    %2399 = vmatprep.subr.bf16.mxu0 0
    %2400 = vmatpush1.bf16.msra.mxu0 0
    %2401 = vmatprep.subr.bf16.mxu0 0
    %2402 = vmatpush1.bf16.msra.mxu0 0
    %2403 = vmatprep.subr.bf16.mxu0 0
    %2404 = vmatpush1.bf16.msra.mxu0 0
    %2405 = vmatprep.subr.bf16.mxu0 0
    %2406 = vmatpush1.bf16.msra.mxu0 0
    %2407 = vmatprep.mubr.bf16.mxu0 0
    %2408 = vmatmul.mubr.bf16.gmra.mrb[0].mxu0 %v2352
    %v2409 = vpop.f32.mrb[0].mxu0
    %v2410 = vadd.f32 %v2336, %v2409
    %v2411 = vpop.f32.mrb[0].mxu0
    %v2412 = vpop.f32.mrb[0].mxu0
    %v2413 = vadd.f32 %v2336, %v2412
    %v2414 = vpop.f32.mrb[0].mxu0
    %2415 = vmatprep.mubr.bf16.mxu0 0
    %2416 = vmatmul.mubr.bf16.gmra.mrb[0].mxu0 %v2355
    %v2417 = vpop.f32.mrb[0].mxu0
    %v2418 = vadd.f32 %v2336, %v2417
    %v2419 = vpop.f32.mrb[0].mxu0
    %v2420 = vpop.f32.mrb[0].mxu0
    %v2421 = vadd.f32 %v2336, %v2420
    %v2422 = vpop.f32.mrb[0].mxu0
    %2423 = vmatprep.mubr.bf16.mxu0 0
    %2424 = vmatmul.mubr.bf16.gmra.mrb[0].mxu0 %v2358
    %v2425 = vpop.f32.mrb[0].mxu0
    %v2426 = vadd.f32 %v2336, %v2425
    %v2427 = vpop.f32.mrb[0].mxu0
    %v2428 = vpop.f32.mrb[0].mxu0
    %v2429 = vadd.f32 %v2336, %v2428
    %v2430 = vpop.f32.mrb[0].mxu0
    %2431 = vmatprep.mubr.bf16.mxu0 0
    %2432 = vmatmul.mubr.bf16.gmra.mrb[0].mxu0 %v2361
    %v2433 = vpop.f32.mrb[0].mxu0
    %v2434 = vadd.f32 %v2336, %v2433
    %v2435 = vpop.f32.mrb[0].mxu0
    %v2436 = vpop.f32.mrb[0].mxu0
    %v2437 = vadd.f32 %v2336, %v2436
    %v2438 = vpop.f32.mrb[0].mxu0
    %2439 = vmatprep.mubr.bf16.mxu0 0
    %2440 = vmatmul.mubr.bf16.gmra.mrb[0].mxu0 %v2364
    %v2441 = vpop.f32.mrb[0].mxu0
    %v2442 = vadd.f32 %v2336, %v2441
    %v2443 = vpop.f32.mrb[0].mxu0
    %v2444 = vpop.f32.mrb[0].mxu0
    %v2445 = vadd.f32 %v2336, %v2444
    %v2446 = vpop.f32.mrb[0].mxu0
    %2447 = vmatprep.mubr.bf16.mxu0 0
    %2448 = vmatmul.mubr.bf16.gmra.mrb[0].mxu0 %v2367
    %v2449 = vpop.f32.mrb[0].mxu0
    %v2450 = vadd.f32 %v2336, %v2449
    %v2451 = vpop.f32.mrb[0].mxu0
    %v2452 = vpop.f32.mrb[0].mxu0
    %v2453 = vadd.f32 %v2336, %v2452
    %v2454 = vpop.f32.mrb[0].mxu0
    %2455 = vmatprep.mubr.bf16.mxu0 0
    %2456 = vmatmul.mubr.bf16.gmra.mrb[0].mxu0 %v2370
    %v2457 = vpop.f32.mrb[0].mxu0
    %v2458 = vadd.f32 %v2336, %v2457
    %v2459 = vpop.f32.mrb[0].mxu0
    %v2460 = vpop.f32.mrb[0].mxu0
    %v2461 = vadd.f32 %v2336, %v2460
    %v2462 = vpop.f32.mrb[0].mxu0
    %2463 = vmatprep.mubr.bf16.mxu0 0
    %2464 = vmatmul.mubr.bf16.gmra.mrb[0].mxu0 %v2373
    %v2465 = vpop.f32.mrb[0].mxu0
    %v2466 = vadd.f32 %v2336, %v2465
    %v2467 = vpop.f32.mrb[0].mxu0
    %v2468 = vpop.f32.mrb[0].mxu0
    %v2469 = vadd.f32 %v2336, %v2468
    %v2470 = vpop.f32.mrb[0].mxu0
    %2471 = vdwg.mxu0
    %v2472 = vmax.f32 %v2410, 0.0
    %v2473 = vmax.f32 %v2413, 0.0
    %v2474 = vmax.f32 %v2418, 0.0
    %v2475 = vmax.f32 %v2421, 0.0
    %v2476 = vmax.f32 %v2426, 0.0
    %v2477 = vmax.f32 %v2429, 0.0
    %v2478 = vmax.f32 %v2434, 0.0
    %v2479 = vmax.f32 %v2437, 0.0
    %v2480 = vmax.f32 %v2442, 0.0
    %v2481 = vmax.f32 %v2445, 0.0
    %v2482 = vmax.f32 %v2450, 0.0
    %v2483 = vmax.f32 %v2453, 0.0
    %v2484 = vmax.f32 %v2458, 0.0
    %v2485 = vmax.f32 %v2461, 0.0
    %v2486 = vmax.f32 %v2466, 0.0
    %v2487 = vmax.f32 %v2469, 0.0
    %v2488 = vld [vmem:[%s4] sm:$0xff]
    %v2489 = vld [vmem:[%s4 + $0x8] sm:$0xff]
    %v2490 = vld [vmem:[%s4 + $0x10] sm:$0xff]
    %v2491 = vld [vmem:[%s4 + $0x18] sm:$0xff]
    %v2492 = vld [vmem:[%s4 + $0x20] sm:$0xff]
    %v2493 = vld [vmem:[%s4 + $0x28] sm:$0xff]
    %v2494 = vld [vmem:[%s4 + $0x30] sm:$0xff]
    %v2495 = vld [vmem:[%s4 + $0x38] sm:$0xff]
    %v2496 = vld [vmem:[%s4 + $0x40] sm:$0xff]
    %v2497 = vld [vmem:[%s4 + $0x48] sm:$0xff]
    %v2498 = vld [vmem:[%s4 + $0x50] sm:$0xff]
    %v2499 = vld [vmem:[%s4 + $0x58] sm:$0xff]
    %v2500 = vld [vmem:[%s4 + $0x60] sm:$0xff]
    %v2501 = vld [vmem:[%s4 + $0x68] sm:$0xff]
    %v2502 = vld [vmem:[%s4 + $0x70] sm:$0xff]
    %v2503 = vld [vmem:[%s4 + $0x78] sm:$0xff]
    %v2504 = vmul.f32 %v2472, 0.5
    %v2505 = vmul.f32 %v2473, 0.5
    %v2506 = vmul.f32 %v2474, 0.5
    %v2507 = vmul.f32 %v2475, 0.5
    %v2508 = vmul.f32 %v2476, 0.5
    %v2509 = vmul.f32 %v2477, 0.5
    %v2510 = vmul.f32 %v2478, 0.5
    %v2511 = vmul.f32 %v2479, 0.5
    %v2512 = vmul.f32 %v2480, 0.5
    %v2513 = vmul.f32 %v2481, 0.5
    %v2514 = vmul.f32 %v2482, 0.5
    %v2515 = vmul.f32 %v2483, 0.5
    %v2516 = vmul.f32 %v2484, 0.5
    %v2517 = vmul.f32 %v2485, 0.5
    %v2518 = vmul.f32 %v2486, 0.5
    %v2519 = vmul.f32 %v2487, 0.5
    %v2520 = vmul.f32 %v2504, 1.442695
    %v2521 = vpow.pop %v2520
    %v2522 = vmul.f32 %v2505, 1.442695
    %v2523 = vpow.pop %v2522
    %v2524 = vmul.f32 %v2506, 1.442695
    %v2525 = vpow.pop %v2524
    %v2526 = vmul.f32 %v2507, 1.442695
    %v2527 = vpow.pop %v2526
    %v2528 = vmul.f32 %v2508, 1.442695
    %v2529 = vpow.pop %v2528
    %v2530 = vmul.f32 %v2509, 1.442695
    %v2531 = vpow.pop %v2530
    %v2532 = vmul.f32 %v2510, 1.442695
    %v2533 = vpow.pop %v2532
    %v2534 = vmul.f32 %v2511, 1.442695
    %v2535 = vpow.pop %v2534
    %v2536 = vmul.f32 %v2512, 1.442695
    %v2537 = vpow.pop %v2536
    %v2538 = vmul.f32 %v2513, 1.442695
    %v2539 = vpow.pop %v2538
    %v2540 = vmul.f32 %v2514, 1.442695
    %v2541 = vpow.pop %v2540
    %v2542 = vmul.f32 %v2515, 1.442695
    %v2543 = vpow.pop %v2542
    %v2544 = vmul.f32 %v2516, 1.442695
    %v2545 = vpow.pop %v2544
    %v2546 = vmul.f32 %v2517, 1.442695
    %v2547 = vpow.pop %v2546
    %v2548 = vmul.f32 %v2518, 1.442695
    %v2549 = vpow.pop %v2548
    %v2550 = vmul.f32 %v2519, 1.442695
    %v2551 = vpow.pop %v2550
    %2568 = vrot.lane.b32.xlu0 %v2521, 120
    %v2569 = vpop.permute.xlu0 %2568
    %2570 = vrot.lane.b32.xlu0 %v2523, 120
    %v2571 = vpop.permute.xlu0 %2570
    %2572 = vrot.lane.b32.xlu0 %v2525, 120
    %v2573 = vpop.permute.xlu0 %2572
    %2574 = vrot.lane.b32.xlu0 %v2527, 120
    %v2575 = vpop.permute.xlu0 %2574
    %2576 = vrot.lane.b32.xlu0 %v2529, 120
    %v2577 = vpop.permute.xlu0 %2576
    %2578 = vrot.lane.b32.xlu0 %v2531, 120
    %v2579 = vpop.permute.xlu0 %2578
    %2580 = vrot.lane.b32.xlu0 %v2533, 120
    %v2581 = vpop.permute.xlu0 %2580
    %2582 = vrot.lane.b32.xlu0 %v2535, 120
    %v2583 = vpop.permute.xlu0 %2582
    %2584 = vrot.lane.b32.xlu0 %v2537, 120
    %v2585 = vpop.permute.xlu0 %2584
    %2586 = vrot.lane.b32.xlu0 %v2539, 120
    %v2587 = vpop.permute.xlu0 %2586
    %2588 = vrot.lane.b32.xlu0 %v2541, 120
    %v2589 = vpop.permute.xlu0 %2588
    %2590 = vrot.lane.b32.xlu0 %v2543, 120
    %v2591 = vpop.permute.xlu0 %2590
    %2592 = vrot.lane.b32.xlu0 %v2545, 120
    %v2593 = vpop.permute.xlu0 %2592
    %2594 = vrot.lane.b32.xlu0 %v2547, 120
    %v2595 = vpop.permute.xlu0 %2594
    %2596 = vrot.lane.b32.xlu0 %v2549, 120
    %v2597 = vpop.permute.xlu0 %2596
    %2598 = vrot.lane.b32.xlu0 %v2551, 120
    %v2599 = vpop.permute.xlu0 %2598
    %v2616 = vmul.f32 %v2488, %v2569
    %v2617 = vmul.f32 %v2489, %v2571
    %v2618 = vmul.f32 %v2490, %v2573
    %v2619 = vmul.f32 %v2491, %v2575
    %v2620 = vmul.f32 %v2492, %v2577
    %v2621 = vmul.f32 %v2493, %v2579
    %v2622 = vmul.f32 %v2494, %v2581
    %v2623 = vmul.f32 %v2495, %v2583
    %v2624 = vmul.f32 %v2496, %v2585
    %v2625 = vmul.f32 %v2497, %v2587
    %v2626 = vmul.f32 %v2498, %v2589
    %v2627 = vmul.f32 %v2499, %v2591
    %v2628 = vmul.f32 %v2500, %v2593
    %v2629 = vmul.f32 %v2501, %v2595
    %v2630 = vmul.f32 %v2502, %v2597
    %v2631 = vmul.f32 %v2503, %v2599
    %v2632 = vadd.f32 %v2472, %v2616
    %v2633 = vadd.f32 %v2473, %v2617
    %v2634 = vadd.f32 %v2474, %v2618
    %v2635 = vadd.f32 %v2475, %v2619
    %v2636 = vadd.f32 %v2476, %v2620
    %v2637 = vadd.f32 %v2477, %v2621
    %v2638 = vadd.f32 %v2478, %v2622
    %v2639 = vadd.f32 %v2479, %v2623
    %v2640 = vadd.f32 %v2480, %v2624
    %v2641 = vadd.f32 %v2481, %v2625
    %v2642 = vadd.f32 %v2482, %v2626
    %v2643 = vadd.f32 %v2483, %v2627
    %v2644 = vadd.f32 %v2484, %v2628
    %v2645 = vadd.f32 %v2485, %v2629
    %v2646 = vadd.f32 %v2486, %v2630
    %v2647 = vadd.f32 %v2487, %v2631
    %v2648 = vpack.c.bf16 %v2633, %v2632
    %v2649 = vpack.c.bf16 %v2635, %v2634
    %v2650 = vpack.c.bf16 %v2637, %v2636
    %v2651 = vpack.c.bf16 %v2639, %v2638
    %v2652 = vpack.c.bf16 %v2641, %v2640
    %v2653 = vpack.c.bf16 %v2643, %v2642
    %v2654 = vpack.c.bf16 %v2645, %v2644
    %v2655 = vpack.c.bf16 %v2647, %v2646
    %v2656 = vld [vmem:[%s7] sm:$0xf]
    %v2657 = vld [vmem:[%s8] sm:$0xf]
    %v2658 = vld [vmem:[%s8 + $0x4] sm:$0xf]
    %v2659 = vld [vmem:[%s8 + $0x8] sm:$0xf]
    %v2660 = vld [vmem:[%s8 + $0xc] sm:$0xf]
    %2669 = vrot.lane.b32.xlu0 %v2319, 96
    %v2670 = vpop.permute.xlu0 %2669
    %2671 = vrot.lane.b32.xlu0 %v2320, 96
    %v2672 = vpop.permute.xlu0 %2671
    %2673 = vrot.lane.b32.xlu0 %v2321, 96
    %v2674 = vpop.permute.xlu0 %2673
    %2675 = vrot.lane.b32.xlu0 %v2322, 96
    %v2676 = vpop.permute.xlu0 %2675
    %2677 = vrot.lane.b32.xlu0 %v2323, 96
    %v2678 = vpop.permute.xlu0 %2677
    %2679 = vrot.lane.b32.xlu0 %v2324, 96
    %v2680 = vpop.permute.xlu0 %2679
    %2681 = vrot.lane.b32.xlu0 %v2325, 96
    %v2682 = vpop.permute.xlu0 %2681
    %2683 = vrot.lane.b32.xlu0 %v2326, 96
    %v2684 = vpop.permute.xlu0 %2683
    %v2689 = vunpack.c.l.b16 %v2657
    %v2690 = vunpack.c.l.b16 %v2658
    %v2691 = vunpack.c.l.b16 %v2659
    %v2692 = vunpack.c.l.b16 %v2660
    %v2693 = vpack.c.b16 %v2690, %v2689
    %v2694 = vpack.c.b16 %v2692, %v2691
    %v2698 = vsel %vm2350, %v2670, 0
    %v2701 = vsel %vm2350, %v2672, 0
    %v2704 = vsel %vm2350, %v2674, 0
    %v2707 = vsel %vm2350, %v2676, 0
    %v2710 = vsel %vm2350, %v2678, 0
    %v2713 = vsel %vm2350, %v2680, 0
    %v2716 = vsel %vm2350, %v2682, 0
    %v2719 = vsel %vm2350, %v2684, 0
    %2721 = vmatprep.subr.bf16.mxu0 0
    %2722 = vmatpush1.bf16.msra.mxu0 %v2693
    %2723 = vmatprep.subr.bf16.mxu0 0
    %2724 = vmatpush1.bf16.msra.mxu0 %v2694
    %2725 = vmatprep.subr.bf16.mxu0 0
    %2726 = vmatpush1.bf16.msra.mxu0 0
    %2727 = vmatprep.subr.bf16.mxu0 0
    %2728 = vmatpush1.bf16.msra.mxu0 0
    %2729 = vmatprep.subr.bf16.mxu0 0
    %2730 = vmatpush1.bf16.msra.mxu0 0
    %2731 = vmatprep.subr.bf16.mxu0 0
    %2732 = vmatpush1.bf16.msra.mxu0 0
    %2733 = vmatprep.subr.bf16.mxu0 0
    %2734 = vmatpush1.bf16.msra.mxu0 0
    %2735 = vmatprep.subr.bf16.mxu0 0
    %2736 = vmatpush1.bf16.msra.mxu0 0
    %2737 = vmatprep.subr.bf16.mxu0 0
    %2738 = vmatpush1.bf16.msra.mxu0 0
    %2739 = vmatprep.subr.bf16.mxu0 0
    %2740 = vmatpush1.bf16.msra.mxu0 0
    %2741 = vmatprep.subr.bf16.mxu0 0
    %2742 = vmatpush1.bf16.msra.mxu0 0
    %2743 = vmatprep.subr.bf16.mxu0 0
    %2744 = vmatpush1.bf16.msra.mxu0 0
    %2745 = vmatprep.subr.bf16.mxu0 0
    %2746 = vmatpush1.bf16.msra.mxu0 0
    %2747 = vmatprep.subr.bf16.mxu0 0
    %2748 = vmatpush1.bf16.msra.mxu0 0
    %2749 = vmatprep.subr.bf16.mxu0 0
    %2750 = vmatpush1.bf16.msra.mxu0 0
    %2751 = vmatprep.subr.bf16.mxu0 0
    %2752 = vmatpush1.bf16.msra.mxu0 0
    %2753 = vmatprep.mubr.bf16.mxu0 0
    %2754 = vmatmul.mubr.bf16.gmra.mrb[0].mxu0 %v2698
    %v2755 = vpop.f32.mrb[0].mxu0
    %v2756 = vadd.f32 0.0, %v2755
    %v2757 = vpop.f32.mrb[0].mxu0
    %v2758 = vpop.f32.mrb[0].mxu0
    %v2759 = vadd.f32 0.0, %v2758
    %v2760 = vpop.f32.mrb[0].mxu0
    %2761 = vmatprep.mubr.bf16.mxu0 0
    %2762 = vmatmul.mubr.bf16.gmra.mrb[0].mxu0 %v2701
    %v2763 = vpop.f32.mrb[0].mxu0
    %v2764 = vadd.f32 0.0, %v2763
    %v2765 = vpop.f32.mrb[0].mxu0
    %v2766 = vpop.f32.mrb[0].mxu0
    %v2767 = vadd.f32 0.0, %v2766
    %v2768 = vpop.f32.mrb[0].mxu0
    %2769 = vmatprep.mubr.bf16.mxu0 0
    %2770 = vmatmul.mubr.bf16.gmra.mrb[0].mxu0 %v2704
    %v2771 = vpop.f32.mrb[0].mxu0
    %v2772 = vadd.f32 0.0, %v2771
    %v2773 = vpop.f32.mrb[0].mxu0
    %v2774 = vpop.f32.mrb[0].mxu0
    %v2775 = vadd.f32 0.0, %v2774
    %v2776 = vpop.f32.mrb[0].mxu0
    %2777 = vmatprep.mubr.bf16.mxu0 0
    %2778 = vmatmul.mubr.bf16.gmra.mrb[0].mxu0 %v2707
    %v2779 = vpop.f32.mrb[0].mxu0
    %v2780 = vadd.f32 0.0, %v2779
    %v2781 = vpop.f32.mrb[0].mxu0
    %v2782 = vpop.f32.mrb[0].mxu0
    %v2783 = vadd.f32 0.0, %v2782
    %v2784 = vpop.f32.mrb[0].mxu0
    %2785 = vmatprep.mubr.bf16.mxu0 0
    %2786 = vmatmul.mubr.bf16.gmra.mrb[0].mxu0 %v2710
    %v2787 = vpop.f32.mrb[0].mxu0
    %v2788 = vadd.f32 0.0, %v2787
    %v2789 = vpop.f32.mrb[0].mxu0
    %v2790 = vpop.f32.mrb[0].mxu0
    %v2791 = vadd.f32 0.0, %v2790
    %v2792 = vpop.f32.mrb[0].mxu0
    %2793 = vmatprep.mubr.bf16.mxu0 0
    %2794 = vmatmul.mubr.bf16.gmra.mrb[0].mxu0 %v2713
    %v2795 = vpop.f32.mrb[0].mxu0
    %v2796 = vadd.f32 0.0, %v2795
    %v2797 = vpop.f32.mrb[0].mxu0
    %v2798 = vpop.f32.mrb[0].mxu0
    %v2799 = vadd.f32 0.0, %v2798
    %v2800 = vpop.f32.mrb[0].mxu0
    %2801 = vmatprep.mubr.bf16.mxu0 0
    %2802 = vmatmul.mubr.bf16.gmra.mrb[0].mxu0 %v2716
    %v2803 = vpop.f32.mrb[0].mxu0
    %v2804 = vadd.f32 0.0, %v2803
    %v2805 = vpop.f32.mrb[0].mxu0
    %v2806 = vpop.f32.mrb[0].mxu0
    %v2807 = vadd.f32 0.0, %v2806
    %v2808 = vpop.f32.mrb[0].mxu0
    %2809 = vmatprep.mubr.bf16.mxu0 0
    %2810 = vmatmul.mubr.bf16.gmra.mrb[0].mxu0 %v2719
    %v2811 = vpop.f32.mrb[0].mxu0
    %v2812 = vadd.f32 0.0, %v2811
    %v2813 = vpop.f32.mrb[0].mxu0
    %v2814 = vpop.f32.mrb[0].mxu0
    %v2815 = vadd.f32 0.0, %v2814
    %v2816 = vpop.f32.mrb[0].mxu0
    %2817 = vdwg.mxu0
    %vm2818 = vcmask 64512
    %v2820 = vsel %vm2818, %v2648, 0
    %v2823 = vsel %vm2818, %v2649, 0
    %v2826 = vsel %vm2818, %v2650, 0
    %v2829 = vsel %vm2818, %v2651, 0
    %v2832 = vsel %vm2818, %v2652, 0
    %v2835 = vsel %vm2818, %v2653, 0
    %v2838 = vsel %vm2818, %v2654, 0
    %v2841 = vsel %vm2818, %v2655, 0
    %vm2843 = vcmask 1043456
    %v2845 = vsel %vm2843, %v2656, 0
    %2847 = vmatprep.subr.bf16.mxu0 0
    %2848 = vmatpush1.bf16.msra.mxu0 %v2845
    %2849 = vmatprep.subr.bf16.mxu0 0
    %2850 = vmatpush1.bf16.msra.mxu0 0
    %2851 = vmatprep.subr.bf16.mxu0 0
    %2852 = vmatpush1.bf16.msra.mxu0 0
    %2853 = vmatprep.subr.bf16.mxu0 0
    %2854 = vmatpush1.bf16.msra.mxu0 0
    %2855 = vmatprep.subr.bf16.mxu0 0
    %2856 = vmatpush1.bf16.msra.mxu0 0
    %2857 = vmatprep.subr.bf16.mxu0 0
    %2858 = vmatpush1.bf16.msra.mxu0 0
    %2859 = vmatprep.subr.bf16.mxu0 0
    %2860 = vmatpush1.bf16.msra.mxu0 0
    %2861 = vmatprep.subr.bf16.mxu0 0
    %2862 = vmatpush1.bf16.msra.mxu0 0
    %2863 = vmatprep.subr.bf16.mxu0 0
    %2864 = vmatpush1.bf16.msra.mxu0 0
    %2865 = vmatprep.subr.bf16.mxu0 0
    %2866 = vmatpush1.bf16.msra.mxu0 0
    %2867 = vmatprep.subr.bf16.mxu0 0
    %2868 = vmatpush1.bf16.msra.mxu0 0
    %2869 = vmatprep.subr.bf16.mxu0 0
    %2870 = vmatpush1.bf16.msra.mxu0 0
    %2871 = vmatprep.subr.bf16.mxu0 0
    %2872 = vmatpush1.bf16.msra.mxu0 0
    %2873 = vmatprep.subr.bf16.mxu0 0
    %2874 = vmatpush1.bf16.msra.mxu0 0
    %2875 = vmatprep.subr.bf16.mxu0 0
    %2876 = vmatpush1.bf16.msra.mxu0 0
    %2877 = vmatprep.subr.bf16.mxu0 0
    %2878 = vmatpush1.bf16.msra.mxu0 0
    %2879 = vmatprep.mubr.bf16.mxu0 0
    %2880 = vmatmul.mubr.bf16.gmra.mrb[0].mxu0 %v2820
    %v2881 = vpop.f32.mrb[0].mxu0
    %v2882 = vadd.f32 %v2756, %v2881
    %v2883 = vpop.f32.mrb[0].mxu0
    %v2884 = vpop.f32.mrb[0].mxu0
    %v2885 = vadd.f32 %v2759, %v2884
    %v2886 = vpop.f32.mrb[0].mxu0
    %2887 = vmatprep.mubr.bf16.mxu0 0
    %2888 = vmatmul.mubr.bf16.gmra.mrb[0].mxu0 %v2823
    %v2889 = vpop.f32.mrb[0].mxu0
    %v2890 = vadd.f32 %v2764, %v2889
    %v2891 = vpop.f32.mrb[0].mxu0
    %v2892 = vpop.f32.mrb[0].mxu0
    %v2893 = vadd.f32 %v2767, %v2892
    %v2894 = vpop.f32.mrb[0].mxu0
    %2895 = vmatprep.mubr.bf16.mxu0 0
    %2896 = vmatmul.mubr.bf16.gmra.mrb[0].mxu0 %v2826
    %v2897 = vpop.f32.mrb[0].mxu0
    %v2898 = vadd.f32 %v2772, %v2897
    %v2899 = vpop.f32.mrb[0].mxu0
    %v2900 = vpop.f32.mrb[0].mxu0
    %v2901 = vadd.f32 %v2775, %v2900
    %v2902 = vpop.f32.mrb[0].mxu0
    %2903 = vmatprep.mubr.bf16.mxu0 0
    %2904 = vmatmul.mubr.bf16.gmra.mrb[0].mxu0 %v2829
    %v2905 = vpop.f32.mrb[0].mxu0
    %v2906 = vadd.f32 %v2780, %v2905
    %v2907 = vpop.f32.mrb[0].mxu0
    %v2908 = vpop.f32.mrb[0].mxu0
    %v2909 = vadd.f32 %v2783, %v2908
    %v2910 = vpop.f32.mrb[0].mxu0
    %2911 = vmatprep.mubr.bf16.mxu0 0
    %2912 = vmatmul.mubr.bf16.gmra.mrb[0].mxu0 %v2832
    %v2913 = vpop.f32.mrb[0].mxu0
    %v2914 = vadd.f32 %v2788, %v2913
    %v2915 = vpop.f32.mrb[0].mxu0
    %v2916 = vpop.f32.mrb[0].mxu0
    %v2917 = vadd.f32 %v2791, %v2916
    %v2918 = vpop.f32.mrb[0].mxu0
    %2919 = vmatprep.mubr.bf16.mxu0 0
    %2920 = vmatmul.mubr.bf16.gmra.mrb[0].mxu0 %v2835
    %v2921 = vpop.f32.mrb[0].mxu0
    %v2922 = vadd.f32 %v2796, %v2921
    %v2923 = vpop.f32.mrb[0].mxu0
    %v2924 = vpop.f32.mrb[0].mxu0
    %v2925 = vadd.f32 %v2799, %v2924
    %v2926 = vpop.f32.mrb[0].mxu0
    %2927 = vmatprep.mubr.bf16.mxu0 0
    %2928 = vmatmul.mubr.bf16.gmra.mrb[0].mxu0 %v2838
    %v2929 = vpop.f32.mrb[0].mxu0
    %v2930 = vadd.f32 %v2804, %v2929
    %v2931 = vpop.f32.mrb[0].mxu0
    %v2932 = vpop.f32.mrb[0].mxu0
    %v2933 = vadd.f32 %v2807, %v2932
    %v2934 = vpop.f32.mrb[0].mxu0
    %2935 = vmatprep.mubr.bf16.mxu0 0
    %2936 = vmatmul.mubr.bf16.gmra.mrb[0].mxu0 %v2841
    %v2937 = vpop.f32.mrb[0].mxu0
    %v2938 = vadd.f32 %v2812, %v2937
    %v2939 = vpop.f32.mrb[0].mxu0
    %v2940 = vpop.f32.mrb[0].mxu0
    %v2941 = vadd.f32 %v2815, %v2940
    %v2942 = vpop.f32.mrb[0].mxu0
    %2943 = vdwg.mxu0
    %v2944 = vld [vmem:[%s9] sm:$0x1]
    %v2946 = vlaneseq
    %v2947 = vshrl.u32 %v2946, 7
    %v2948 = vsub.s32 0, %v2947
    %v2949 = vrot.slane %v2944, %v2948
    %v2951 = vadd.f32 %v2882, %v2949
    %v2952 = vadd.f32 %v2885, %v2949
    %v2953 = vadd.f32 %v2890, %v2949
    %v2954 = vadd.f32 %v2893, %v2949
    %v2955 = vadd.f32 %v2898, %v2949
    %v2956 = vadd.f32 %v2901, %v2949
    %v2957 = vadd.f32 %v2906, %v2949
    %v2958 = vadd.f32 %v2909, %v2949
    %v2959 = vadd.f32 %v2914, %v2949
    %v2960 = vadd.f32 %v2917, %v2949
    %v2961 = vadd.f32 %v2922, %v2949
    %v2962 = vadd.f32 %v2925, %v2949
    %v2963 = vadd.f32 %v2930, %v2949
    %v2964 = vadd.f32 %v2933, %v2949
    %v2965 = vadd.f32 %v2938, %v2949
    %v2966 = vadd.f32 %v2941, %v2949
    %v2967 = vmax.f32 %v2951, 0.0
    %v2968 = vmax.f32 %v2952, 0.0
    %v2969 = vmax.f32 %v2953, 0.0
    %v2970 = vmax.f32 %v2954, 0.0
    %v2971 = vmax.f32 %v2955, 0.0
    %v2972 = vmax.f32 %v2956, 0.0
    %v2973 = vmax.f32 %v2957, 0.0
    %v2974 = vmax.f32 %v2958, 0.0
    %v2975 = vmax.f32 %v2959, 0.0
    %v2976 = vmax.f32 %v2960, 0.0
    %v2977 = vmax.f32 %v2961, 0.0
    %v2978 = vmax.f32 %v2962, 0.0
    %v2979 = vmax.f32 %v2963, 0.0
    %v2980 = vmax.f32 %v2964, 0.0
    %v2981 = vmax.f32 %v2965, 0.0
    %v2982 = vmax.f32 %v2966, 0.0
    %2999 = vrot.lane.b32.xlu0 %v2632, 16
    %v3000 = vpop.permute.xlu0 %2999
    %3001 = vrot.lane.b32.xlu0 %v2633, 16
    %v3002 = vpop.permute.xlu0 %3001
    %3003 = vrot.lane.b32.xlu0 %v2634, 16
    %v3004 = vpop.permute.xlu0 %3003
    %3005 = vrot.lane.b32.xlu0 %v2635, 16
    %v3006 = vpop.permute.xlu0 %3005
    %3007 = vrot.lane.b32.xlu0 %v2636, 16
    %v3008 = vpop.permute.xlu0 %3007
    %3009 = vrot.lane.b32.xlu0 %v2637, 16
    %v3010 = vpop.permute.xlu0 %3009
    %3011 = vrot.lane.b32.xlu0 %v2638, 16
    %v3012 = vpop.permute.xlu0 %3011
    %3013 = vrot.lane.b32.xlu0 %v2639, 16
    %v3014 = vpop.permute.xlu0 %3013
    %3015 = vrot.lane.b32.xlu0 %v2640, 16
    %v3016 = vpop.permute.xlu0 %3015
    %3017 = vrot.lane.b32.xlu0 %v2641, 16
    %v3018 = vpop.permute.xlu0 %3017
    %3019 = vrot.lane.b32.xlu0 %v2642, 16
    %v3020 = vpop.permute.xlu0 %3019
    %3021 = vrot.lane.b32.xlu0 %v2643, 16
    %v3022 = vpop.permute.xlu0 %3021
    %3023 = vrot.lane.b32.xlu0 %v2644, 16
    %v3024 = vpop.permute.xlu0 %3023
    %3025 = vrot.lane.b32.xlu0 %v2645, 16
    %v3026 = vpop.permute.xlu0 %3025
    %3027 = vrot.lane.b32.xlu0 %v2646, 16
    %v3028 = vpop.permute.xlu0 %3027
    %3029 = vrot.lane.b32.xlu0 %v2647, 16
    %v3030 = vpop.permute.xlu0 %3029
    %3063 = vrot.lane.b32.xlu0 %v2967, 24
    %v3064 = vpop.permute.xlu0 %3063
    %3065 = vrot.lane.b32.xlu0 %v2968, 24
    %v3066 = vpop.permute.xlu0 %3065
    %3067 = vrot.lane.b32.xlu0 %v2969, 24
    %v3068 = vpop.permute.xlu0 %3067
    %3069 = vrot.lane.b32.xlu0 %v2970, 24
    %v3070 = vpop.permute.xlu0 %3069
    %3071 = vrot.lane.b32.xlu0 %v2971, 24
    %v3072 = vpop.permute.xlu0 %3071
    %3073 = vrot.lane.b32.xlu0 %v2972, 24
    %v3074 = vpop.permute.xlu0 %3073
    %3075 = vrot.lane.b32.xlu0 %v2973, 24
    %v3076 = vpop.permute.xlu0 %3075
    %3077 = vrot.lane.b32.xlu0 %v2974, 24
    %v3078 = vpop.permute.xlu0 %3077
    %3079 = vrot.lane.b32.xlu0 %v2975, 24
    %v3080 = vpop.permute.xlu0 %3079
    %3081 = vrot.lane.b32.xlu0 %v2976, 24
    %v3082 = vpop.permute.xlu0 %3081
    %3083 = vrot.lane.b32.xlu0 %v2977, 24
    %v3084 = vpop.permute.xlu0 %3083
    %3085 = vrot.lane.b32.xlu0 %v2978, 24
    %v3086 = vpop.permute.xlu0 %3085
    %3087 = vrot.lane.b32.xlu0 %v2979, 24
    %v3088 = vpop.permute.xlu0 %3087
    %3089 = vrot.lane.b32.xlu0 %v2980, 24
    %v3090 = vpop.permute.xlu0 %3089
    %3091 = vrot.lane.b32.xlu0 %v2981, 24
    %v3092 = vpop.permute.xlu0 %3091
    %3093 = vrot.lane.b32.xlu0 %v2982, 24
    %v3094 = vpop.permute.xlu0 %3093
    %vm3111 = vcmask 130048
    %v3112 = vsel %vm3111, %v2472, %v3000
    %v3113 = vsel %vm3111, %v2473, %v3002
    %v3114 = vsel %vm3111, %v2474, %v3004
    %v3115 = vsel %vm3111, %v2475, %v3006
    %v3116 = vsel %vm3111, %v2476, %v3008
    %v3117 = vsel %vm3111, %v2477, %v3010
    %v3118 = vsel %vm3111, %v2478, %v3012
    %v3119 = vsel %vm3111, %v2479, %v3014
    %v3120 = vsel %vm3111, %v2480, %v3016
    %v3121 = vsel %vm3111, %v2481, %v3018
    %v3122 = vsel %vm3111, %v2482, %v3020
    %v3123 = vsel %vm3111, %v2483, %v3022
    %v3124 = vsel %vm3111, %v2484, %v3024
    %v3125 = vsel %vm3111, %v2485, %v3026
    %v3126 = vsel %vm3111, %v2486, %v3028
    %v3127 = vsel %vm3111, %v2487, %v3030
    %vm3128 = vcmask 195584
    %v3129 = vsel %vm3128, %v3112, %v3064
    %v3130 = vsel %vm3128, %v3113, %v3066
    %v3131 = vsel %vm3128, %v3114, %v3068
    %v3132 = vsel %vm3128, %v3115, %v3070
    %v3133 = vsel %vm3128, %v3116, %v3072
    %v3134 = vsel %vm3128, %v3117, %v3074
    %v3135 = vsel %vm3128, %v3118, %v3076
    %v3136 = vsel %vm3128, %v3119, %v3078
    %v3137 = vsel %vm3128, %v3120, %v3080
    %v3138 = vsel %vm3128, %v3121, %v3082
    %v3139 = vsel %vm3128, %v3122, %v3084
    %v3140 = vsel %vm3128, %v3123, %v3086
    %v3141 = vsel %vm3128, %v3124, %v3088
    %v3142 = vsel %vm3128, %v3125, %v3090
    %v3143 = vsel %vm3128, %v3126, %v3092
    %v3144 = vsel %vm3128, %v3127, %v3094
    %vm3145 = vcmask 228352
    %v3146 = vsel %vm3145, %v3129, 0.0
    %v3147 = vsel %vm3145, %v3130, 0.0
    %v3148 = vsel %vm3145, %v3131, 0.0
    %v3149 = vsel %vm3145, %v3132, 0.0
    %v3150 = vsel %vm3145, %v3133, 0.0
    %v3151 = vsel %vm3145, %v3134, 0.0
    %v3152 = vsel %vm3145, %v3135, 0.0
    %v3153 = vsel %vm3145, %v3136, 0.0
    %v3154 = vsel %vm3145, %v3137, 0.0
    %v3155 = vsel %vm3145, %v3138, 0.0
    %v3156 = vsel %vm3145, %v3139, 0.0
    %v3157 = vsel %vm3145, %v3140, 0.0
    %v3158 = vsel %vm3145, %v3141, 0.0
    %v3159 = vsel %vm3145, %v3142, 0.0
    %v3160 = vsel %vm3145, %v3143, 0.0
    %v3161 = vsel %vm3145, %v3144, 0.0
    %3162 = vst [vmem:[%s10] sm:$0xff] %v3146
    %3163 = vst [vmem:[%s10 + $0x8] sm:$0xff] %v3147
    %3164 = vst [vmem:[%s10 + $0x10] sm:$0xff] %v3148
    %3165 = vst [vmem:[%s10 + $0x18] sm:$0xff] %v3149
    %3166 = vst [vmem:[%s10 + $0x20] sm:$0xff] %v3150
    %3167 = vst [vmem:[%s10 + $0x28] sm:$0xff] %v3151
    %3168 = vst [vmem:[%s10 + $0x30] sm:$0xff] %v3152
    %3169 = vst [vmem:[%s10 + $0x38] sm:$0xff] %v3153
    %3170 = vst [vmem:[%s10 + $0x40] sm:$0xff] %v3154
    %3171 = vst [vmem:[%s10 + $0x48] sm:$0xff] %v3155
    %3172 = vst [vmem:[%s10 + $0x50] sm:$0xff] %v3156
    %3173 = vst [vmem:[%s10 + $0x58] sm:$0xff] %v3157
    %3174 = vst [vmem:[%s10 + $0x60] sm:$0xff] %v3158
    %3175 = vst [vmem:[%s10 + $0x68] sm:$0xff] %v3159
    %3176 = vst [vmem:[%s10 + $0x70] sm:$0xff] %v3160
    %3177 = vst [vmem:[%s10 + $0x78] sm:$0xff] %v3161
  $region49: #{_gat_encoder_core.3} parent=0 // pred_fallthru
    _
  // Predicated region
  $region50: #{_gat_encoder_core.3} parent=0 // pred_check
    _
  $region51: #{_gat_encoder_core.3} parent=0 // pred_check_branch
    %3179 = sbr.rel (0) target = $region53
  $region52: #{_gat_encoder_core.3} parent=0 // pred_region
    _
  $region53: #{_gat_encoder_core.3} parent=0 // pred_fallthru
    _
  // Predicated region
  $region54: #{_gat_encoder_core.3} parent=0 // pred_check
    _
  $region55: #{_gat_encoder_core.3} parent=0 // pred_check_branch
    %3181 = sbr.rel (0) target = $region57
  $region56: #{_gat_encoder_core.3} parent=0 // pred_region
    _
  $region57: #{_gat_encoder_core.3} parent=0 // pred_fallthru
    _

</llo_original>
